<compile_context>
chip_gen: v7x
topology: tpu7x:2x2x1
jax: 0.10.0
libtpu: 0.0.40
codegen_flags: <defaults>
</compile_context>

<pallas_src>
import functools

import jax
import jax.numpy as jnp
from jax.experimental import pallas as pl
from jax.experimental.pallas import tpu as pltpu

BN_EPS = 1e-5


def _basic_block_kernel(x_ref, w1_ref, b1_ref, w2_ref, b2_ref, mask_ref, o_ref,
                        *, Wp, L_pad):
    """Fused conv3x3+bn1+relu -> conv3x3+bn2 -> +residual -> relu (one image).

    Flat padded layout: flat index i = r * Wp + c over the (H+2, W+2) padded
    image, zero-padded on the lane axis up to L_pad (multiple of 128).

    x_ref   : (1, Cin, L_pad)   zero-padded flattened input image
    w1_ref  : (9, Cmid, Cin)    conv1 weights per tap (BN1 scale folded in)
    b1_ref  : (Cmid, 1)         BN1 folded bias
    w2_ref  : (9, Cout, Cmid)   conv2 weights per tap (BN2 scale folded in)
    b2_ref  : (Cout, 1)         BN2 folded bias
    mask_ref: (1, L_pad)        1.0 at interior (valid) positions, 0.0 at pad/tail
    o_ref   : (1, Cout, L_pad)  output in the same flat padded layout
    """
    x = x_ref[0]                  # (Cin, L_pad)
    mask = mask_ref[...]          # (1, L_pad)

    # Tap t = dy*3 + dx corresponds to flat-index offset (dy-1)*Wp + (dx-1).
    offsets = [(dy - 1) * Wp + (dx - 1) for dy in range(3) for dx in range(3)]

    def conv3x3(inp, w_ref):
        cout = w_ref.shape[1]
        acc = jnp.zeros((cout, L_pad), jnp.float32)
        for t, off in enumerate(offsets):
            if off == 0:
                shifted = inp
            else:
                # shifted[:, i] == inp[:, i + off] for all interior i (the
                # wrap-around only contaminates pad/tail columns, masked later).
                shifted = pltpu.roll(inp, shift=(-off) % L_pad, axis=1)
            acc += jnp.dot(w_ref[t], shifted, preferred_element_type=jnp.float32)
        return acc                # (cout, L_pad) f32

    # conv1 + bn1 + relu; zero the padding/tail columns so they act as
    # zero-padding for conv2.
    h = jnp.maximum(conv3x3(x, w1_ref) + b1_ref[...], 0.0) * mask
    h = h.astype(x.dtype)

    # conv2 + bn2 + identity residual + relu (f32 epilogue).
    out = conv3x3(h, w2_ref) + b2_ref[...] + x.astype(jnp.float32)
    out = jnp.maximum(out, 0.0)
    o_ref[0] = out.astype(o_ref.dtype)


def basic_block_forward(x_nchw, params, compute_dtype=jnp.float32):
    """BasicBlock.forward: conv1->bn1->relu->conv2->bn2->(+x)->relu.

    x_nchw: (N, C, H, W) float32 (PyTorch layout). Returns (N, C, H, W) float32.
    """
    N, C, H, W = x_nchw.shape
    Hp, Wp = H + 2, W + 2
    L = Hp * Wp
    L_pad = ((L + 127) // 128) * 128

    # Fold eval-mode BN into per-channel scale/bias; fold scale into the weights.
    s1 = params["gamma1"] / jnp.sqrt(params["var1"] + BN_EPS)
    s2 = params["gamma2"] / jnp.sqrt(params["var2"] + BN_EPS)
    b1 = (params["beta1"] - params["mean1"] * s1).reshape(-1, 1).astype(jnp.float32)
    b2 = (params["beta2"] - params["mean2"] * s2).reshape(-1, 1).astype(jnp.float32)

    def prep_w(w_hwio, scale):
        # (3,3,Cin,Cout) * scale(Cout) -> per-tap (Cout, Cin) matrices.
        w = w_hwio * scale[None, None, None, :]
        w = jnp.transpose(w, (0, 1, 3, 2))                  # (3,3,Cout,Cin)
        return w.reshape(9, w.shape[2], w.shape[3]).astype(compute_dtype)

    w1 = prep_w(params["w1"], s1)                           # (9, C, C)
    w2 = prep_w(params["w2"], s2)                           # (9, C, C)

    # NCHW -> spatially padded -> flat (C, L) -> lane-padded (C, L_pad).
    xpad = jnp.pad(x_nchw, ((0, 0), (0, 0), (1, 1), (1, 1)))
    x_flat = xpad.reshape(N, C, L)
    x_flat = jnp.pad(x_flat, ((0, 0), (0, 0), (0, L_pad - L))).astype(compute_dtype)

    # Interior mask: 1.0 at valid HxW positions, 0.0 at padding / lane-tail.
    mask2d = jnp.zeros((Hp, Wp), jnp.float32).at[1:H + 1, 1:W + 1].set(1.0)
    mask = jnp.pad(mask2d.reshape(1, L), ((0, 0), (0, L_pad - L)))

    kernel = functools.partial(_basic_block_kernel, Wp=Wp, L_pad=L_pad)

    out_flat = pl.pallas_call(
        kernel,
        out_shape=jax.ShapeDtypeStruct((N, C, L_pad), jnp.float32),
        grid=(N,),
        in_specs=[
            pl.BlockSpec((1, C, L_pad), lambda n: (n, 0, 0)),
            pl.BlockSpec((9, C, C), lambda n: (0, 0, 0)),
            pl.BlockSpec((C, 1), lambda n: (0, 0)),
            pl.BlockSpec((9, C, C), lambda n: (0, 0, 0)),
            pl.BlockSpec((C, 1), lambda n: (0, 0)),
            pl.BlockSpec((1, L_pad), lambda n: (0, 0)),
        ],
        out_specs=pl.BlockSpec((1, C, L_pad), lambda n: (n, 0, 0)),
        compiler_params=pltpu.CompilerParams(
            dimension_semantics=("parallel",)),
    )(x_flat, w1, b1, w2, b2, mask)

    # Strip lane tail + spatial padding (free XLA slice/reshape).
    out = out_flat[:, :, :L].reshape(N, C, Hp, Wp)[:, :, 1:H + 1, 1:W + 1]
    return out


def _reference_forward(x_nchw, params):
    """Pure-JAX reference (lax conv) for correctness checking."""
    x = jnp.transpose(x_nchw, (0, 2, 3, 1))
    dn = jax.lax.conv_dimension_numbers(x.shape, params["w1"].shape,
                                        ("NHWC", "HWIO", "NHWC"))

    def conv_bn(y, w, gamma, beta, mean, var):
        y = jax.lax.conv_general_dilated(y, w, (1, 1), ((1, 1), (1, 1)),
                                         dimension_numbers=dn)
        s = gamma / jnp.sqrt(var + BN_EPS)
        return y * s + (beta - mean * s)

    out = jnp.maximum(conv_bn(x, params["w1"], params["gamma1"], params["beta1"],
                              params["mean1"], params["var1"]), 0.0)
    out = conv_bn(out, params["w2"], params["gamma2"], params["beta2"],
                  params["mean2"], params["var2"])
    out = jnp.maximum(out + x, 0.0)
    return jnp.transpose(out, (0, 3, 1, 2))


if __name__ == "__main__":
    N, C, H, W = 2, 4, 16, 16   # inplanes = planes = 4, stride = 1
    key = jax.random.PRNGKey(0)
    ks = jax.random.split(key, 9)

    x = jax.random.normal(ks[0], (N, C, H, W), jnp.float32)

    params = {
        # conv weights in HWIO (3, 3, Cin, Cout), deterministic synthetic init
        "w1": jax.random.normal(ks[1], (3, 3, C, C), jnp.float32) * 0.1,
        "w2": jax.random.normal(ks[2], (3, 3, C, C), jnp.float32) * 0.1,
        # BN1 params / running stats
        "gamma1": jax.random.normal(ks[3], (C,), jnp.float32) * 0.1 + 1.0,
        "beta1": jax.random.normal(ks[4], (C,), jnp.float32) * 0.1,
        "mean1": jax.random.normal(ks[5], (C,), jnp.float32) * 0.1,
        "var1": jnp.abs(jax.random.normal(ks[6], (C,), jnp.float32)) * 0.1 + 1.0,
        # BN2 params / running stats
        "gamma2": jax.random.normal(ks[7], (C,), jnp.float32) * 0.1 + 1.0,
        "beta2": jax.random.normal(ks[8], (C,), jnp.float32) * 0.1,
        "mean2": jnp.zeros((C,), jnp.float32),
        "var2": jnp.ones((C,), jnp.float32),
    }

    out = jax.block_until_ready(basic_block_forward(x, params))
    ref = jax.block_until_ready(_reference_forward(x, params))

    assert out.shape == (N, C, H, W), out.shape
    assert jnp.allclose(out, ref, atol=1e-4, rtol=1e-4), \
        float(jnp.max(jnp.abs(out - ref)))
    print("KERNEL_OK")
</pallas_src>

<mosaic_0001>
module attributes {stable_mosaic.version = 11 : i64} {
  func.func @_basic_block_kernel(%arg0: i32, %arg1: memref<1x4x384xf32, #tpu.memory_space<vmem>>, %arg2: memref<9x4x4xf32, #tpu.memory_space<vmem>>, %arg3: memref<4x1xf32, #tpu.memory_space<vmem>>, %arg4: memref<9x4x4xf32, #tpu.memory_space<vmem>>, %arg5: memref<4x1xf32, #tpu.memory_space<vmem>>, %arg6: memref<1x384xf32, #tpu.memory_space<vmem>>, %arg7: memref<1x4x384xf32, #tpu.memory_space<vmem>>) attributes {dimension_semantics = [#tpu.dimension_semantics<parallel>], iteration_bounds = array<i64: 2>, scalar_prefetch = 0 : i64, scratch_operands = 0 : i64, tpu.core_type = #tpu.core_type<tc>, window_params = [{transform_indices = @transform_0, window_bounds = array<i64: 1, 4, 384>}, {pipeline_mode = #tpu.pipeline_mode<synchronous>, transform_indices = @transform_1, window_bounds = array<i64: 9, 4, 4>}, {pipeline_mode = #tpu.pipeline_mode<synchronous>, transform_indices = @transform_2, window_bounds = array<i64: 4, 1>}, {pipeline_mode = #tpu.pipeline_mode<synchronous>, transform_indices = @transform_3, window_bounds = array<i64: 9, 4, 4>}, {pipeline_mode = #tpu.pipeline_mode<synchronous>, transform_indices = @transform_4, window_bounds = array<i64: 4, 1>}, {pipeline_mode = #tpu.pipeline_mode<synchronous>, transform_indices = @transform_5, window_bounds = array<i64: 1, 384>}, {transform_indices = @transform_6, window_bounds = array<i64: 1, 4, 384>}]} {
    %c0 = arith.constant 0 : index
    %c0_0 = arith.constant 0 : index
    %c0_1 = arith.constant 0 : index
    %0 = vector.load %arg1[%c0, %c0_0, %c0_1] : memref<1x4x384xf32, #tpu.memory_space<vmem>>, vector<1x4x384xf32>
    %1 = vector.shape_cast %0 : vector<1x4x384xf32> to vector<4x384xf32>
    %c0_2 = arith.constant 0 : index
    %c0_3 = arith.constant 0 : index
    %2 = vector.load %arg6[%c0_2, %c0_3] : memref<1x384xf32, #tpu.memory_space<vmem>>, vector<1x384xf32>
    %cst = arith.constant 0.000000e+00 : f32
    %3 = vector.broadcast %cst : f32 to vector<4x384xf32>
    %c19_i32 = arith.constant 19 : i32
    %4 = tpu.dynamic_rotate %1 by %c19_i32 dim 1 : vector<4x384xf32>, i32 -> vector<4x384xf32>
    %c0_4 = arith.constant 0 : index
    %c0_5 = arith.constant 0 : index
    %c0_6 = arith.constant 0 : index
    %5 = vector.load %arg2[%c0_4, %c0_5, %c0_6] : memref<9x4x4xf32, #tpu.memory_space<vmem>>, vector<1x4x4xf32>
    %6 = vector.shape_cast %5 : vector<1x4x4xf32> to vector<4x4xf32>
    %cst_7 = arith.constant dense<0.000000e+00> : vector<4x384xf32>
    %7 = tpu.matmul %6, %4, %cst_7 {dimension_numbers = #tpu.dot_dimension_numbers<[1], [0], [0], [1], [0, 0, 1, 1], [], []>} : vector<4x4xf32>, vector<4x384xf32>, vector<4x384xf32> -> vector<4x384xf32>
    %8 = arith.addf %3, %7 : vector<4x384xf32>
    %c18_i32 = arith.constant 18 : i32
    %9 = tpu.dynamic_rotate %1 by %c18_i32 dim 1 : vector<4x384xf32>, i32 -> vector<4x384xf32>
    %c1 = arith.constant 1 : index
    %c0_8 = arith.constant 0 : index
    %c0_9 = arith.constant 0 : index
    %10 = vector.load %arg2[%c1, %c0_8, %c0_9] : memref<9x4x4xf32, #tpu.memory_space<vmem>>, vector<1x4x4xf32>
    %11 = vector.shape_cast %10 : vector<1x4x4xf32> to vector<4x4xf32>
    %cst_10 = arith.constant dense<0.000000e+00> : vector<4x384xf32>
    %12 = tpu.matmul %11, %9, %cst_10 {dimension_numbers = #tpu.dot_dimension_numbers<[1], [0], [0], [1], [0, 0, 1, 1], [], []>} : vector<4x4xf32>, vector<4x384xf32>, vector<4x384xf32> -> vector<4x384xf32>
    %13 = arith.addf %8, %12 : vector<4x384xf32>
    %c17_i32 = arith.constant 17 : i32
    %14 = tpu.dynamic_rotate %1 by %c17_i32 dim 1 : vector<4x384xf32>, i32 -> vector<4x384xf32>
    %c2 = arith.constant 2 : index
    %c0_11 = arith.constant 0 : index
    %c0_12 = arith.constant 0 : index
    %15 = vector.load %arg2[%c2, %c0_11, %c0_12] : memref<9x4x4xf32, #tpu.memory_space<vmem>>, vector<1x4x4xf32>
    %16 = vector.shape_cast %15 : vector<1x4x4xf32> to vector<4x4xf32>
    %cst_13 = arith.constant dense<0.000000e+00> : vector<4x384xf32>
    %17 = tpu.matmul %16, %14, %cst_13 {dimension_numbers = #tpu.dot_dimension_numbers<[1], [0], [0], [1], [0, 0, 1, 1], [], []>} : vector<4x4xf32>, vector<4x384xf32>, vector<4x384xf32> -> vector<4x384xf32>
    %18 = arith.addf %13, %17 : vector<4x384xf32>
    %c1_i32 = arith.constant 1 : i32
    %19 = tpu.dynamic_rotate %1 by %c1_i32 dim 1 : vector<4x384xf32>, i32 -> vector<4x384xf32>
    %c3 = arith.constant 3 : index
    %c0_14 = arith.constant 0 : index
    %c0_15 = arith.constant 0 : index
    %20 = vector.load %arg2[%c3, %c0_14, %c0_15] : memref<9x4x4xf32, #tpu.memory_space<vmem>>, vector<1x4x4xf32>
    %21 = vector.shape_cast %20 : vector<1x4x4xf32> to vector<4x4xf32>
    %cst_16 = arith.constant dense<0.000000e+00> : vector<4x384xf32>
    %22 = tpu.matmul %21, %19, %cst_16 {dimension_numbers = #tpu.dot_dimension_numbers<[1], [0], [0], [1], [0, 0, 1, 1], [], []>} : vector<4x4xf32>, vector<4x384xf32>, vector<4x384xf32> -> vector<4x384xf32>
    %23 = arith.addf %18, %22 : vector<4x384xf32>
    %c4 = arith.constant 4 : index
    %c0_17 = arith.constant 0 : index
    %c0_18 = arith.constant 0 : index
    %24 = vector.load %arg2[%c4, %c0_17, %c0_18] : memref<9x4x4xf32, #tpu.memory_space<vmem>>, vector<1x4x4xf32>
    %25 = vector.shape_cast %24 : vector<1x4x4xf32> to vector<4x4xf32>
    %cst_19 = arith.constant dense<0.000000e+00> : vector<4x384xf32>
    %26 = tpu.matmul %25, %1, %cst_19 {dimension_numbers = #tpu.dot_dimension_numbers<[1], [0], [0], [1], [0, 0, 1, 1], [], []>} : vector<4x4xf32>, vector<4x384xf32>, vector<4x384xf32> -> vector<4x384xf32>
    %27 = arith.addf %23, %26 : vector<4x384xf32>
    %c383_i32 = arith.constant 383 : i32
    %28 = tpu.dynamic_rotate %1 by %c383_i32 dim 1 : vector<4x384xf32>, i32 -> vector<4x384xf32>
    %c5 = arith.constant 5 : index
    %c0_20 = arith.constant 0 : index
    %c0_21 = arith.constant 0 : index
    %29 = vector.load %arg2[%c5, %c0_20, %c0_21] : memref<9x4x4xf32, #tpu.memory_space<vmem>>, vector<1x4x4xf32>
    %30 = vector.shape_cast %29 : vector<1x4x4xf32> to vector<4x4xf32>
    %cst_22 = arith.constant dense<0.000000e+00> : vector<4x384xf32>
    %31 = tpu.matmul %30, %28, %cst_22 {dimension_numbers = #tpu.dot_dimension_numbers<[1], [0], [0], [1], [0, 0, 1, 1], [], []>} : vector<4x4xf32>, vector<4x384xf32>, vector<4x384xf32> -> vector<4x384xf32>
    %32 = arith.addf %27, %31 : vector<4x384xf32>
    %c367_i32 = arith.constant 367 : i32
    %33 = tpu.dynamic_rotate %1 by %c367_i32 dim 1 : vector<4x384xf32>, i32 -> vector<4x384xf32>
    %c6 = arith.constant 6 : index
    %c0_23 = arith.constant 0 : index
    %c0_24 = arith.constant 0 : index
    %34 = vector.load %arg2[%c6, %c0_23, %c0_24] : memref<9x4x4xf32, #tpu.memory_space<vmem>>, vector<1x4x4xf32>
    %35 = vector.shape_cast %34 : vector<1x4x4xf32> to vector<4x4xf32>
    %cst_25 = arith.constant dense<0.000000e+00> : vector<4x384xf32>
    %36 = tpu.matmul %35, %33, %cst_25 {dimension_numbers = #tpu.dot_dimension_numbers<[1], [0], [0], [1], [0, 0, 1, 1], [], []>} : vector<4x4xf32>, vector<4x384xf32>, vector<4x384xf32> -> vector<4x384xf32>
    %37 = arith.addf %32, %36 : vector<4x384xf32>
    %c366_i32 = arith.constant 366 : i32
    %38 = tpu.dynamic_rotate %1 by %c366_i32 dim 1 : vector<4x384xf32>, i32 -> vector<4x384xf32>
    %c7 = arith.constant 7 : index
    %c0_26 = arith.constant 0 : index
    %c0_27 = arith.constant 0 : index
    %39 = vector.load %arg2[%c7, %c0_26, %c0_27] : memref<9x4x4xf32, #tpu.memory_space<vmem>>, vector<1x4x4xf32>
    %40 = vector.shape_cast %39 : vector<1x4x4xf32> to vector<4x4xf32>
    %cst_28 = arith.constant dense<0.000000e+00> : vector<4x384xf32>
    %41 = tpu.matmul %40, %38, %cst_28 {dimension_numbers = #tpu.dot_dimension_numbers<[1], [0], [0], [1], [0, 0, 1, 1], [], []>} : vector<4x4xf32>, vector<4x384xf32>, vector<4x384xf32> -> vector<4x384xf32>
    %42 = arith.addf %37, %41 : vector<4x384xf32>
    %c365_i32 = arith.constant 365 : i32
    %43 = tpu.dynamic_rotate %1 by %c365_i32 dim 1 : vector<4x384xf32>, i32 -> vector<4x384xf32>
    %c8 = arith.constant 8 : index
    %c0_29 = arith.constant 0 : index
    %c0_30 = arith.constant 0 : index
    %44 = vector.load %arg2[%c8, %c0_29, %c0_30] : memref<9x4x4xf32, #tpu.memory_space<vmem>>, vector<1x4x4xf32>
    %45 = vector.shape_cast %44 : vector<1x4x4xf32> to vector<4x4xf32>
    %cst_31 = arith.constant dense<0.000000e+00> : vector<4x384xf32>
    %46 = tpu.matmul %45, %43, %cst_31 {dimension_numbers = #tpu.dot_dimension_numbers<[1], [0], [0], [1], [0, 0, 1, 1], [], []>} : vector<4x4xf32>, vector<4x384xf32>, vector<4x384xf32> -> vector<4x384xf32>
    %47 = arith.addf %42, %46 : vector<4x384xf32>
    %c0_32 = arith.constant 0 : index
    %c0_33 = arith.constant 0 : index
    %48 = vector.load %arg3[%c0_32, %c0_33] : memref<4x1xf32, #tpu.memory_space<vmem>>, vector<4x1xf32>
    %49 = vector.broadcast %48 : vector<4x1xf32> to vector<4x384xf32>
    %50 = arith.addf %47, %49 : vector<4x384xf32>
    %cst_34 = arith.constant 0.000000e+00 : f32
    %51 = vector.broadcast %cst_34 : f32 to vector<4x384xf32>
    %52 = arith.maximumf %50, %51 : vector<4x384xf32>
    %53 = vector.broadcast %2 : vector<1x384xf32> to vector<4x384xf32>
    %54 = arith.mulf %52, %53 : vector<4x384xf32>
    %cst_35 = arith.constant 0.000000e+00 : f32
    %55 = vector.broadcast %cst_35 : f32 to vector<4x384xf32>
    %c19_i32_36 = arith.constant 19 : i32
    %56 = tpu.dynamic_rotate %54 by %c19_i32_36 dim 1 : vector<4x384xf32>, i32 -> vector<4x384xf32>
    %c0_37 = arith.constant 0 : index
    %c0_38 = arith.constant 0 : index
    %c0_39 = arith.constant 0 : index
    %57 = vector.load %arg4[%c0_37, %c0_38, %c0_39] : memref<9x4x4xf32, #tpu.memory_space<vmem>>, vector<1x4x4xf32>
    %58 = vector.shape_cast %57 : vector<1x4x4xf32> to vector<4x4xf32>
    %cst_40 = arith.constant dense<0.000000e+00> : vector<4x384xf32>
    %59 = tpu.matmul %58, %56, %cst_40 {dimension_numbers = #tpu.dot_dimension_numbers<[1], [0], [0], [1], [0, 0, 1, 1], [], []>} : vector<4x4xf32>, vector<4x384xf32>, vector<4x384xf32> -> vector<4x384xf32>
    %60 = arith.addf %55, %59 : vector<4x384xf32>
    %c18_i32_41 = arith.constant 18 : i32
    %61 = tpu.dynamic_rotate %54 by %c18_i32_41 dim 1 : vector<4x384xf32>, i32 -> vector<4x384xf32>
    %c1_42 = arith.constant 1 : index
    %c0_43 = arith.constant 0 : index
    %c0_44 = arith.constant 0 : index
    %62 = vector.load %arg4[%c1_42, %c0_43, %c0_44] : memref<9x4x4xf32, #tpu.memory_space<vmem>>, vector<1x4x4xf32>
    %63 = vector.shape_cast %62 : vector<1x4x4xf32> to vector<4x4xf32>
    %cst_45 = arith.constant dense<0.000000e+00> : vector<4x384xf32>
    %64 = tpu.matmul %63, %61, %cst_45 {dimension_numbers = #tpu.dot_dimension_numbers<[1], [0], [0], [1], [0, 0, 1, 1], [], []>} : vector<4x4xf32>, vector<4x384xf32>, vector<4x384xf32> -> vector<4x384xf32>
    %65 = arith.addf %60, %64 : vector<4x384xf32>
    %c17_i32_46 = arith.constant 17 : i32
    %66 = tpu.dynamic_rotate %54 by %c17_i32_46 dim 1 : vector<4x384xf32>, i32 -> vector<4x384xf32>
    %c2_47 = arith.constant 2 : index
    %c0_48 = arith.constant 0 : index
    %c0_49 = arith.constant 0 : index
    %67 = vector.load %arg4[%c2_47, %c0_48, %c0_49] : memref<9x4x4xf32, #tpu.memory_space<vmem>>, vector<1x4x4xf32>
    %68 = vector.shape_cast %67 : vector<1x4x4xf32> to vector<4x4xf32>
    %cst_50 = arith.constant dense<0.000000e+00> : vector<4x384xf32>
    %69 = tpu.matmul %68, %66, %cst_50 {dimension_numbers = #tpu.dot_dimension_numbers<[1], [0], [0], [1], [0, 0, 1, 1], [], []>} : vector<4x4xf32>, vector<4x384xf32>, vector<4x384xf32> -> vector<4x384xf32>
    %70 = arith.addf %65, %69 : vector<4x384xf32>
    %c1_i32_51 = arith.constant 1 : i32
    %71 = tpu.dynamic_rotate %54 by %c1_i32_51 dim 1 : vector<4x384xf32>, i32 -> vector<4x384xf32>
    %c3_52 = arith.constant 3 : index
    %c0_53 = arith.constant 0 : index
    %c0_54 = arith.constant 0 : index
    %72 = vector.load %arg4[%c3_52, %c0_53, %c0_54] : memref<9x4x4xf32, #tpu.memory_space<vmem>>, vector<1x4x4xf32>
    %73 = vector.shape_cast %72 : vector<1x4x4xf32> to vector<4x4xf32>
    %cst_55 = arith.constant dense<0.000000e+00> : vector<4x384xf32>
    %74 = tpu.matmul %73, %71, %cst_55 {dimension_numbers = #tpu.dot_dimension_numbers<[1], [0], [0], [1], [0, 0, 1, 1], [], []>} : vector<4x4xf32>, vector<4x384xf32>, vector<4x384xf32> -> vector<4x384xf32>
    %75 = arith.addf %70, %74 : vector<4x384xf32>
    %c4_56 = arith.constant 4 : index
    %c0_57 = arith.constant 0 : index
    %c0_58 = arith.constant 0 : index
    %76 = vector.load %arg4[%c4_56, %c0_57, %c0_58] : memref<9x4x4xf32, #tpu.memory_space<vmem>>, vector<1x4x4xf32>
    %77 = vector.shape_cast %76 : vector<1x4x4xf32> to vector<4x4xf32>
    %cst_59 = arith.constant dense<0.000000e+00> : vector<4x384xf32>
    %78 = tpu.matmul %77, %54, %cst_59 {dimension_numbers = #tpu.dot_dimension_numbers<[1], [0], [0], [1], [0, 0, 1, 1], [], []>} : vector<4x4xf32>, vector<4x384xf32>, vector<4x384xf32> -> vector<4x384xf32>
    %79 = arith.addf %75, %78 : vector<4x384xf32>
    %c383_i32_60 = arith.constant 383 : i32
    %80 = tpu.dynamic_rotate %54 by %c383_i32_60 dim 1 : vector<4x384xf32>, i32 -> vector<4x384xf32>
    %c5_61 = arith.constant 5 : index
    %c0_62 = arith.constant 0 : index
    %c0_63 = arith.constant 0 : index
    %81 = vector.load %arg4[%c5_61, %c0_62, %c0_63] : memref<9x4x4xf32, #tpu.memory_space<vmem>>, vector<1x4x4xf32>
    %82 = vector.shape_cast %81 : vector<1x4x4xf32> to vector<4x4xf32>
    %cst_64 = arith.constant dense<0.000000e+00> : vector<4x384xf32>
    %83 = tpu.matmul %82, %80, %cst_64 {dimension_numbers = #tpu.dot_dimension_numbers<[1], [0], [0], [1], [0, 0, 1, 1], [], []>} : vector<4x4xf32>, vector<4x384xf32>, vector<4x384xf32> -> vector<4x384xf32>
    %84 = arith.addf %79, %83 : vector<4x384xf32>
    %c367_i32_65 = arith.constant 367 : i32
    %85 = tpu.dynamic_rotate %54 by %c367_i32_65 dim 1 : vector<4x384xf32>, i32 -> vector<4x384xf32>
    %c6_66 = arith.constant 6 : index
    %c0_67 = arith.constant 0 : index
    %c0_68 = arith.constant 0 : index
    %86 = vector.load %arg4[%c6_66, %c0_67, %c0_68] : memref<9x4x4xf32, #tpu.memory_space<vmem>>, vector<1x4x4xf32>
    %87 = vector.shape_cast %86 : vector<1x4x4xf32> to vector<4x4xf32>
    %cst_69 = arith.constant dense<0.000000e+00> : vector<4x384xf32>
    %88 = tpu.matmul %87, %85, %cst_69 {dimension_numbers = #tpu.dot_dimension_numbers<[1], [0], [0], [1], [0, 0, 1, 1], [], []>} : vector<4x4xf32>, vector<4x384xf32>, vector<4x384xf32> -> vector<4x384xf32>
    %89 = arith.addf %84, %88 : vector<4x384xf32>
    %c366_i32_70 = arith.constant 366 : i32
    %90 = tpu.dynamic_rotate %54 by %c366_i32_70 dim 1 : vector<4x384xf32>, i32 -> vector<4x384xf32>
    %c7_71 = arith.constant 7 : index
    %c0_72 = arith.constant 0 : index
    %c0_73 = arith.constant 0 : index
    %91 = vector.load %arg4[%c7_71, %c0_72, %c0_73] : memref<9x4x4xf32, #tpu.memory_space<vmem>>, vector<1x4x4xf32>
    %92 = vector.shape_cast %91 : vector<1x4x4xf32> to vector<4x4xf32>
    %cst_74 = arith.constant dense<0.000000e+00> : vector<4x384xf32>
    %93 = tpu.matmul %92, %90, %cst_74 {dimension_numbers = #tpu.dot_dimension_numbers<[1], [0], [0], [1], [0, 0, 1, 1], [], []>} : vector<4x4xf32>, vector<4x384xf32>, vector<4x384xf32> -> vector<4x384xf32>
    %94 = arith.addf %89, %93 : vector<4x384xf32>
    %c365_i32_75 = arith.constant 365 : i32
    %95 = tpu.dynamic_rotate %54 by %c365_i32_75 dim 1 : vector<4x384xf32>, i32 -> vector<4x384xf32>
    %c8_76 = arith.constant 8 : index
    %c0_77 = arith.constant 0 : index
    %c0_78 = arith.constant 0 : index
    %96 = vector.load %arg4[%c8_76, %c0_77, %c0_78] : memref<9x4x4xf32, #tpu.memory_space<vmem>>, vector<1x4x4xf32>
    %97 = vector.shape_cast %96 : vector<1x4x4xf32> to vector<4x4xf32>
    %cst_79 = arith.constant dense<0.000000e+00> : vector<4x384xf32>
    %98 = tpu.matmul %97, %95, %cst_79 {dimension_numbers = #tpu.dot_dimension_numbers<[1], [0], [0], [1], [0, 0, 1, 1], [], []>} : vector<4x4xf32>, vector<4x384xf32>, vector<4x384xf32> -> vector<4x384xf32>
    %99 = arith.addf %94, %98 : vector<4x384xf32>
    %c0_80 = arith.constant 0 : index
    %c0_81 = arith.constant 0 : index
    %100 = vector.load %arg5[%c0_80, %c0_81] : memref<4x1xf32, #tpu.memory_space<vmem>>, vector<4x1xf32>
    %101 = vector.broadcast %100 : vector<4x1xf32> to vector<4x384xf32>
    %102 = arith.addf %99, %101 : vector<4x384xf32>
    %103 = arith.addf %102, %1 : vector<4x384xf32>
    %cst_82 = arith.constant 0.000000e+00 : f32
    %104 = vector.broadcast %cst_82 : f32 to vector<4x384xf32>
    %105 = arith.maximumf %103, %104 : vector<4x384xf32>
    %c0_83 = arith.constant 0 : index
    %c0_84 = arith.constant 0 : index
    %c0_85 = arith.constant 0 : index
    %106 = vector.load %arg7[%c0_83, %c0_84, %c0_85] : memref<1x4x384xf32, #tpu.memory_space<vmem>>, vector<1x4x384xf32>
    %107 = vector.shape_cast %106 : vector<1x4x384xf32> to vector<4x384xf32>
    %108 = vector.shape_cast %105 : vector<4x384xf32> to vector<1x4x384xf32>
    tpu.vector_store %arg7[%c0_83, %c0_84, %c0_85], %108 {strides = array<i32>} : memref<1x4x384xf32, #tpu.memory_space<vmem>>, vector<1x4x384xf32>,
    return
  }
  func.func @transform_0(%arg0: i32) -> (i32, i32, i32) {
    %c0_i32 = arith.constant 0 : i32
    %c0_i32_0 = arith.constant 0 : i32
    %c0_i32_1 = arith.constant 0 : i32
    return %arg0, %c0_i32, %c0_i32_0 : i32, i32, i32
  }
  func.func @transform_1(%arg0: i32) -> (i32, i32, i32) {
    %c0_i32 = arith.constant 0 : i32
    %c0_i32_0 = arith.constant 0 : i32
    %c0_i32_1 = arith.constant 0 : i32
    %c0_i32_2 = arith.constant 0 : i32
    return %c0_i32, %c0_i32_0, %c0_i32_1 : i32, i32, i32
  }
  func.func @transform_2(%arg0: i32) -> (i32, i32) {
    %c0_i32 = arith.constant 0 : i32
    %c0_i32_0 = arith.constant 0 : i32
    %c0_i32_1 = arith.constant 0 : i32
    return %c0_i32, %c0_i32_0 : i32, i32
  }
  func.func @transform_3(%arg0: i32) -> (i32, i32, i32) {
    %c0_i32 = arith.constant 0 : i32
    %c0_i32_0 = arith.constant 0 : i32
    %c0_i32_1 = arith.constant 0 : i32
    %c0_i32_2 = arith.constant 0 : i32
    return %c0_i32, %c0_i32_0, %c0_i32_1 : i32, i32, i32
  }
  func.func @transform_4(%arg0: i32) -> (i32, i32) {
    %c0_i32 = arith.constant 0 : i32
    %c0_i32_0 = arith.constant 0 : i32
    %c0_i32_1 = arith.constant 0 : i32
    return %c0_i32, %c0_i32_0 : i32, i32
  }
  func.func @transform_5(%arg0: i32) -> (i32, i32) {
    %c0_i32 = arith.constant 0 : i32
    %c0_i32_0 = arith.constant 0 : i32
    %c0_i32_1 = arith.constant 0 : i32
    return %c0_i32, %c0_i32_0 : i32, i32
  }
  func.func @transform_6(%arg0: i32) -> (i32, i32, i32) {
    %c0_i32 = arith.constant 0 : i32
    %c0_i32_0 = arith.constant 0 : i32
    %c0_i32_1 = arith.constant 0 : i32
    return %arg0, %c0_i32, %c0_i32_0 : i32, i32, i32
  }
}

</mosaic_0001>

<llo_original>
// kernel: tpu_custom_call.1
$region0: #{tpu_custom_call.1}
  #allocation0 [shape = 'u32[]', space=smem, size = 0x4, offset = 0x4, fixed_abs, tag = 'smem constant byte address 0x4 - core index']
  #allocation1 [shape = 'u32[144,128]{1,0:T(1,128)}', space=vmem, size = 0x12000, scoped, tag = 'internal scratch']
  %s0 = inlined_call_operand.vmem [shape: f32[2,4,384], index: 0, kind: input, shape index: {}]
  %s1 = inlined_call_operand.vmem [shape: f32[9,4,4], index: 1, kind: input, shape index: {}]
  %s2 = inlined_call_operand.vmem [shape: f32[4,1], index: 2, kind: input, shape index: {}]
  %s3 = inlined_call_operand.vmem [shape: f32[9,4,4], index: 3, kind: input, shape index: {}]
  %s4 = inlined_call_operand.vmem [shape: f32[4,1], index: 4, kind: input, shape index: {}]
  %s5 = inlined_call_operand.vmem [shape: f32[1,384], index: 5, kind: input, shape index: {}]
  %s6 = inlined_call_operand.hbm [shape: f32[2,4,384], index: 6, kind: output, shape index: {}]
  %s7 = sld [smem:[#allocation0]]
  $region57: #{tpu_custom_call.1} parent=0
    _
  %s9 = ssub.s32 1, %s7
  %s10 = scalar_select 0, %s9, %s7
  $region1: #{tpu_custom_call.1} parent=0
    #allocation2 [shape = 'u8[12288]{0}', space=vmem, size = 0x3000, scoped, tag = 'output window, operand 0']
    #allocation3 [shape = 's32[2]{0}', space=sflag, size = 0x8, scoped, tag = 'scoped memory for tpu_custom_call.1']
    %11 = vsyncpa [#allocation3], 0
    %s12 = scalar_lea.sflag [#allocation3], 1
    %13 = vsyncpa %s12, 0
    loop: start=0, step=1, limit=4
    $region2: #{tpu_custom_call.1} parent=1 // loop_pre_header
      _
    $region3: #{tpu_custom_call.1} parent=1 // loop_header
      %s15 = sphi 0, %s19
      %p16 = scmp.ge.s32.totalorder %s15, 4
      %s25 = sphi 0, %s27
      %s28 = sphi 0, %s25
      %s29 = sphi 0, %s28
      %s45 = sphi 0, %s29
      %s49 = sphi 0, %s49
      %s51 = sphi 0, %s49
      %s52 = sphi 0, %s51
      %s66 = sphi 0, %s52
      %s70 = sphi 0, %s70
      %s72 = sphi 0, %s70
      %s73 = sphi 0, %s72
      %s87 = sphi 0, %s73
      %s91 = sphi 0, %s91
      %s93 = sphi 0, %s91
      %s94 = sphi 0, %s93
      %s108 = sphi 0, %s94
      %s112 = sphi 0, %s112
      %s114 = sphi 0, %s112
      %s115 = sphi 0, %s114
      %s129 = sphi 0, %s115
      %s133 = sphi 0, %s133
      %s135 = sphi 0, %s133
      %s136 = sphi 0, %s135
      %s150 = sphi 0, %s136
      %s156 = sphi 0, %s158
      %s159 = sphi 0, %s156
      %s160 = sphi 0, %s159
      %s176 = sphi 0, %s160
    $region4: #{tpu_custom_call.1} parent=1 // loop_header_branch
      %18 = sbr.rel (%p16) target = $region8
    $region5: #{tpu_custom_call.1} parent=1 // loop_body
      %s20 = ssub.s32 %s15, 1
      %s21 = ssub.s32 %s15, 2
      %s22 = sadd.s32 %s15, 1
      %s23 = ssub.s32 %s15, %s22
      %p24 = scmp.eq.s32.totalorder %s23, 0
      %s26 = sadd.s32 %s25, 1
      %s27 = scalar_select %p24, %s25, %s26
      %p30 = pneg %p24
      %p31 = scmp.eq.s32.totalorder %s15, 1
      %p32 = por %p30, %p31
      %p33 = scmp.ne.s32.totalorder %s25, %s28
      %p34 = scmp.eq.s32.totalorder %s15, 0
      %p35 = por %p33, %p34
      %p36 = scmp.ne.s32.totalorder %s25, %s28
      %p37 = scmp.eq.s32.totalorder %s20, 1
      %p38 = por %p36, %p37
      %p39 = scmp.ne.s32.totalorder %s28, %s29
      %p40 = scmp.eq.s32.totalorder %s20, 0
      %p41 = por %p39, %p40
      %p42 = scmp.ne.s32.totalorder %s28, %s29
      %p43 = scmp.eq.s32.totalorder %s21, 1
      %p44 = por %p42, %p43
      %p46 = scmp.ne.s32.totalorder %s29, %s45
      %p47 = scmp.eq.s32.totalorder %s21, 0
      %p48 = por %p46, %p47
      %s50 = sadd.s32 %s49, 1
      %p53 = scmp.eq.s32.totalorder %s15, 1
      %p54 = scmp.ne.s32.totalorder %s49, %s51
      %p55 = scmp.eq.s32.totalorder %s15, 0
      %p56 = por %p54, %p55
      %p57 = scmp.ne.s32.totalorder %s49, %s51
      %p58 = scmp.eq.s32.totalorder %s20, 1
      %p59 = por %p57, %p58
      %p60 = scmp.ne.s32.totalorder %s51, %s52
      %p61 = scmp.eq.s32.totalorder %s20, 0
      %p62 = por %p60, %p61
      %p63 = scmp.ne.s32.totalorder %s51, %s52
      %p64 = scmp.eq.s32.totalorder %s21, 1
      %p65 = por %p63, %p64
      %p67 = scmp.ne.s32.totalorder %s52, %s66
      %p68 = scmp.eq.s32.totalorder %s21, 0
      %p69 = por %p67, %p68
      %s71 = sadd.s32 %s70, 1
      %p74 = scmp.eq.s32.totalorder %s15, 1
      %p75 = scmp.ne.s32.totalorder %s70, %s72
      %p76 = scmp.eq.s32.totalorder %s15, 0
      %p77 = por %p75, %p76
      %p78 = scmp.ne.s32.totalorder %s70, %s72
      %p79 = scmp.eq.s32.totalorder %s20, 1
      %p80 = por %p78, %p79
      %p81 = scmp.ne.s32.totalorder %s72, %s73
      %p82 = scmp.eq.s32.totalorder %s20, 0
      %p83 = por %p81, %p82
      %p84 = scmp.ne.s32.totalorder %s72, %s73
      %p85 = scmp.eq.s32.totalorder %s21, 1
      %p86 = por %p84, %p85
      %p88 = scmp.ne.s32.totalorder %s73, %s87
      %p89 = scmp.eq.s32.totalorder %s21, 0
      %p90 = por %p88, %p89
      %s92 = sadd.s32 %s91, 1
      %p95 = scmp.eq.s32.totalorder %s15, 1
      %p96 = scmp.ne.s32.totalorder %s91, %s93
      %p97 = scmp.eq.s32.totalorder %s15, 0
      %p98 = por %p96, %p97
      %p99 = scmp.ne.s32.totalorder %s91, %s93
      %p100 = scmp.eq.s32.totalorder %s20, 1
      %p101 = por %p99, %p100
      %p102 = scmp.ne.s32.totalorder %s93, %s94
      %p103 = scmp.eq.s32.totalorder %s20, 0
      %p104 = por %p102, %p103
      %p105 = scmp.ne.s32.totalorder %s93, %s94
      %p106 = scmp.eq.s32.totalorder %s21, 1
      %p107 = por %p105, %p106
      %p109 = scmp.ne.s32.totalorder %s94, %s108
      %p110 = scmp.eq.s32.totalorder %s21, 0
      %p111 = por %p109, %p110
      %s113 = sadd.s32 %s112, 1
      %p116 = scmp.eq.s32.totalorder %s15, 1
      %p117 = scmp.ne.s32.totalorder %s112, %s114
      %p118 = scmp.eq.s32.totalorder %s15, 0
      %p119 = por %p117, %p118
      %p120 = scmp.ne.s32.totalorder %s112, %s114
      %p121 = scmp.eq.s32.totalorder %s20, 1
      %p122 = por %p120, %p121
      %p123 = scmp.ne.s32.totalorder %s114, %s115
      %p124 = scmp.eq.s32.totalorder %s20, 0
      %p125 = por %p123, %p124
      %p126 = scmp.ne.s32.totalorder %s114, %s115
      %p127 = scmp.eq.s32.totalorder %s21, 1
      %p128 = por %p126, %p127
      %p130 = scmp.ne.s32.totalorder %s115, %s129
      %p131 = scmp.eq.s32.totalorder %s21, 0
      %p132 = por %p130, %p131
      %s134 = sadd.s32 %s133, 1
      %p137 = scmp.eq.s32.totalorder %s15, 1
      %p138 = scmp.ne.s32.totalorder %s133, %s135
      %p139 = scmp.eq.s32.totalorder %s15, 0
      %p140 = por %p138, %p139
      %p141 = scmp.ne.s32.totalorder %s133, %s135
      %p142 = scmp.eq.s32.totalorder %s20, 1
      %p143 = por %p141, %p142
      %p144 = scmp.ne.s32.totalorder %s135, %s136
      %p145 = scmp.eq.s32.totalorder %s20, 0
      %p146 = por %p144, %p145
      %p147 = scmp.ne.s32.totalorder %s135, %s136
      %p148 = scmp.eq.s32.totalorder %s21, 1
      %p149 = por %p147, %p148
      %p151 = scmp.ne.s32.totalorder %s136, %s150
      %p152 = scmp.eq.s32.totalorder %s21, 0
      %p153 = por %p151, %p152
      %s154 = ssub.s32 %s15, %s22
      %p155 = scmp.eq.s32.totalorder %s154, 0
      %s157 = sadd.s32 %s156, 1
      %s158 = scalar_select %p155, %s156, %s157
      %p161 = pneg %p155
      %p162 = scmp.eq.s32.totalorder %s15, 1
      %p163 = por %p161, %p162
      %p164 = scmp.ne.s32.totalorder %s156, %s159
      %p165 = scmp.eq.s32.totalorder %s15, 0
      %p166 = por %p164, %p165
      %p167 = scmp.ne.s32.totalorder %s156, %s159
      %p168 = scmp.eq.s32.totalorder %s20, 1
      %p169 = por %p167, %p168
      %p170 = scmp.ne.s32.totalorder %s159, %s160
      %p171 = scmp.eq.s32.totalorder %s20, 0
      %p172 = por %p170, %p171
      %p173 = scmp.ne.s32.totalorder %s159, %s160
      %p174 = scmp.eq.s32.totalorder %s21, 1
      %p175 = por %p173, %p174
      %p177 = scmp.ne.s32.totalorder %s160, %s176
      %p178 = scmp.eq.s32.totalorder %s21, 0
      %p179 = por %p177, %p178
      %p180 = scmp.le.s32.totalorder 1, %s15
      %p181 = scmp.lt.s32.totalorder %s15, 3
      %p182 = pnand %p180, %p181
      %p183 = pneg %p182
      // Predicated region
      $region9: #{tpu_custom_call.1} parent=5 // pred_check
        _
      $region10: #{tpu_custom_call.1} parent=5 // pred_check_branch
        %185 = sbr.rel (%p182) target = $region12
      $region11: #{tpu_custom_call.1} parent=5 // pred_region
        %s186 = ssub.s32 %s15, 1
        // Predicated region
        $region13: #{tpu_custom_call.1} parent=11 // pred_check
          %p187 = pneg %p62
        $region14: #{tpu_custom_call.1} parent=11 // pred_check_branch
          %189 = sbr.rel (%p187) target = $region16
        $region15: #{tpu_custom_call.1} parent=11 // pred_region
          _
        $region16: #{tpu_custom_call.1} parent=11 // pred_fallthru
          _
        // Predicated region
        $region17: #{tpu_custom_call.1} parent=11 // pred_check
          %p190 = pneg %p83
        $region18: #{tpu_custom_call.1} parent=11 // pred_check_branch
          %192 = sbr.rel (%p190) target = $region20
        $region19: #{tpu_custom_call.1} parent=11 // pred_region
          _
        $region20: #{tpu_custom_call.1} parent=11 // pred_fallthru
          _
        // Predicated region
        $region21: #{tpu_custom_call.1} parent=11 // pred_check
          %p193 = pneg %p104
        $region22: #{tpu_custom_call.1} parent=11 // pred_check_branch
          %195 = sbr.rel (%p193) target = $region24
        $region23: #{tpu_custom_call.1} parent=11 // pred_region
          _
        $region24: #{tpu_custom_call.1} parent=11 // pred_fallthru
          _
        // Predicated region
        $region25: #{tpu_custom_call.1} parent=11 // pred_check
          %p196 = pneg %p125
        $region26: #{tpu_custom_call.1} parent=11 // pred_check_branch
          %198 = sbr.rel (%p196) target = $region28
        $region27: #{tpu_custom_call.1} parent=11 // pred_region
          _
        $region28: #{tpu_custom_call.1} parent=11 // pred_fallthru
          _
        // Predicated region
        $region29: #{tpu_custom_call.1} parent=11 // pred_check
          %p199 = pneg %p146
        $region30: #{tpu_custom_call.1} parent=11 // pred_check_branch
          %201 = sbr.rel (%p199) target = $region32
        $region31: #{tpu_custom_call.1} parent=11 // pred_region
          _
        $region32: #{tpu_custom_call.1} parent=11 // pred_fallthru
          _
      $region12: #{tpu_custom_call.1} parent=5 // pred_fallthru
        _
      %p202 = scmp.lt.s32.totalorder %s15, 2
      // Predicated region
      $region33: #{tpu_custom_call.1} parent=5 // pred_check
        %p203 = pneg %p202
      $region34: #{tpu_custom_call.1} parent=5 // pred_check_branch
        %205 = sbr.rel (%p203) target = $region36
      $region35: #{tpu_custom_call.1} parent=5 // pred_region
        // Predicated region
        $region37: #{tpu_custom_call.1} parent=35 // pred_check
          %p206 = pneg %p35
        $region38: #{tpu_custom_call.1} parent=35 // pred_check_branch
          %208 = sbr.rel (%p206) target = $region40
        $region39: #{tpu_custom_call.1} parent=35 // pred_region
          %p209 = scmp.lt.s32.totalorder %s15, 1
          %s210 = scalar_select %p209, %s15, 1
          %s211 = smul.addr %s210, 3
          %s212 = smul.addr %s211, 4
          %s213 = scalar_lea.vmem %s0, %s212
        $region40: #{tpu_custom_call.1} parent=35 // pred_fallthru
          _
      $region36: #{tpu_custom_call.1} parent=5 // pred_fallthru
        _
      %p214 = scmp.le.s32.totalorder 1, %s15
      %p215 = scmp.lt.s32.totalorder %s15, 3
      %p216 = pnand %p214, %p215
      %p217 = pneg %p216
      // Predicated region
      $region41: #{tpu_custom_call.1} parent=5 // pred_check
        _
      $region42: #{tpu_custom_call.1} parent=5 // pred_check_branch
        %219 = sbr.rel (%p216) target = $region44
      $region43: #{tpu_custom_call.1} parent=5 // pred_region
        %s220 = ssub.s32 %s15, 1
        %p221 = scmp.lt.s32.totalorder %s20, 1
        %s222 = scalar_select %p221, %s20, 1
        %s223 = smul.addr %s222, 3
        %s224 = smul.addr %s223, 4
        %s225 = scalar_lea.vmem %s0, %s224
        %p226 = pneg %p41
        %p227 = pneg %p38
        %p228 = pneg %p62
        %p229 = pneg %p59
        %p230 = pneg %p83
        %p231 = pneg %p80
        %p232 = pneg %p104
        %p233 = pneg %p101
        %p234 = pneg %p125
        %p235 = pneg %p122
        %p236 = pneg %p146
        %p237 = pneg %p143
        %p238 = pneg %p172
        %p239 = pneg %p169
        %s240 = sand.u32 %s159, 1
        %s241 = scalar_lea.sflag [#allocation3], %s240
        %s242 = sand.u32 %s159, 1
        %s243 = smul.addr %s242, 12
        %s244 = scalar_lea.vmem [#allocation2], %s243
        %p245 = scmp.lt.s32.totalorder %s20, 1
        %s246 = scalar_select %p245, %s20, 1
        %s247 = smul.addr %s246, 3
        %s248 = smul.addr %s247, 4
        %s249 = scalar_lea.vmem %s0, %s248
        %v250 = vld [vmem:[%s249] sm:$0xff]
        %v251 = vld [vmem:[%s249 + $0x8] sm:$0xf]
        %v252 = vld [vmem:[%s5] sm:$0x7]
        %v255 = vcombine.high %v250, %v250
        %257 = vrot.lane.b32.xlu0 %v250, 19
        %v258 = vpop.permute.xlu0 %257
        %259 = vrot.lane.b32.xlu0 %v255, 19
        %v260 = vpop.permute.xlu0 %259
        %261 = vrot.lane.b32.xlu0 %v251, 19
        %v262 = vpop.permute.xlu0 %261
        %v263 = vlaneseq
        %v264 = vand.u32 %v263, 127
        %vm265 = vcmp.lt.s32.totalorder %v264, 19
        %v266 = vsel %vm265, %v260, %v262
        %v267 = vsel %vm265, %v258, %v260
        %v268 = vsel %vm265, %v262, %v258
        %v269 = vld [vmem:[%s1] sm:$0xf]
        %270 = vrot.lane.b32.xlu0 %v250, 18
        %v271 = vpop.permute.xlu0 %270
        %272 = vrot.lane.b32.xlu0 %v255, 18
        %v273 = vpop.permute.xlu0 %272
        %274 = vrot.lane.b32.xlu0 %v251, 18
        %v275 = vpop.permute.xlu0 %274
        %vm276 = vcmp.lt.s32.totalorder %v264, 18
        %v277 = vsel %vm276, %v273, %v275
        %v278 = vsel %vm276, %v271, %v273
        %v279 = vsel %vm276, %v275, %v271
        %s280 = scalar_lea.vmem %s1, 4
        %v281 = vld [vmem:[%s280] sm:$0xf]
        %vm282 = vcmask 31744
        %v284 = vsel %vm282, %v281, 0
        %vm286 = vcmask 1043456
        %v288 = vsel %vm286, %v279, 0
        %v291 = vsel %vm286, %v278, 0
        %v294 = vsel %vm286, %v277, 0
        %296 = vmatprep.subr.mxu0 %v291
        %297 = vmatpush1.msra.mxu0 %v288
        %298 = vmatprep.subr.mxu0 0.0
        %299 = vmatpush1.msra.mxu0 0.0
        %300 = vmatprep.subr.mxu0 0.0
        %301 = vmatpush1.msra.mxu0 0.0
        %302 = vmatprep.subr.mxu0 0.0
        %303 = vmatpush1.msra.mxu0 0.0
        %304 = vmatprep.subr.mxu0 0.0
        %305 = vmatpush1.msra.mxu0 0.0
        %306 = vmatprep.subr.mxu0 0.0
        %307 = vmatpush1.msra.mxu0 0.0
        %308 = vmatprep.subr.mxu0 0.0
        %309 = vmatpush1.msra.mxu0 0.0
        %310 = vmatprep.subr.mxu0 0.0
        %311 = vmatpush1.msra.mxu0 0.0
        %312 = vmatprep.subr.mxu0 0.0
        %313 = vmatpush1.msra.mxu0 0.0
        %314 = vmatprep.subr.mxu0 0.0
        %315 = vmatpush1.msra.mxu0 0.0
        %316 = vmatprep.subr.mxu0 0.0
        %317 = vmatpush1.msra.mxu0 0.0
        %318 = vmatprep.subr.mxu0 0.0
        %319 = vmatpush1.msra.mxu0 0.0
        %320 = vmatprep.subr.mxu0 0.0
        %321 = vmatpush1.msra.mxu0 0.0
        %322 = vmatprep.subr.mxu0 0.0
        %323 = vmatpush1.msra.mxu0 0.0
        %324 = vmatprep.subr.mxu0 0.0
        %325 = vmatpush1.msra.mxu0 0.0
        %326 = vmatprep.subr.mxu0 0.0
        %327 = vmatpush1.msra.mxu0 0.0
        %328 = vmatprep.subr.mxu0 0.0
        %329 = vmatpush1.msra.mxu0 0.0
        %330 = vmatprep.subr.mxu0 0.0
        %331 = vmatpush1.msra.mxu0 0.0
        %332 = vmatprep.subr.mxu0 0.0
        %333 = vmatpush1.msra.mxu0 0.0
        %334 = vmatprep.subr.mxu0 0.0
        %335 = vmatpush1.msra.mxu0 0.0
        %336 = vmatprep.subr.mxu0 0.0
        %337 = vmatpush1.msra.mxu0 0.0
        %338 = vmatprep.subr.mxu0 0.0
        %339 = vmatpush1.msra.mxu0 0.0
        %340 = vmatprep.subr.mxu0 0.0
        %341 = vmatpush1.msra.mxu0 0.0
        %342 = vmatprep.subr.mxu0 0.0
        %343 = vmatpush1.msra.mxu0 0.0
        %344 = vmatprep.subr.mxu0 0.0
        %345 = vmatpush1.msra.mxu0 0.0
        %346 = vmatprep.subr.mxu0 0.0
        %347 = vmatpush1.msra.mxu0 0.0
        %348 = vmatprep.subr.mxu0 0.0
        %349 = vmatpush1.msra.mxu0 0.0
        %350 = vmatprep.subr.mxu0 0.0
        %351 = vmatpush1.msra.mxu0 0.0
        %352 = vmatprep.subr.mxu0 0.0
        %353 = vmatpush1.msra.mxu0 0.0
        %354 = vmatprep.subr.mxu0 0.0
        %355 = vmatpush1.msra.mxu0 0.0
        %356 = vmatprep.subr.mxu0 0.0
        %357 = vmatpush1.msra.mxu0 0.0
        %358 = vmatprep.subr.mxu0 0.0
        %359 = vmatpush1.msra.mxu0 0.0
        %360 = vmatprep.mubr.f32.mxu0 0.0
        %361 = vmatmul.mubr.f32.gmra.mrb[0].mxu0 %v284
        %v362 = vpop.f32.mrb[0].mxu0
        %v363 = vadd.f32 0.0, %v362
        %v364 = vpop.f32.mrb[0].mxu0
        %v365 = vadd.f32 0.0, %v364
        %366 = vdwg.mxu0
        %367 = vmatprep.subr.mxu0 0.0
        %368 = vmatpush1.msra.mxu0 %v294
        %369 = vmatprep.subr.mxu0 0.0
        %370 = vmatpush1.msra.mxu0 0.0
        %371 = vmatprep.subr.mxu0 0.0
        %372 = vmatpush1.msra.mxu0 0.0
        %373 = vmatprep.subr.mxu0 0.0
        %374 = vmatpush1.msra.mxu0 0.0
        %375 = vmatprep.subr.mxu0 0.0
        %376 = vmatpush1.msra.mxu0 0.0
        %377 = vmatprep.subr.mxu0 0.0
        %378 = vmatpush1.msra.mxu0 0.0
        %379 = vmatprep.subr.mxu0 0.0
        %380 = vmatpush1.msra.mxu0 0.0
        %381 = vmatprep.subr.mxu0 0.0
        %382 = vmatpush1.msra.mxu0 0.0
        %383 = vmatprep.subr.mxu0 0.0
        %384 = vmatpush1.msra.mxu0 0.0
        %385 = vmatprep.subr.mxu0 0.0
        %386 = vmatpush1.msra.mxu0 0.0
        %387 = vmatprep.subr.mxu0 0.0
        %388 = vmatpush1.msra.mxu0 0.0
        %389 = vmatprep.subr.mxu0 0.0
        %390 = vmatpush1.msra.mxu0 0.0
        %391 = vmatprep.subr.mxu0 0.0
        %392 = vmatpush1.msra.mxu0 0.0
        %393 = vmatprep.subr.mxu0 0.0
        %394 = vmatpush1.msra.mxu0 0.0
        %395 = vmatprep.subr.mxu0 0.0
        %396 = vmatpush1.msra.mxu0 0.0
        %397 = vmatprep.subr.mxu0 0.0
        %398 = vmatpush1.msra.mxu0 0.0
        %399 = vmatprep.subr.mxu0 0.0
        %400 = vmatpush1.msra.mxu0 0.0
        %401 = vmatprep.subr.mxu0 0.0
        %402 = vmatpush1.msra.mxu0 0.0
        %403 = vmatprep.subr.mxu0 0.0
        %404 = vmatpush1.msra.mxu0 0.0
        %405 = vmatprep.subr.mxu0 0.0
        %406 = vmatpush1.msra.mxu0 0.0
        %407 = vmatprep.subr.mxu0 0.0
        %408 = vmatpush1.msra.mxu0 0.0
        %409 = vmatprep.subr.mxu0 0.0
        %410 = vmatpush1.msra.mxu0 0.0
        %411 = vmatprep.subr.mxu0 0.0
        %412 = vmatpush1.msra.mxu0 0.0
        %413 = vmatprep.subr.mxu0 0.0
        %414 = vmatpush1.msra.mxu0 0.0
        %415 = vmatprep.subr.mxu0 0.0
        %416 = vmatpush1.msra.mxu0 0.0
        %417 = vmatprep.subr.mxu0 0.0
        %418 = vmatpush1.msra.mxu0 0.0
        %419 = vmatprep.subr.mxu0 0.0
        %420 = vmatpush1.msra.mxu0 0.0
        %421 = vmatprep.subr.mxu0 0.0
        %422 = vmatpush1.msra.mxu0 0.0
        %423 = vmatprep.subr.mxu0 0.0
        %424 = vmatpush1.msra.mxu0 0.0
        %425 = vmatprep.subr.mxu0 0.0
        %426 = vmatpush1.msra.mxu0 0.0
        %427 = vmatprep.subr.mxu0 0.0
        %428 = vmatpush1.msra.mxu0 0.0
        %429 = vmatprep.subr.mxu0 0.0
        %430 = vmatpush1.msra.mxu0 0.0
        %431 = vmatprep.mubr.f32.mxu0 0.0
        %432 = vmatmul.mubr.f32.gmra.mrb[0].mxu0 %v284
        %v433 = vpop.f32.mrb[0].mxu0
        %v434 = vadd.f32 0.0, %v433
        %v435 = vpop.f32.mrb[0].mxu0
        %436 = vdwg.mxu0
        %v438 = vsel %vm282, %v269, 0
        %v441 = vsel %vm286, %v268, 0
        %v444 = vsel %vm286, %v267, 0
        %v447 = vsel %vm286, %v266, 0
        %449 = vmatprep.subr.mxu0 %v444
        %450 = vmatpush1.msra.mxu0 %v441
        %451 = vmatprep.subr.mxu0 0.0
        %452 = vmatpush1.msra.mxu0 0.0
        %453 = vmatprep.subr.mxu0 0.0
        %454 = vmatpush1.msra.mxu0 0.0
        %455 = vmatprep.subr.mxu0 0.0
        %456 = vmatpush1.msra.mxu0 0.0
        %457 = vmatprep.subr.mxu0 0.0
        %458 = vmatpush1.msra.mxu0 0.0
        %459 = vmatprep.subr.mxu0 0.0
        %460 = vmatpush1.msra.mxu0 0.0
        %461 = vmatprep.subr.mxu0 0.0
        %462 = vmatpush1.msra.mxu0 0.0
        %463 = vmatprep.subr.mxu0 0.0
        %464 = vmatpush1.msra.mxu0 0.0
        %465 = vmatprep.subr.mxu0 0.0
        %466 = vmatpush1.msra.mxu0 0.0
        %467 = vmatprep.subr.mxu0 0.0
        %468 = vmatpush1.msra.mxu0 0.0
        %469 = vmatprep.subr.mxu0 0.0
        %470 = vmatpush1.msra.mxu0 0.0
        %471 = vmatprep.subr.mxu0 0.0
        %472 = vmatpush1.msra.mxu0 0.0
        %473 = vmatprep.subr.mxu0 0.0
        %474 = vmatpush1.msra.mxu0 0.0
        %475 = vmatprep.subr.mxu0 0.0
        %476 = vmatpush1.msra.mxu0 0.0
        %477 = vmatprep.subr.mxu0 0.0
        %478 = vmatpush1.msra.mxu0 0.0
        %479 = vmatprep.subr.mxu0 0.0
        %480 = vmatpush1.msra.mxu0 0.0
        %481 = vmatprep.subr.mxu0 0.0
        %482 = vmatpush1.msra.mxu0 0.0
        %483 = vmatprep.subr.mxu0 0.0
        %484 = vmatpush1.msra.mxu0 0.0
        %485 = vmatprep.subr.mxu0 0.0
        %486 = vmatpush1.msra.mxu0 0.0
        %487 = vmatprep.subr.mxu0 0.0
        %488 = vmatpush1.msra.mxu0 0.0
        %489 = vmatprep.subr.mxu0 0.0
        %490 = vmatpush1.msra.mxu0 0.0
        %491 = vmatprep.subr.mxu0 0.0
        %492 = vmatpush1.msra.mxu0 0.0
        %493 = vmatprep.subr.mxu0 0.0
        %494 = vmatpush1.msra.mxu0 0.0
        %495 = vmatprep.subr.mxu0 0.0
        %496 = vmatpush1.msra.mxu0 0.0
        %497 = vmatprep.subr.mxu0 0.0
        %498 = vmatpush1.msra.mxu0 0.0
        %499 = vmatprep.subr.mxu0 0.0
        %500 = vmatpush1.msra.mxu0 0.0
        %501 = vmatprep.subr.mxu0 0.0
        %502 = vmatpush1.msra.mxu0 0.0
        %503 = vmatprep.subr.mxu0 0.0
        %504 = vmatpush1.msra.mxu0 0.0
        %505 = vmatprep.subr.mxu0 0.0
        %506 = vmatpush1.msra.mxu0 0.0
        %507 = vmatprep.subr.mxu0 0.0
        %508 = vmatpush1.msra.mxu0 0.0
        %509 = vmatprep.subr.mxu0 0.0
        %510 = vmatpush1.msra.mxu0 0.0
        %511 = vmatprep.subr.mxu0 0.0
        %512 = vmatpush1.msra.mxu0 0.0
        %513 = vmatprep.mubr.f32.mxu0 0.0
        %514 = vmatmul.mubr.f32.gmra.mrb[0].mxu0 %v438
        %v515 = vpop.f32.mrb[0].mxu0
        %v516 = vadd.f32 %v363, %v515
        %v517 = vpop.f32.mrb[0].mxu0
        %v518 = vadd.f32 %v365, %v517
        %519 = vdwg.mxu0
        %520 = vmatprep.subr.mxu0 0.0
        %521 = vmatpush1.msra.mxu0 %v447
        %522 = vmatprep.subr.mxu0 0.0
        %523 = vmatpush1.msra.mxu0 0.0
        %524 = vmatprep.subr.mxu0 0.0
        %525 = vmatpush1.msra.mxu0 0.0
        %526 = vmatprep.subr.mxu0 0.0
        %527 = vmatpush1.msra.mxu0 0.0
        %528 = vmatprep.subr.mxu0 0.0
        %529 = vmatpush1.msra.mxu0 0.0
        %530 = vmatprep.subr.mxu0 0.0
        %531 = vmatpush1.msra.mxu0 0.0
        %532 = vmatprep.subr.mxu0 0.0
        %533 = vmatpush1.msra.mxu0 0.0
        %534 = vmatprep.subr.mxu0 0.0
        %535 = vmatpush1.msra.mxu0 0.0
        %536 = vmatprep.subr.mxu0 0.0
        %537 = vmatpush1.msra.mxu0 0.0
        %538 = vmatprep.subr.mxu0 0.0
        %539 = vmatpush1.msra.mxu0 0.0
        %540 = vmatprep.subr.mxu0 0.0
        %541 = vmatpush1.msra.mxu0 0.0
        %542 = vmatprep.subr.mxu0 0.0
        %543 = vmatpush1.msra.mxu0 0.0
        %544 = vmatprep.subr.mxu0 0.0
        %545 = vmatpush1.msra.mxu0 0.0
        %546 = vmatprep.subr.mxu0 0.0
        %547 = vmatpush1.msra.mxu0 0.0
        %548 = vmatprep.subr.mxu0 0.0
        %549 = vmatpush1.msra.mxu0 0.0
        %550 = vmatprep.subr.mxu0 0.0
        %551 = vmatpush1.msra.mxu0 0.0
        %552 = vmatprep.subr.mxu0 0.0
        %553 = vmatpush1.msra.mxu0 0.0
        %554 = vmatprep.subr.mxu0 0.0
        %555 = vmatpush1.msra.mxu0 0.0
        %556 = vmatprep.subr.mxu0 0.0
        %557 = vmatpush1.msra.mxu0 0.0
        %558 = vmatprep.subr.mxu0 0.0
        %559 = vmatpush1.msra.mxu0 0.0
        %560 = vmatprep.subr.mxu0 0.0
        %561 = vmatpush1.msra.mxu0 0.0
        %562 = vmatprep.subr.mxu0 0.0
        %563 = vmatpush1.msra.mxu0 0.0
        %564 = vmatprep.subr.mxu0 0.0
        %565 = vmatpush1.msra.mxu0 0.0
        %566 = vmatprep.subr.mxu0 0.0
        %567 = vmatpush1.msra.mxu0 0.0
        %568 = vmatprep.subr.mxu0 0.0
        %569 = vmatpush1.msra.mxu0 0.0
        %570 = vmatprep.subr.mxu0 0.0
        %571 = vmatpush1.msra.mxu0 0.0
        %572 = vmatprep.subr.mxu0 0.0
        %573 = vmatpush1.msra.mxu0 0.0
        %574 = vmatprep.subr.mxu0 0.0
        %575 = vmatpush1.msra.mxu0 0.0
        %576 = vmatprep.subr.mxu0 0.0
        %577 = vmatpush1.msra.mxu0 0.0
        %578 = vmatprep.subr.mxu0 0.0
        %579 = vmatpush1.msra.mxu0 0.0
        %580 = vmatprep.subr.mxu0 0.0
        %581 = vmatpush1.msra.mxu0 0.0
        %582 = vmatprep.subr.mxu0 0.0
        %583 = vmatpush1.msra.mxu0 0.0
        %584 = vmatprep.mubr.f32.mxu0 0.0
        %585 = vmatmul.mubr.f32.gmra.mrb[0].mxu0 %v438
        %v586 = vpop.f32.mrb[0].mxu0
        %v587 = vadd.f32 %v434, %v586
        %v588 = vpop.f32.mrb[0].mxu0
        %589 = vdwg.mxu0
        %590 = vrot.lane.b32.xlu0 %v250, 17
        %v591 = vpop.permute.xlu0 %590
        %592 = vrot.lane.b32.xlu0 %v255, 17
        %v593 = vpop.permute.xlu0 %592
        %594 = vrot.lane.b32.xlu0 %v251, 17
        %v595 = vpop.permute.xlu0 %594
        %vm596 = vcmp.lt.s32.totalorder %v264, 17
        %v597 = vsel %vm596, %v593, %v595
        %v598 = vsel %vm596, %v591, %v593
        %v599 = vsel %vm596, %v595, %v591
        %s600 = scalar_lea.vmem %s1, 8
        %v601 = vld [vmem:[%s600] sm:$0xf]
        %v603 = vsel %vm282, %v601, 0
        %v606 = vsel %vm286, %v599, 0
        %v609 = vsel %vm286, %v598, 0
        %v612 = vsel %vm286, %v597, 0
        %614 = vmatprep.subr.mxu0 %v609
        %615 = vmatpush1.msra.mxu0 %v606
        %616 = vmatprep.subr.mxu0 0.0
        %617 = vmatpush1.msra.mxu0 0.0
        %618 = vmatprep.subr.mxu0 0.0
        %619 = vmatpush1.msra.mxu0 0.0
        %620 = vmatprep.subr.mxu0 0.0
        %621 = vmatpush1.msra.mxu0 0.0
        %622 = vmatprep.subr.mxu0 0.0
        %623 = vmatpush1.msra.mxu0 0.0
        %624 = vmatprep.subr.mxu0 0.0
        %625 = vmatpush1.msra.mxu0 0.0
        %626 = vmatprep.subr.mxu0 0.0
        %627 = vmatpush1.msra.mxu0 0.0
        %628 = vmatprep.subr.mxu0 0.0
        %629 = vmatpush1.msra.mxu0 0.0
        %630 = vmatprep.subr.mxu0 0.0
        %631 = vmatpush1.msra.mxu0 0.0
        %632 = vmatprep.subr.mxu0 0.0
        %633 = vmatpush1.msra.mxu0 0.0
        %634 = vmatprep.subr.mxu0 0.0
        %635 = vmatpush1.msra.mxu0 0.0
        %636 = vmatprep.subr.mxu0 0.0
        %637 = vmatpush1.msra.mxu0 0.0
        %638 = vmatprep.subr.mxu0 0.0
        %639 = vmatpush1.msra.mxu0 0.0
        %640 = vmatprep.subr.mxu0 0.0
        %641 = vmatpush1.msra.mxu0 0.0
        %642 = vmatprep.subr.mxu0 0.0
        %643 = vmatpush1.msra.mxu0 0.0
        %644 = vmatprep.subr.mxu0 0.0
        %645 = vmatpush1.msra.mxu0 0.0
        %646 = vmatprep.subr.mxu0 0.0
        %647 = vmatpush1.msra.mxu0 0.0
        %648 = vmatprep.subr.mxu0 0.0
        %649 = vmatpush1.msra.mxu0 0.0
        %650 = vmatprep.subr.mxu0 0.0
        %651 = vmatpush1.msra.mxu0 0.0
        %652 = vmatprep.subr.mxu0 0.0
        %653 = vmatpush1.msra.mxu0 0.0
        %654 = vmatprep.subr.mxu0 0.0
        %655 = vmatpush1.msra.mxu0 0.0
        %656 = vmatprep.subr.mxu0 0.0
        %657 = vmatpush1.msra.mxu0 0.0
        %658 = vmatprep.subr.mxu0 0.0
        %659 = vmatpush1.msra.mxu0 0.0
        %660 = vmatprep.subr.mxu0 0.0
        %661 = vmatpush1.msra.mxu0 0.0
        %662 = vmatprep.subr.mxu0 0.0
        %663 = vmatpush1.msra.mxu0 0.0
        %664 = vmatprep.subr.mxu0 0.0
        %665 = vmatpush1.msra.mxu0 0.0
        %666 = vmatprep.subr.mxu0 0.0
        %667 = vmatpush1.msra.mxu0 0.0
        %668 = vmatprep.subr.mxu0 0.0
        %669 = vmatpush1.msra.mxu0 0.0
        %670 = vmatprep.subr.mxu0 0.0
        %671 = vmatpush1.msra.mxu0 0.0
        %672 = vmatprep.subr.mxu0 0.0
        %673 = vmatpush1.msra.mxu0 0.0
        %674 = vmatprep.subr.mxu0 0.0
        %675 = vmatpush1.msra.mxu0 0.0
        %676 = vmatprep.subr.mxu0 0.0
        %677 = vmatpush1.msra.mxu0 0.0
        %678 = vmatprep.mubr.f32.mxu0 0.0
        %679 = vmatmul.mubr.f32.gmra.mrb[0].mxu0 %v603
        %v680 = vpop.f32.mrb[0].mxu0
        %v681 = vadd.f32 0.0, %v680
        %v682 = vpop.f32.mrb[0].mxu0
        %v683 = vadd.f32 0.0, %v682
        %684 = vdwg.mxu0
        %685 = vmatprep.subr.mxu0 0.0
        %686 = vmatpush1.msra.mxu0 %v612
        %687 = vmatprep.subr.mxu0 0.0
        %688 = vmatpush1.msra.mxu0 0.0
        %689 = vmatprep.subr.mxu0 0.0
        %690 = vmatpush1.msra.mxu0 0.0
        %691 = vmatprep.subr.mxu0 0.0
        %692 = vmatpush1.msra.mxu0 0.0
        %693 = vmatprep.subr.mxu0 0.0
        %694 = vmatpush1.msra.mxu0 0.0
        %695 = vmatprep.subr.mxu0 0.0
        %696 = vmatpush1.msra.mxu0 0.0
        %697 = vmatprep.subr.mxu0 0.0
        %698 = vmatpush1.msra.mxu0 0.0
        %699 = vmatprep.subr.mxu0 0.0
        %700 = vmatpush1.msra.mxu0 0.0
        %701 = vmatprep.subr.mxu0 0.0
        %702 = vmatpush1.msra.mxu0 0.0
        %703 = vmatprep.subr.mxu0 0.0
        %704 = vmatpush1.msra.mxu0 0.0
        %705 = vmatprep.subr.mxu0 0.0
        %706 = vmatpush1.msra.mxu0 0.0
        %707 = vmatprep.subr.mxu0 0.0
        %708 = vmatpush1.msra.mxu0 0.0
        %709 = vmatprep.subr.mxu0 0.0
        %710 = vmatpush1.msra.mxu0 0.0
        %711 = vmatprep.subr.mxu0 0.0
        %712 = vmatpush1.msra.mxu0 0.0
        %713 = vmatprep.subr.mxu0 0.0
        %714 = vmatpush1.msra.mxu0 0.0
        %715 = vmatprep.subr.mxu0 0.0
        %716 = vmatpush1.msra.mxu0 0.0
        %717 = vmatprep.subr.mxu0 0.0
        %718 = vmatpush1.msra.mxu0 0.0
        %719 = vmatprep.subr.mxu0 0.0
        %720 = vmatpush1.msra.mxu0 0.0
        %721 = vmatprep.subr.mxu0 0.0
        %722 = vmatpush1.msra.mxu0 0.0
        %723 = vmatprep.subr.mxu0 0.0
        %724 = vmatpush1.msra.mxu0 0.0
        %725 = vmatprep.subr.mxu0 0.0
        %726 = vmatpush1.msra.mxu0 0.0
        %727 = vmatprep.subr.mxu0 0.0
        %728 = vmatpush1.msra.mxu0 0.0
        %729 = vmatprep.subr.mxu0 0.0
        %730 = vmatpush1.msra.mxu0 0.0
        %731 = vmatprep.subr.mxu0 0.0
        %732 = vmatpush1.msra.mxu0 0.0
        %733 = vmatprep.subr.mxu0 0.0
        %734 = vmatpush1.msra.mxu0 0.0
        %735 = vmatprep.subr.mxu0 0.0
        %736 = vmatpush1.msra.mxu0 0.0
        %737 = vmatprep.subr.mxu0 0.0
        %738 = vmatpush1.msra.mxu0 0.0
        %739 = vmatprep.subr.mxu0 0.0
        %740 = vmatpush1.msra.mxu0 0.0
        %741 = vmatprep.subr.mxu0 0.0
        %742 = vmatpush1.msra.mxu0 0.0
        %743 = vmatprep.subr.mxu0 0.0
        %744 = vmatpush1.msra.mxu0 0.0
        %745 = vmatprep.subr.mxu0 0.0
        %746 = vmatpush1.msra.mxu0 0.0
        %747 = vmatprep.subr.mxu0 0.0
        %748 = vmatpush1.msra.mxu0 0.0
        %749 = vmatprep.mubr.f32.mxu0 0.0
        %750 = vmatmul.mubr.f32.gmra.mrb[0].mxu0 %v603
        %v751 = vpop.f32.mrb[0].mxu0
        %v752 = vadd.f32 0.0, %v751
        %v753 = vpop.f32.mrb[0].mxu0
        %754 = vdwg.mxu0
        %v755 = vadd.f32 %v516, %v681
        %v756 = vadd.f32 %v518, %v683
        %v757 = vadd.f32 %v587, %v752
        %758 = vrot.lane.b32.xlu0 %v250, 1
        %v759 = vpop.permute.xlu0 %758
        %760 = vrot.lane.b32.xlu0 %v255, 1
        %v761 = vpop.permute.xlu0 %760
        %762 = vrot.lane.b32.xlu0 %v251, 1
        %v763 = vpop.permute.xlu0 %762
        %vm764 = vcmp.lt.s32.totalorder %v264, 1
        %v765 = vsel %vm764, %v761, %v763
        %v766 = vsel %vm764, %v759, %v761
        %v767 = vsel %vm764, %v763, %v759
        %s768 = scalar_lea.vmem %s1, 12
        %v769 = vld [vmem:[%s768] sm:$0xf]
        %v771 = vsel %vm282, %v769, 0
        %v774 = vsel %vm286, %v767, 0
        %v777 = vsel %vm286, %v766, 0
        %v780 = vsel %vm286, %v765, 0
        %782 = vmatprep.subr.mxu0 %v777
        %783 = vmatpush1.msra.mxu0 %v774
        %784 = vmatprep.subr.mxu0 0.0
        %785 = vmatpush1.msra.mxu0 0.0
        %786 = vmatprep.subr.mxu0 0.0
        %787 = vmatpush1.msra.mxu0 0.0
        %788 = vmatprep.subr.mxu0 0.0
        %789 = vmatpush1.msra.mxu0 0.0
        %790 = vmatprep.subr.mxu0 0.0
        %791 = vmatpush1.msra.mxu0 0.0
        %792 = vmatprep.subr.mxu0 0.0
        %793 = vmatpush1.msra.mxu0 0.0
        %794 = vmatprep.subr.mxu0 0.0
        %795 = vmatpush1.msra.mxu0 0.0
        %796 = vmatprep.subr.mxu0 0.0
        %797 = vmatpush1.msra.mxu0 0.0
        %798 = vmatprep.subr.mxu0 0.0
        %799 = vmatpush1.msra.mxu0 0.0
        %800 = vmatprep.subr.mxu0 0.0
        %801 = vmatpush1.msra.mxu0 0.0
        %802 = vmatprep.subr.mxu0 0.0
        %803 = vmatpush1.msra.mxu0 0.0
        %804 = vmatprep.subr.mxu0 0.0
        %805 = vmatpush1.msra.mxu0 0.0
        %806 = vmatprep.subr.mxu0 0.0
        %807 = vmatpush1.msra.mxu0 0.0
        %808 = vmatprep.subr.mxu0 0.0
        %809 = vmatpush1.msra.mxu0 0.0
        %810 = vmatprep.subr.mxu0 0.0
        %811 = vmatpush1.msra.mxu0 0.0
        %812 = vmatprep.subr.mxu0 0.0
        %813 = vmatpush1.msra.mxu0 0.0
        %814 = vmatprep.subr.mxu0 0.0
        %815 = vmatpush1.msra.mxu0 0.0
        %816 = vmatprep.subr.mxu0 0.0
        %817 = vmatpush1.msra.mxu0 0.0
        %818 = vmatprep.subr.mxu0 0.0
        %819 = vmatpush1.msra.mxu0 0.0
        %820 = vmatprep.subr.mxu0 0.0
        %821 = vmatpush1.msra.mxu0 0.0
        %822 = vmatprep.subr.mxu0 0.0
        %823 = vmatpush1.msra.mxu0 0.0
        %824 = vmatprep.subr.mxu0 0.0
        %825 = vmatpush1.msra.mxu0 0.0
        %826 = vmatprep.subr.mxu0 0.0
        %827 = vmatpush1.msra.mxu0 0.0
        %828 = vmatprep.subr.mxu0 0.0
        %829 = vmatpush1.msra.mxu0 0.0
        %830 = vmatprep.subr.mxu0 0.0
        %831 = vmatpush1.msra.mxu0 0.0
        %832 = vmatprep.subr.mxu0 0.0
        %833 = vmatpush1.msra.mxu0 0.0
        %834 = vmatprep.subr.mxu0 0.0
        %835 = vmatpush1.msra.mxu0 0.0
        %836 = vmatprep.subr.mxu0 0.0
        %837 = vmatpush1.msra.mxu0 0.0
        %838 = vmatprep.subr.mxu0 0.0
        %839 = vmatpush1.msra.mxu0 0.0
        %840 = vmatprep.subr.mxu0 0.0
        %841 = vmatpush1.msra.mxu0 0.0
        %842 = vmatprep.subr.mxu0 0.0
        %843 = vmatpush1.msra.mxu0 0.0
        %844 = vmatprep.subr.mxu0 0.0
        %845 = vmatpush1.msra.mxu0 0.0
        %846 = vmatprep.mubr.f32.mxu0 0.0
        %847 = vmatmul.mubr.f32.gmra.mrb[0].mxu0 %v771
        %v848 = vpop.f32.mrb[0].mxu0
        %v849 = vadd.f32 0.0, %v848
        %v850 = vpop.f32.mrb[0].mxu0
        %v851 = vadd.f32 0.0, %v850
        %852 = vdwg.mxu0
        %853 = vmatprep.subr.mxu0 0.0
        %854 = vmatpush1.msra.mxu0 %v780
        %855 = vmatprep.subr.mxu0 0.0
        %856 = vmatpush1.msra.mxu0 0.0
        %857 = vmatprep.subr.mxu0 0.0
        %858 = vmatpush1.msra.mxu0 0.0
        %859 = vmatprep.subr.mxu0 0.0
        %860 = vmatpush1.msra.mxu0 0.0
        %861 = vmatprep.subr.mxu0 0.0
        %862 = vmatpush1.msra.mxu0 0.0
        %863 = vmatprep.subr.mxu0 0.0
        %864 = vmatpush1.msra.mxu0 0.0
        %865 = vmatprep.subr.mxu0 0.0
        %866 = vmatpush1.msra.mxu0 0.0
        %867 = vmatprep.subr.mxu0 0.0
        %868 = vmatpush1.msra.mxu0 0.0
        %869 = vmatprep.subr.mxu0 0.0
        %870 = vmatpush1.msra.mxu0 0.0
        %871 = vmatprep.subr.mxu0 0.0
        %872 = vmatpush1.msra.mxu0 0.0
        %873 = vmatprep.subr.mxu0 0.0
        %874 = vmatpush1.msra.mxu0 0.0
        %875 = vmatprep.subr.mxu0 0.0
        %876 = vmatpush1.msra.mxu0 0.0
        %877 = vmatprep.subr.mxu0 0.0
        %878 = vmatpush1.msra.mxu0 0.0
        %879 = vmatprep.subr.mxu0 0.0
        %880 = vmatpush1.msra.mxu0 0.0
        %881 = vmatprep.subr.mxu0 0.0
        %882 = vmatpush1.msra.mxu0 0.0
        %883 = vmatprep.subr.mxu0 0.0
        %884 = vmatpush1.msra.mxu0 0.0
        %885 = vmatprep.subr.mxu0 0.0
        %886 = vmatpush1.msra.mxu0 0.0
        %887 = vmatprep.subr.mxu0 0.0
        %888 = vmatpush1.msra.mxu0 0.0
        %889 = vmatprep.subr.mxu0 0.0
        %890 = vmatpush1.msra.mxu0 0.0
        %891 = vmatprep.subr.mxu0 0.0
        %892 = vmatpush1.msra.mxu0 0.0
        %893 = vmatprep.subr.mxu0 0.0
        %894 = vmatpush1.msra.mxu0 0.0
        %895 = vmatprep.subr.mxu0 0.0
        %896 = vmatpush1.msra.mxu0 0.0
        %897 = vmatprep.subr.mxu0 0.0
        %898 = vmatpush1.msra.mxu0 0.0
        %899 = vmatprep.subr.mxu0 0.0
        %900 = vmatpush1.msra.mxu0 0.0
        %901 = vmatprep.subr.mxu0 0.0
        %902 = vmatpush1.msra.mxu0 0.0
        %903 = vmatprep.subr.mxu0 0.0
        %904 = vmatpush1.msra.mxu0 0.0
        %905 = vmatprep.subr.mxu0 0.0
        %906 = vmatpush1.msra.mxu0 0.0
        %907 = vmatprep.subr.mxu0 0.0
        %908 = vmatpush1.msra.mxu0 0.0
        %909 = vmatprep.subr.mxu0 0.0
        %910 = vmatpush1.msra.mxu0 0.0
        %911 = vmatprep.subr.mxu0 0.0
        %912 = vmatpush1.msra.mxu0 0.0
        %913 = vmatprep.subr.mxu0 0.0
        %914 = vmatpush1.msra.mxu0 0.0
        %915 = vmatprep.subr.mxu0 0.0
        %916 = vmatpush1.msra.mxu0 0.0
        %917 = vmatprep.mubr.f32.mxu0 0.0
        %918 = vmatmul.mubr.f32.gmra.mrb[0].mxu0 %v771
        %v919 = vpop.f32.mrb[0].mxu0
        %v920 = vadd.f32 0.0, %v919
        %v921 = vpop.f32.mrb[0].mxu0
        %922 = vdwg.mxu0
        %v923 = vadd.f32 %v755, %v849
        %v924 = vadd.f32 %v756, %v851
        %v925 = vadd.f32 %v757, %v920
        %s926 = scalar_lea.vmem %s1, 16
        %v927 = vld [vmem:[%s926] sm:$0xf]
        %v929 = vsel %vm282, %v927, 0
        %v931 = vsel %vm286, %v250, 0
        %v933 = vsel %vm286, %v255, 0
        %v935 = vsel %vm286, %v251, 0
        %937 = vmatprep.subr.mxu0 %v933
        %938 = vmatpush1.msra.mxu0 %v931
        %939 = vmatprep.subr.mxu0 0.0
        %940 = vmatpush1.msra.mxu0 0.0
        %941 = vmatprep.subr.mxu0 0.0
        %942 = vmatpush1.msra.mxu0 0.0
        %943 = vmatprep.subr.mxu0 0.0
        %944 = vmatpush1.msra.mxu0 0.0
        %945 = vmatprep.subr.mxu0 0.0
        %946 = vmatpush1.msra.mxu0 0.0
        %947 = vmatprep.subr.mxu0 0.0
        %948 = vmatpush1.msra.mxu0 0.0
        %949 = vmatprep.subr.mxu0 0.0
        %950 = vmatpush1.msra.mxu0 0.0
        %951 = vmatprep.subr.mxu0 0.0
        %952 = vmatpush1.msra.mxu0 0.0
        %953 = vmatprep.subr.mxu0 0.0
        %954 = vmatpush1.msra.mxu0 0.0
        %955 = vmatprep.subr.mxu0 0.0
        %956 = vmatpush1.msra.mxu0 0.0
        %957 = vmatprep.subr.mxu0 0.0
        %958 = vmatpush1.msra.mxu0 0.0
        %959 = vmatprep.subr.mxu0 0.0
        %960 = vmatpush1.msra.mxu0 0.0
        %961 = vmatprep.subr.mxu0 0.0
        %962 = vmatpush1.msra.mxu0 0.0
        %963 = vmatprep.subr.mxu0 0.0
        %964 = vmatpush1.msra.mxu0 0.0
        %965 = vmatprep.subr.mxu0 0.0
        %966 = vmatpush1.msra.mxu0 0.0
        %967 = vmatprep.subr.mxu0 0.0
        %968 = vmatpush1.msra.mxu0 0.0
        %969 = vmatprep.subr.mxu0 0.0
        %970 = vmatpush1.msra.mxu0 0.0
        %971 = vmatprep.subr.mxu0 0.0
        %972 = vmatpush1.msra.mxu0 0.0
        %973 = vmatprep.subr.mxu0 0.0
        %974 = vmatpush1.msra.mxu0 0.0
        %975 = vmatprep.subr.mxu0 0.0
        %976 = vmatpush1.msra.mxu0 0.0
        %977 = vmatprep.subr.mxu0 0.0
        %978 = vmatpush1.msra.mxu0 0.0
        %979 = vmatprep.subr.mxu0 0.0
        %980 = vmatpush1.msra.mxu0 0.0
        %981 = vmatprep.subr.mxu0 0.0
        %982 = vmatpush1.msra.mxu0 0.0
        %983 = vmatprep.subr.mxu0 0.0
        %984 = vmatpush1.msra.mxu0 0.0
        %985 = vmatprep.subr.mxu0 0.0
        %986 = vmatpush1.msra.mxu0 0.0
        %987 = vmatprep.subr.mxu0 0.0
        %988 = vmatpush1.msra.mxu0 0.0
        %989 = vmatprep.subr.mxu0 0.0
        %990 = vmatpush1.msra.mxu0 0.0
        %991 = vmatprep.subr.mxu0 0.0
        %992 = vmatpush1.msra.mxu0 0.0
        %993 = vmatprep.subr.mxu0 0.0
        %994 = vmatpush1.msra.mxu0 0.0
        %995 = vmatprep.subr.mxu0 0.0
        %996 = vmatpush1.msra.mxu0 0.0
        %997 = vmatprep.subr.mxu0 0.0
        %998 = vmatpush1.msra.mxu0 0.0
        %999 = vmatprep.subr.mxu0 0.0
        %1000 = vmatpush1.msra.mxu0 0.0
        %1001 = vmatprep.mubr.f32.mxu0 0.0
        %1002 = vmatmul.mubr.f32.gmra.mrb[0].mxu0 %v929
        %v1003 = vpop.f32.mrb[0].mxu0
        %v1004 = vadd.f32 0.0, %v1003
        %v1005 = vpop.f32.mrb[0].mxu0
        %v1006 = vadd.f32 0.0, %v1005
        %1007 = vdwg.mxu0
        %1008 = vmatprep.subr.mxu0 0.0
        %1009 = vmatpush1.msra.mxu0 %v935
        %1010 = vmatprep.subr.mxu0 0.0
        %1011 = vmatpush1.msra.mxu0 0.0
        %1012 = vmatprep.subr.mxu0 0.0
        %1013 = vmatpush1.msra.mxu0 0.0
        %1014 = vmatprep.subr.mxu0 0.0
        %1015 = vmatpush1.msra.mxu0 0.0
        %1016 = vmatprep.subr.mxu0 0.0
        %1017 = vmatpush1.msra.mxu0 0.0
        %1018 = vmatprep.subr.mxu0 0.0
        %1019 = vmatpush1.msra.mxu0 0.0
        %1020 = vmatprep.subr.mxu0 0.0
        %1021 = vmatpush1.msra.mxu0 0.0
        %1022 = vmatprep.subr.mxu0 0.0
        %1023 = vmatpush1.msra.mxu0 0.0
        %1024 = vmatprep.subr.mxu0 0.0
        %1025 = vmatpush1.msra.mxu0 0.0
        %1026 = vmatprep.subr.mxu0 0.0
        %1027 = vmatpush1.msra.mxu0 0.0
        %1028 = vmatprep.subr.mxu0 0.0
        %1029 = vmatpush1.msra.mxu0 0.0
        %1030 = vmatprep.subr.mxu0 0.0
        %1031 = vmatpush1.msra.mxu0 0.0
        %1032 = vmatprep.subr.mxu0 0.0
        %1033 = vmatpush1.msra.mxu0 0.0
        %1034 = vmatprep.subr.mxu0 0.0
        %1035 = vmatpush1.msra.mxu0 0.0
        %1036 = vmatprep.subr.mxu0 0.0
        %1037 = vmatpush1.msra.mxu0 0.0
        %1038 = vmatprep.subr.mxu0 0.0
        %1039 = vmatpush1.msra.mxu0 0.0
        %1040 = vmatprep.subr.mxu0 0.0
        %1041 = vmatpush1.msra.mxu0 0.0
        %1042 = vmatprep.subr.mxu0 0.0
        %1043 = vmatpush1.msra.mxu0 0.0
        %1044 = vmatprep.subr.mxu0 0.0
        %1045 = vmatpush1.msra.mxu0 0.0
        %1046 = vmatprep.subr.mxu0 0.0
        %1047 = vmatpush1.msra.mxu0 0.0
        %1048 = vmatprep.subr.mxu0 0.0
        %1049 = vmatpush1.msra.mxu0 0.0
        %1050 = vmatprep.subr.mxu0 0.0
        %1051 = vmatpush1.msra.mxu0 0.0
        %1052 = vmatprep.subr.mxu0 0.0
        %1053 = vmatpush1.msra.mxu0 0.0
        %1054 = vmatprep.subr.mxu0 0.0
        %1055 = vmatpush1.msra.mxu0 0.0
        %1056 = vmatprep.subr.mxu0 0.0
        %1057 = vmatpush1.msra.mxu0 0.0
        %1058 = vmatprep.subr.mxu0 0.0
        %1059 = vmatpush1.msra.mxu0 0.0
        %1060 = vmatprep.subr.mxu0 0.0
        %1061 = vmatpush1.msra.mxu0 0.0
        %1062 = vmatprep.subr.mxu0 0.0
        %1063 = vmatpush1.msra.mxu0 0.0
        %1064 = vmatprep.subr.mxu0 0.0
        %1065 = vmatpush1.msra.mxu0 0.0
        %1066 = vmatprep.subr.mxu0 0.0
        %1067 = vmatpush1.msra.mxu0 0.0
        %1068 = vmatprep.subr.mxu0 0.0
        %1069 = vmatpush1.msra.mxu0 0.0
        %1070 = vmatprep.subr.mxu0 0.0
        %1071 = vmatpush1.msra.mxu0 0.0
        %1072 = vmatprep.mubr.f32.mxu0 0.0
        %1073 = vmatmul.mubr.f32.gmra.mrb[0].mxu0 %v929
        %v1074 = vpop.f32.mrb[0].mxu0
        %v1075 = vadd.f32 0.0, %v1074
        %v1076 = vpop.f32.mrb[0].mxu0
        %1077 = vdwg.mxu0
        %v1078 = vadd.f32 %v923, %v1004
        %v1079 = vadd.f32 %v924, %v1006
        %v1080 = vadd.f32 %v925, %v1075
        %1081 = vrot.lane.b32.xlu0 %v250, 127
        %v1082 = vpop.permute.xlu0 %1081
        %1083 = vrot.lane.b32.xlu0 %v255, 127
        %v1084 = vpop.permute.xlu0 %1083
        %1085 = vrot.lane.b32.xlu0 %v251, 127
        %v1086 = vpop.permute.xlu0 %1085
        %vm1087 = vcmp.lt.s32.totalorder %v264, 127
        %v1088 = vsel %vm1087, %v1084, %v1086
        %v1089 = vsel %vm1087, %v1082, %v1084
        %v1090 = vsel %vm1087, %v1086, %v1082
        %s1091 = scalar_lea.vmem %s1, 20
        %v1092 = vld [vmem:[%s1091] sm:$0xf]
        %v1094 = vsel %vm282, %v1092, 0
        %v1097 = vsel %vm286, %v1089, 0
        %v1100 = vsel %vm286, %v1088, 0
        %v1103 = vsel %vm286, %v1090, 0
        %1105 = vmatprep.subr.mxu0 %v1100
        %1106 = vmatpush1.msra.mxu0 %v1097
        %1107 = vmatprep.subr.mxu0 0.0
        %1108 = vmatpush1.msra.mxu0 0.0
        %1109 = vmatprep.subr.mxu0 0.0
        %1110 = vmatpush1.msra.mxu0 0.0
        %1111 = vmatprep.subr.mxu0 0.0
        %1112 = vmatpush1.msra.mxu0 0.0
        %1113 = vmatprep.subr.mxu0 0.0
        %1114 = vmatpush1.msra.mxu0 0.0
        %1115 = vmatprep.subr.mxu0 0.0
        %1116 = vmatpush1.msra.mxu0 0.0
        %1117 = vmatprep.subr.mxu0 0.0
        %1118 = vmatpush1.msra.mxu0 0.0
        %1119 = vmatprep.subr.mxu0 0.0
        %1120 = vmatpush1.msra.mxu0 0.0
        %1121 = vmatprep.subr.mxu0 0.0
        %1122 = vmatpush1.msra.mxu0 0.0
        %1123 = vmatprep.subr.mxu0 0.0
        %1124 = vmatpush1.msra.mxu0 0.0
        %1125 = vmatprep.subr.mxu0 0.0
        %1126 = vmatpush1.msra.mxu0 0.0
        %1127 = vmatprep.subr.mxu0 0.0
        %1128 = vmatpush1.msra.mxu0 0.0
        %1129 = vmatprep.subr.mxu0 0.0
        %1130 = vmatpush1.msra.mxu0 0.0
        %1131 = vmatprep.subr.mxu0 0.0
        %1132 = vmatpush1.msra.mxu0 0.0
        %1133 = vmatprep.subr.mxu0 0.0
        %1134 = vmatpush1.msra.mxu0 0.0
        %1135 = vmatprep.subr.mxu0 0.0
        %1136 = vmatpush1.msra.mxu0 0.0
        %1137 = vmatprep.subr.mxu0 0.0
        %1138 = vmatpush1.msra.mxu0 0.0
        %1139 = vmatprep.subr.mxu0 0.0
        %1140 = vmatpush1.msra.mxu0 0.0
        %1141 = vmatprep.subr.mxu0 0.0
        %1142 = vmatpush1.msra.mxu0 0.0
        %1143 = vmatprep.subr.mxu0 0.0
        %1144 = vmatpush1.msra.mxu0 0.0
        %1145 = vmatprep.subr.mxu0 0.0
        %1146 = vmatpush1.msra.mxu0 0.0
        %1147 = vmatprep.subr.mxu0 0.0
        %1148 = vmatpush1.msra.mxu0 0.0
        %1149 = vmatprep.subr.mxu0 0.0
        %1150 = vmatpush1.msra.mxu0 0.0
        %1151 = vmatprep.subr.mxu0 0.0
        %1152 = vmatpush1.msra.mxu0 0.0
        %1153 = vmatprep.subr.mxu0 0.0
        %1154 = vmatpush1.msra.mxu0 0.0
        %1155 = vmatprep.subr.mxu0 0.0
        %1156 = vmatpush1.msra.mxu0 0.0
        %1157 = vmatprep.subr.mxu0 0.0
        %1158 = vmatpush1.msra.mxu0 0.0
        %1159 = vmatprep.subr.mxu0 0.0
        %1160 = vmatpush1.msra.mxu0 0.0
        %1161 = vmatprep.subr.mxu0 0.0
        %1162 = vmatpush1.msra.mxu0 0.0
        %1163 = vmatprep.subr.mxu0 0.0
        %1164 = vmatpush1.msra.mxu0 0.0
        %1165 = vmatprep.subr.mxu0 0.0
        %1166 = vmatpush1.msra.mxu0 0.0
        %1167 = vmatprep.subr.mxu0 0.0
        %1168 = vmatpush1.msra.mxu0 0.0
        %1169 = vmatprep.mubr.f32.mxu0 0.0
        %1170 = vmatmul.mubr.f32.gmra.mrb[0].mxu0 %v1094
        %v1171 = vpop.f32.mrb[0].mxu0
        %v1172 = vadd.f32 0.0, %v1171
        %v1173 = vpop.f32.mrb[0].mxu0
        %v1174 = vadd.f32 0.0, %v1173
        %1175 = vdwg.mxu0
        %1176 = vmatprep.subr.mxu0 0.0
        %1177 = vmatpush1.msra.mxu0 %v1103
        %1178 = vmatprep.subr.mxu0 0.0
        %1179 = vmatpush1.msra.mxu0 0.0
        %1180 = vmatprep.subr.mxu0 0.0
        %1181 = vmatpush1.msra.mxu0 0.0
        %1182 = vmatprep.subr.mxu0 0.0
        %1183 = vmatpush1.msra.mxu0 0.0
        %1184 = vmatprep.subr.mxu0 0.0
        %1185 = vmatpush1.msra.mxu0 0.0
        %1186 = vmatprep.subr.mxu0 0.0
        %1187 = vmatpush1.msra.mxu0 0.0
        %1188 = vmatprep.subr.mxu0 0.0
        %1189 = vmatpush1.msra.mxu0 0.0
        %1190 = vmatprep.subr.mxu0 0.0
        %1191 = vmatpush1.msra.mxu0 0.0
        %1192 = vmatprep.subr.mxu0 0.0
        %1193 = vmatpush1.msra.mxu0 0.0
        %1194 = vmatprep.subr.mxu0 0.0
        %1195 = vmatpush1.msra.mxu0 0.0
        %1196 = vmatprep.subr.mxu0 0.0
        %1197 = vmatpush1.msra.mxu0 0.0
        %1198 = vmatprep.subr.mxu0 0.0
        %1199 = vmatpush1.msra.mxu0 0.0
        %1200 = vmatprep.subr.mxu0 0.0
        %1201 = vmatpush1.msra.mxu0 0.0
        %1202 = vmatprep.subr.mxu0 0.0
        %1203 = vmatpush1.msra.mxu0 0.0
        %1204 = vmatprep.subr.mxu0 0.0
        %1205 = vmatpush1.msra.mxu0 0.0
        %1206 = vmatprep.subr.mxu0 0.0
        %1207 = vmatpush1.msra.mxu0 0.0
        %1208 = vmatprep.subr.mxu0 0.0
        %1209 = vmatpush1.msra.mxu0 0.0
        %1210 = vmatprep.subr.mxu0 0.0
        %1211 = vmatpush1.msra.mxu0 0.0
        %1212 = vmatprep.subr.mxu0 0.0
        %1213 = vmatpush1.msra.mxu0 0.0
        %1214 = vmatprep.subr.mxu0 0.0
        %1215 = vmatpush1.msra.mxu0 0.0
        %1216 = vmatprep.subr.mxu0 0.0
        %1217 = vmatpush1.msra.mxu0 0.0
        %1218 = vmatprep.subr.mxu0 0.0
        %1219 = vmatpush1.msra.mxu0 0.0
        %1220 = vmatprep.subr.mxu0 0.0
        %1221 = vmatpush1.msra.mxu0 0.0
        %1222 = vmatprep.subr.mxu0 0.0
        %1223 = vmatpush1.msra.mxu0 0.0
        %1224 = vmatprep.subr.mxu0 0.0
        %1225 = vmatpush1.msra.mxu0 0.0
        %1226 = vmatprep.subr.mxu0 0.0
        %1227 = vmatpush1.msra.mxu0 0.0
        %1228 = vmatprep.subr.mxu0 0.0
        %1229 = vmatpush1.msra.mxu0 0.0
        %1230 = vmatprep.subr.mxu0 0.0
        %1231 = vmatpush1.msra.mxu0 0.0
        %1232 = vmatprep.subr.mxu0 0.0
        %1233 = vmatpush1.msra.mxu0 0.0
        %1234 = vmatprep.subr.mxu0 0.0
        %1235 = vmatpush1.msra.mxu0 0.0
        %1236 = vmatprep.subr.mxu0 0.0
        %1237 = vmatpush1.msra.mxu0 0.0
        %1238 = vmatprep.subr.mxu0 0.0
        %1239 = vmatpush1.msra.mxu0 0.0
        %1240 = vmatprep.mubr.f32.mxu0 0.0
        %1241 = vmatmul.mubr.f32.gmra.mrb[0].mxu0 %v1094
        %v1242 = vpop.f32.mrb[0].mxu0
        %v1243 = vadd.f32 0.0, %v1242
        %v1244 = vpop.f32.mrb[0].mxu0
        %1245 = vdwg.mxu0
        %v1246 = vadd.f32 %v1078, %v1172
        %v1247 = vadd.f32 %v1079, %v1174
        %v1248 = vadd.f32 %v1080, %v1243
        %1249 = vrot.lane.b32.xlu0 %v250, 111
        %v1250 = vpop.permute.xlu0 %1249
        %1251 = vrot.lane.b32.xlu0 %v255, 111
        %v1252 = vpop.permute.xlu0 %1251
        %1253 = vrot.lane.b32.xlu0 %v251, 111
        %v1254 = vpop.permute.xlu0 %1253
        %vm1255 = vcmp.lt.s32.totalorder %v264, 111
        %v1256 = vsel %vm1255, %v1252, %v1254
        %v1257 = vsel %vm1255, %v1250, %v1252
        %v1258 = vsel %vm1255, %v1254, %v1250
        %s1259 = scalar_lea.vmem %s1, 24
        %v1260 = vld [vmem:[%s1259] sm:$0xf]
        %v1262 = vsel %vm282, %v1260, 0
        %v1265 = vsel %vm286, %v1257, 0
        %v1268 = vsel %vm286, %v1256, 0
        %v1271 = vsel %vm286, %v1258, 0
        %1273 = vmatprep.subr.mxu0 %v1268
        %1274 = vmatpush1.msra.mxu0 %v1265
        %1275 = vmatprep.subr.mxu0 0.0
        %1276 = vmatpush1.msra.mxu0 0.0
        %1277 = vmatprep.subr.mxu0 0.0
        %1278 = vmatpush1.msra.mxu0 0.0
        %1279 = vmatprep.subr.mxu0 0.0
        %1280 = vmatpush1.msra.mxu0 0.0
        %1281 = vmatprep.subr.mxu0 0.0
        %1282 = vmatpush1.msra.mxu0 0.0
        %1283 = vmatprep.subr.mxu0 0.0
        %1284 = vmatpush1.msra.mxu0 0.0
        %1285 = vmatprep.subr.mxu0 0.0
        %1286 = vmatpush1.msra.mxu0 0.0
        %1287 = vmatprep.subr.mxu0 0.0
        %1288 = vmatpush1.msra.mxu0 0.0
        %1289 = vmatprep.subr.mxu0 0.0
        %1290 = vmatpush1.msra.mxu0 0.0
        %1291 = vmatprep.subr.mxu0 0.0
        %1292 = vmatpush1.msra.mxu0 0.0
        %1293 = vmatprep.subr.mxu0 0.0
        %1294 = vmatpush1.msra.mxu0 0.0
        %1295 = vmatprep.subr.mxu0 0.0
        %1296 = vmatpush1.msra.mxu0 0.0
        %1297 = vmatprep.subr.mxu0 0.0
        %1298 = vmatpush1.msra.mxu0 0.0
        %1299 = vmatprep.subr.mxu0 0.0
        %1300 = vmatpush1.msra.mxu0 0.0
        %1301 = vmatprep.subr.mxu0 0.0
        %1302 = vmatpush1.msra.mxu0 0.0
        %1303 = vmatprep.subr.mxu0 0.0
        %1304 = vmatpush1.msra.mxu0 0.0
        %1305 = vmatprep.subr.mxu0 0.0
        %1306 = vmatpush1.msra.mxu0 0.0
        %1307 = vmatprep.subr.mxu0 0.0
        %1308 = vmatpush1.msra.mxu0 0.0
        %1309 = vmatprep.subr.mxu0 0.0
        %1310 = vmatpush1.msra.mxu0 0.0
        %1311 = vmatprep.subr.mxu0 0.0
        %1312 = vmatpush1.msra.mxu0 0.0
        %1313 = vmatprep.subr.mxu0 0.0
        %1314 = vmatpush1.msra.mxu0 0.0
        %1315 = vmatprep.subr.mxu0 0.0
        %1316 = vmatpush1.msra.mxu0 0.0
        %1317 = vmatprep.subr.mxu0 0.0
        %1318 = vmatpush1.msra.mxu0 0.0
        %1319 = vmatprep.subr.mxu0 0.0
        %1320 = vmatpush1.msra.mxu0 0.0
        %1321 = vmatprep.subr.mxu0 0.0
        %1322 = vmatpush1.msra.mxu0 0.0
        %1323 = vmatprep.subr.mxu0 0.0
        %1324 = vmatpush1.msra.mxu0 0.0
        %1325 = vmatprep.subr.mxu0 0.0
        %1326 = vmatpush1.msra.mxu0 0.0
        %1327 = vmatprep.subr.mxu0 0.0
        %1328 = vmatpush1.msra.mxu0 0.0
        %1329 = vmatprep.subr.mxu0 0.0
        %1330 = vmatpush1.msra.mxu0 0.0
        %1331 = vmatprep.subr.mxu0 0.0
        %1332 = vmatpush1.msra.mxu0 0.0
        %1333 = vmatprep.subr.mxu0 0.0
        %1334 = vmatpush1.msra.mxu0 0.0
        %1335 = vmatprep.subr.mxu0 0.0
        %1336 = vmatpush1.msra.mxu0 0.0
        %1337 = vmatprep.mubr.f32.mxu0 0.0
        %1338 = vmatmul.mubr.f32.gmra.mrb[0].mxu0 %v1262
        %v1339 = vpop.f32.mrb[0].mxu0
        %v1340 = vadd.f32 0.0, %v1339
        %v1341 = vpop.f32.mrb[0].mxu0
        %v1342 = vadd.f32 0.0, %v1341
        %1343 = vdwg.mxu0
        %1344 = vmatprep.subr.mxu0 0.0
        %1345 = vmatpush1.msra.mxu0 %v1271
        %1346 = vmatprep.subr.mxu0 0.0
        %1347 = vmatpush1.msra.mxu0 0.0
        %1348 = vmatprep.subr.mxu0 0.0
        %1349 = vmatpush1.msra.mxu0 0.0
        %1350 = vmatprep.subr.mxu0 0.0
        %1351 = vmatpush1.msra.mxu0 0.0
        %1352 = vmatprep.subr.mxu0 0.0
        %1353 = vmatpush1.msra.mxu0 0.0
        %1354 = vmatprep.subr.mxu0 0.0
        %1355 = vmatpush1.msra.mxu0 0.0
        %1356 = vmatprep.subr.mxu0 0.0
        %1357 = vmatpush1.msra.mxu0 0.0
        %1358 = vmatprep.subr.mxu0 0.0
        %1359 = vmatpush1.msra.mxu0 0.0
        %1360 = vmatprep.subr.mxu0 0.0
        %1361 = vmatpush1.msra.mxu0 0.0
        %1362 = vmatprep.subr.mxu0 0.0
        %1363 = vmatpush1.msra.mxu0 0.0
        %1364 = vmatprep.subr.mxu0 0.0
        %1365 = vmatpush1.msra.mxu0 0.0
        %1366 = vmatprep.subr.mxu0 0.0
        %1367 = vmatpush1.msra.mxu0 0.0
        %1368 = vmatprep.subr.mxu0 0.0
        %1369 = vmatpush1.msra.mxu0 0.0
        %1370 = vmatprep.subr.mxu0 0.0
        %1371 = vmatpush1.msra.mxu0 0.0
        %1372 = vmatprep.subr.mxu0 0.0
        %1373 = vmatpush1.msra.mxu0 0.0
        %1374 = vmatprep.subr.mxu0 0.0
        %1375 = vmatpush1.msra.mxu0 0.0
        %1376 = vmatprep.subr.mxu0 0.0
        %1377 = vmatpush1.msra.mxu0 0.0
        %1378 = vmatprep.subr.mxu0 0.0
        %1379 = vmatpush1.msra.mxu0 0.0
        %1380 = vmatprep.subr.mxu0 0.0
        %1381 = vmatpush1.msra.mxu0 0.0
        %1382 = vmatprep.subr.mxu0 0.0
        %1383 = vmatpush1.msra.mxu0 0.0
        %1384 = vmatprep.subr.mxu0 0.0
        %1385 = vmatpush1.msra.mxu0 0.0
        %1386 = vmatprep.subr.mxu0 0.0
        %1387 = vmatpush1.msra.mxu0 0.0
        %1388 = vmatprep.subr.mxu0 0.0
        %1389 = vmatpush1.msra.mxu0 0.0
        %1390 = vmatprep.subr.mxu0 0.0
        %1391 = vmatpush1.msra.mxu0 0.0
        %1392 = vmatprep.subr.mxu0 0.0
        %1393 = vmatpush1.msra.mxu0 0.0
        %1394 = vmatprep.subr.mxu0 0.0
        %1395 = vmatpush1.msra.mxu0 0.0
        %1396 = vmatprep.subr.mxu0 0.0
        %1397 = vmatpush1.msra.mxu0 0.0
        %1398 = vmatprep.subr.mxu0 0.0
        %1399 = vmatpush1.msra.mxu0 0.0
        %1400 = vmatprep.subr.mxu0 0.0
        %1401 = vmatpush1.msra.mxu0 0.0
        %1402 = vmatprep.subr.mxu0 0.0
        %1403 = vmatpush1.msra.mxu0 0.0
        %1404 = vmatprep.subr.mxu0 0.0
        %1405 = vmatpush1.msra.mxu0 0.0
        %1406 = vmatprep.subr.mxu0 0.0
        %1407 = vmatpush1.msra.mxu0 0.0
        %1408 = vmatprep.mubr.f32.mxu0 0.0
        %1409 = vmatmul.mubr.f32.gmra.mrb[0].mxu0 %v1262
        %v1410 = vpop.f32.mrb[0].mxu0
        %v1411 = vadd.f32 0.0, %v1410
        %v1412 = vpop.f32.mrb[0].mxu0
        %1413 = vdwg.mxu0
        %v1414 = vadd.f32 %v1246, %v1340
        %v1415 = vadd.f32 %v1247, %v1342
        %v1416 = vadd.f32 %v1248, %v1411
        %1417 = vrot.lane.b32.xlu0 %v250, 110
        %v1418 = vpop.permute.xlu0 %1417
        %1419 = vrot.lane.b32.xlu0 %v255, 110
        %v1420 = vpop.permute.xlu0 %1419
        %1421 = vrot.lane.b32.xlu0 %v251, 110
        %v1422 = vpop.permute.xlu0 %1421
        %vm1423 = vcmp.lt.s32.totalorder %v264, 110
        %v1424 = vsel %vm1423, %v1420, %v1422
        %v1425 = vsel %vm1423, %v1418, %v1420
        %v1426 = vsel %vm1423, %v1422, %v1418
        %s1427 = scalar_lea.vmem %s1, 28
        %v1428 = vld [vmem:[%s1427] sm:$0xf]
        %v1430 = vsel %vm282, %v1428, 0
        %v1433 = vsel %vm286, %v1425, 0
        %v1436 = vsel %vm286, %v1424, 0
        %v1439 = vsel %vm286, %v1426, 0
        %1441 = vmatprep.subr.mxu0 %v1436
        %1442 = vmatpush1.msra.mxu0 %v1433
        %1443 = vmatprep.subr.mxu0 0.0
        %1444 = vmatpush1.msra.mxu0 0.0
        %1445 = vmatprep.subr.mxu0 0.0
        %1446 = vmatpush1.msra.mxu0 0.0
        %1447 = vmatprep.subr.mxu0 0.0
        %1448 = vmatpush1.msra.mxu0 0.0
        %1449 = vmatprep.subr.mxu0 0.0
        %1450 = vmatpush1.msra.mxu0 0.0
        %1451 = vmatprep.subr.mxu0 0.0
        %1452 = vmatpush1.msra.mxu0 0.0
        %1453 = vmatprep.subr.mxu0 0.0
        %1454 = vmatpush1.msra.mxu0 0.0
        %1455 = vmatprep.subr.mxu0 0.0
        %1456 = vmatpush1.msra.mxu0 0.0
        %1457 = vmatprep.subr.mxu0 0.0
        %1458 = vmatpush1.msra.mxu0 0.0
        %1459 = vmatprep.subr.mxu0 0.0
        %1460 = vmatpush1.msra.mxu0 0.0
        %1461 = vmatprep.subr.mxu0 0.0
        %1462 = vmatpush1.msra.mxu0 0.0
        %1463 = vmatprep.subr.mxu0 0.0
        %1464 = vmatpush1.msra.mxu0 0.0
        %1465 = vmatprep.subr.mxu0 0.0
        %1466 = vmatpush1.msra.mxu0 0.0
        %1467 = vmatprep.subr.mxu0 0.0
        %1468 = vmatpush1.msra.mxu0 0.0
        %1469 = vmatprep.subr.mxu0 0.0
        %1470 = vmatpush1.msra.mxu0 0.0
        %1471 = vmatprep.subr.mxu0 0.0
        %1472 = vmatpush1.msra.mxu0 0.0
        %1473 = vmatprep.subr.mxu0 0.0
        %1474 = vmatpush1.msra.mxu0 0.0
        %1475 = vmatprep.subr.mxu0 0.0
        %1476 = vmatpush1.msra.mxu0 0.0
        %1477 = vmatprep.subr.mxu0 0.0
        %1478 = vmatpush1.msra.mxu0 0.0
        %1479 = vmatprep.subr.mxu0 0.0
        %1480 = vmatpush1.msra.mxu0 0.0
        %1481 = vmatprep.subr.mxu0 0.0
        %1482 = vmatpush1.msra.mxu0 0.0
        %1483 = vmatprep.subr.mxu0 0.0
        %1484 = vmatpush1.msra.mxu0 0.0
        %1485 = vmatprep.subr.mxu0 0.0
        %1486 = vmatpush1.msra.mxu0 0.0
        %1487 = vmatprep.subr.mxu0 0.0
        %1488 = vmatpush1.msra.mxu0 0.0
        %1489 = vmatprep.subr.mxu0 0.0
        %1490 = vmatpush1.msra.mxu0 0.0
        %1491 = vmatprep.subr.mxu0 0.0
        %1492 = vmatpush1.msra.mxu0 0.0
        %1493 = vmatprep.subr.mxu0 0.0
        %1494 = vmatpush1.msra.mxu0 0.0
        %1495 = vmatprep.subr.mxu0 0.0
        %1496 = vmatpush1.msra.mxu0 0.0
        %1497 = vmatprep.subr.mxu0 0.0
        %1498 = vmatpush1.msra.mxu0 0.0
        %1499 = vmatprep.subr.mxu0 0.0
        %1500 = vmatpush1.msra.mxu0 0.0
        %1501 = vmatprep.subr.mxu0 0.0
        %1502 = vmatpush1.msra.mxu0 0.0
        %1503 = vmatprep.subr.mxu0 0.0
        %1504 = vmatpush1.msra.mxu0 0.0
        %1505 = vmatprep.mubr.f32.mxu0 0.0
        %1506 = vmatmul.mubr.f32.gmra.mrb[0].mxu0 %v1430
        %v1507 = vpop.f32.mrb[0].mxu0
        %v1508 = vadd.f32 0.0, %v1507
        %v1509 = vpop.f32.mrb[0].mxu0
        %v1510 = vadd.f32 0.0, %v1509
        %1511 = vdwg.mxu0
        %1512 = vmatprep.subr.mxu0 0.0
        %1513 = vmatpush1.msra.mxu0 %v1439
        %1514 = vmatprep.subr.mxu0 0.0
        %1515 = vmatpush1.msra.mxu0 0.0
        %1516 = vmatprep.subr.mxu0 0.0
        %1517 = vmatpush1.msra.mxu0 0.0
        %1518 = vmatprep.subr.mxu0 0.0
        %1519 = vmatpush1.msra.mxu0 0.0
        %1520 = vmatprep.subr.mxu0 0.0
        %1521 = vmatpush1.msra.mxu0 0.0
        %1522 = vmatprep.subr.mxu0 0.0
        %1523 = vmatpush1.msra.mxu0 0.0
        %1524 = vmatprep.subr.mxu0 0.0
        %1525 = vmatpush1.msra.mxu0 0.0
        %1526 = vmatprep.subr.mxu0 0.0
        %1527 = vmatpush1.msra.mxu0 0.0
        %1528 = vmatprep.subr.mxu0 0.0
        %1529 = vmatpush1.msra.mxu0 0.0
        %1530 = vmatprep.subr.mxu0 0.0
        %1531 = vmatpush1.msra.mxu0 0.0
        %1532 = vmatprep.subr.mxu0 0.0
        %1533 = vmatpush1.msra.mxu0 0.0
        %1534 = vmatprep.subr.mxu0 0.0
        %1535 = vmatpush1.msra.mxu0 0.0
        %1536 = vmatprep.subr.mxu0 0.0
        %1537 = vmatpush1.msra.mxu0 0.0
        %1538 = vmatprep.subr.mxu0 0.0
        %1539 = vmatpush1.msra.mxu0 0.0
        %1540 = vmatprep.subr.mxu0 0.0
        %1541 = vmatpush1.msra.mxu0 0.0
        %1542 = vmatprep.subr.mxu0 0.0
        %1543 = vmatpush1.msra.mxu0 0.0
        %1544 = vmatprep.subr.mxu0 0.0
        %1545 = vmatpush1.msra.mxu0 0.0
        %1546 = vmatprep.subr.mxu0 0.0
        %1547 = vmatpush1.msra.mxu0 0.0
        %1548 = vmatprep.subr.mxu0 0.0
        %1549 = vmatpush1.msra.mxu0 0.0
        %1550 = vmatprep.subr.mxu0 0.0
        %1551 = vmatpush1.msra.mxu0 0.0
        %1552 = vmatprep.subr.mxu0 0.0
        %1553 = vmatpush1.msra.mxu0 0.0
        %1554 = vmatprep.subr.mxu0 0.0
        %1555 = vmatpush1.msra.mxu0 0.0
        %1556 = vmatprep.subr.mxu0 0.0
        %1557 = vmatpush1.msra.mxu0 0.0
        %1558 = vmatprep.subr.mxu0 0.0
        %1559 = vmatpush1.msra.mxu0 0.0
        %1560 = vmatprep.subr.mxu0 0.0
        %1561 = vmatpush1.msra.mxu0 0.0
        %1562 = vmatprep.subr.mxu0 0.0
        %1563 = vmatpush1.msra.mxu0 0.0
        %1564 = vmatprep.subr.mxu0 0.0
        %1565 = vmatpush1.msra.mxu0 0.0
        %1566 = vmatprep.subr.mxu0 0.0
        %1567 = vmatpush1.msra.mxu0 0.0
        %1568 = vmatprep.subr.mxu0 0.0
        %1569 = vmatpush1.msra.mxu0 0.0
        %1570 = vmatprep.subr.mxu0 0.0
        %1571 = vmatpush1.msra.mxu0 0.0
        %1572 = vmatprep.subr.mxu0 0.0
        %1573 = vmatpush1.msra.mxu0 0.0
        %1574 = vmatprep.subr.mxu0 0.0
        %1575 = vmatpush1.msra.mxu0 0.0
        %1576 = vmatprep.mubr.f32.mxu0 0.0
        %1577 = vmatmul.mubr.f32.gmra.mrb[0].mxu0 %v1430
        %v1578 = vpop.f32.mrb[0].mxu0
        %v1579 = vadd.f32 0.0, %v1578
        %v1580 = vpop.f32.mrb[0].mxu0
        %1581 = vdwg.mxu0
        %v1582 = vadd.f32 %v1414, %v1508
        %v1583 = vadd.f32 %v1415, %v1510
        %v1584 = vadd.f32 %v1416, %v1579
        %1585 = vrot.lane.b32.xlu0 %v250, 109
        %v1586 = vpop.permute.xlu0 %1585
        %1587 = vrot.lane.b32.xlu0 %v255, 109
        %v1588 = vpop.permute.xlu0 %1587
        %1589 = vrot.lane.b32.xlu0 %v251, 109
        %v1590 = vpop.permute.xlu0 %1589
        %vm1591 = vcmp.lt.s32.totalorder %v264, 109
        %v1592 = vsel %vm1591, %v1588, %v1590
        %v1593 = vsel %vm1591, %v1586, %v1588
        %v1594 = vsel %vm1591, %v1590, %v1586
        %s1595 = scalar_lea.vmem %s1, 32
        %v1596 = vld [vmem:[%s1595] sm:$0xf]
        %v1598 = vsel %vm282, %v1596, 0
        %v1601 = vsel %vm286, %v1593, 0
        %v1604 = vsel %vm286, %v1592, 0
        %v1607 = vsel %vm286, %v1594, 0
        %1609 = vmatprep.subr.mxu0 %v1604
        %1610 = vmatpush1.msra.mxu0 %v1601
        %1611 = vmatprep.subr.mxu0 0.0
        %1612 = vmatpush1.msra.mxu0 0.0
        %1613 = vmatprep.subr.mxu0 0.0
        %1614 = vmatpush1.msra.mxu0 0.0
        %1615 = vmatprep.subr.mxu0 0.0
        %1616 = vmatpush1.msra.mxu0 0.0
        %1617 = vmatprep.subr.mxu0 0.0
        %1618 = vmatpush1.msra.mxu0 0.0
        %1619 = vmatprep.subr.mxu0 0.0
        %1620 = vmatpush1.msra.mxu0 0.0
        %1621 = vmatprep.subr.mxu0 0.0
        %1622 = vmatpush1.msra.mxu0 0.0
        %1623 = vmatprep.subr.mxu0 0.0
        %1624 = vmatpush1.msra.mxu0 0.0
        %1625 = vmatprep.subr.mxu0 0.0
        %1626 = vmatpush1.msra.mxu0 0.0
        %1627 = vmatprep.subr.mxu0 0.0
        %1628 = vmatpush1.msra.mxu0 0.0
        %1629 = vmatprep.subr.mxu0 0.0
        %1630 = vmatpush1.msra.mxu0 0.0
        %1631 = vmatprep.subr.mxu0 0.0
        %1632 = vmatpush1.msra.mxu0 0.0
        %1633 = vmatprep.subr.mxu0 0.0
        %1634 = vmatpush1.msra.mxu0 0.0
        %1635 = vmatprep.subr.mxu0 0.0
        %1636 = vmatpush1.msra.mxu0 0.0
        %1637 = vmatprep.subr.mxu0 0.0
        %1638 = vmatpush1.msra.mxu0 0.0
        %1639 = vmatprep.subr.mxu0 0.0
        %1640 = vmatpush1.msra.mxu0 0.0
        %1641 = vmatprep.subr.mxu0 0.0
        %1642 = vmatpush1.msra.mxu0 0.0
        %1643 = vmatprep.subr.mxu0 0.0
        %1644 = vmatpush1.msra.mxu0 0.0
        %1645 = vmatprep.subr.mxu0 0.0
        %1646 = vmatpush1.msra.mxu0 0.0
        %1647 = vmatprep.subr.mxu0 0.0
        %1648 = vmatpush1.msra.mxu0 0.0
        %1649 = vmatprep.subr.mxu0 0.0
        %1650 = vmatpush1.msra.mxu0 0.0
        %1651 = vmatprep.subr.mxu0 0.0
        %1652 = vmatpush1.msra.mxu0 0.0
        %1653 = vmatprep.subr.mxu0 0.0
        %1654 = vmatpush1.msra.mxu0 0.0
        %1655 = vmatprep.subr.mxu0 0.0
        %1656 = vmatpush1.msra.mxu0 0.0
        %1657 = vmatprep.subr.mxu0 0.0
        %1658 = vmatpush1.msra.mxu0 0.0
        %1659 = vmatprep.subr.mxu0 0.0
        %1660 = vmatpush1.msra.mxu0 0.0
        %1661 = vmatprep.subr.mxu0 0.0
        %1662 = vmatpush1.msra.mxu0 0.0
        %1663 = vmatprep.subr.mxu0 0.0
        %1664 = vmatpush1.msra.mxu0 0.0
        %1665 = vmatprep.subr.mxu0 0.0
        %1666 = vmatpush1.msra.mxu0 0.0
        %1667 = vmatprep.subr.mxu0 0.0
        %1668 = vmatpush1.msra.mxu0 0.0
        %1669 = vmatprep.subr.mxu0 0.0
        %1670 = vmatpush1.msra.mxu0 0.0
        %1671 = vmatprep.subr.mxu0 0.0
        %1672 = vmatpush1.msra.mxu0 0.0
        %1673 = vmatprep.mubr.f32.mxu0 0.0
        %1674 = vmatmul.mubr.f32.gmra.mrb[0].mxu0 %v1598
        %v1675 = vpop.f32.mrb[0].mxu0
        %v1676 = vadd.f32 0.0, %v1675
        %v1677 = vpop.f32.mrb[0].mxu0
        %v1678 = vadd.f32 0.0, %v1677
        %1679 = vdwg.mxu0
        %1680 = vmatprep.subr.mxu0 0.0
        %1681 = vmatpush1.msra.mxu0 %v1607
        %1682 = vmatprep.subr.mxu0 0.0
        %1683 = vmatpush1.msra.mxu0 0.0
        %1684 = vmatprep.subr.mxu0 0.0
        %1685 = vmatpush1.msra.mxu0 0.0
        %1686 = vmatprep.subr.mxu0 0.0
        %1687 = vmatpush1.msra.mxu0 0.0
        %1688 = vmatprep.subr.mxu0 0.0
        %1689 = vmatpush1.msra.mxu0 0.0
        %1690 = vmatprep.subr.mxu0 0.0
        %1691 = vmatpush1.msra.mxu0 0.0
        %1692 = vmatprep.subr.mxu0 0.0
        %1693 = vmatpush1.msra.mxu0 0.0
        %1694 = vmatprep.subr.mxu0 0.0
        %1695 = vmatpush1.msra.mxu0 0.0
        %1696 = vmatprep.subr.mxu0 0.0
        %1697 = vmatpush1.msra.mxu0 0.0
        %1698 = vmatprep.subr.mxu0 0.0
        %1699 = vmatpush1.msra.mxu0 0.0
        %1700 = vmatprep.subr.mxu0 0.0
        %1701 = vmatpush1.msra.mxu0 0.0
        %1702 = vmatprep.subr.mxu0 0.0
        %1703 = vmatpush1.msra.mxu0 0.0
        %1704 = vmatprep.subr.mxu0 0.0
        %1705 = vmatpush1.msra.mxu0 0.0
        %1706 = vmatprep.subr.mxu0 0.0
        %1707 = vmatpush1.msra.mxu0 0.0
        %1708 = vmatprep.subr.mxu0 0.0
        %1709 = vmatpush1.msra.mxu0 0.0
        %1710 = vmatprep.subr.mxu0 0.0
        %1711 = vmatpush1.msra.mxu0 0.0
        %1712 = vmatprep.subr.mxu0 0.0
        %1713 = vmatpush1.msra.mxu0 0.0
        %1714 = vmatprep.subr.mxu0 0.0
        %1715 = vmatpush1.msra.mxu0 0.0
        %1716 = vmatprep.subr.mxu0 0.0
        %1717 = vmatpush1.msra.mxu0 0.0
        %1718 = vmatprep.subr.mxu0 0.0
        %1719 = vmatpush1.msra.mxu0 0.0
        %1720 = vmatprep.subr.mxu0 0.0
        %1721 = vmatpush1.msra.mxu0 0.0
        %1722 = vmatprep.subr.mxu0 0.0
        %1723 = vmatpush1.msra.mxu0 0.0
        %1724 = vmatprep.subr.mxu0 0.0
        %1725 = vmatpush1.msra.mxu0 0.0
        %1726 = vmatprep.subr.mxu0 0.0
        %1727 = vmatpush1.msra.mxu0 0.0
        %1728 = vmatprep.subr.mxu0 0.0
        %1729 = vmatpush1.msra.mxu0 0.0
        %1730 = vmatprep.subr.mxu0 0.0
        %1731 = vmatpush1.msra.mxu0 0.0
        %1732 = vmatprep.subr.mxu0 0.0
        %1733 = vmatpush1.msra.mxu0 0.0
        %1734 = vmatprep.subr.mxu0 0.0
        %1735 = vmatpush1.msra.mxu0 0.0
        %1736 = vmatprep.subr.mxu0 0.0
        %1737 = vmatpush1.msra.mxu0 0.0
        %1738 = vmatprep.subr.mxu0 0.0
        %1739 = vmatpush1.msra.mxu0 0.0
        %1740 = vmatprep.subr.mxu0 0.0
        %1741 = vmatpush1.msra.mxu0 0.0
        %1742 = vmatprep.subr.mxu0 0.0
        %1743 = vmatpush1.msra.mxu0 0.0
        %1744 = vmatprep.mubr.f32.mxu0 0.0
        %1745 = vmatmul.mubr.f32.gmra.mrb[0].mxu0 %v1598
        %v1746 = vpop.f32.mrb[0].mxu0
        %v1747 = vadd.f32 0.0, %v1746
        %v1748 = vpop.f32.mrb[0].mxu0
        %1749 = vdwg.mxu0
        %v1750 = vadd.f32 %v1582, %v1676
        %v1751 = vadd.f32 %v1583, %v1678
        %v1752 = vadd.f32 %v1584, %v1747
        %v1753 = vld [vmem:[%s2] sm:$0xf]
        %1755 = vset.pattern.permute.xlu0 0
        %1756 = vperm.xlu0 %1755, %v1753
        %v1757 = vpop.permute.xlu0 %1756
        %v1759 = vadd.f32 %v1750, %v1757
        %v1760 = vadd.f32 %v1751, %v1757
        %v1761 = vadd.f32 %v1752, %v1757
        %v1762 = vmax.f32 %v1759, 0.0
        %v1763 = vmax.f32 %v1760, 0.0
        %v1764 = vmax.f32 %v1761, 0.0
        %v1766 = vlaneseq
        %v1767 = vshrl.u32 %v1766, 7
        %v1768 = vsub.s32 0, %v1767
        %v1769 = vrot.slane %v252, %v1768
        %v1770 = vlaneseq
        %v1771 = vshrl.u32 %v1770, 7
        %v1772 = vsub.s32 1, %v1771
        %v1773 = vrot.slane %v252, %v1772
        %v1774 = vlaneseq
        %v1775 = vshrl.u32 %v1774, 7
        %v1776 = vsub.s32 2, %v1775
        %v1777 = vrot.slane %v252, %v1776
        %v1781 = vmul.f32 %v1762, %v1769
        %v1782 = vmul.f32 %v1763, %v1773
        %v1783 = vmul.f32 %v1764, %v1777
        %1784 = vrot.lane.b32.xlu0 %v1781, 19
        %v1785 = vpop.permute.xlu0 %1784
        %1786 = vrot.lane.b32.xlu0 %v1782, 19
        %v1787 = vpop.permute.xlu0 %1786
        %1788 = vrot.lane.b32.xlu0 %v1783, 19
        %v1789 = vpop.permute.xlu0 %1788
        %v1790 = vsel %vm265, %v1787, %v1789
        %v1791 = vsel %vm265, %v1785, %v1787
        %v1792 = vsel %vm265, %v1789, %v1785
        %v1793 = vld [vmem:[%s3] sm:$0xf]
        %1794 = vrot.lane.b32.xlu0 %v1781, 18
        %v1795 = vpop.permute.xlu0 %1794
        %1796 = vrot.lane.b32.xlu0 %v1782, 18
        %v1797 = vpop.permute.xlu0 %1796
        %1798 = vrot.lane.b32.xlu0 %v1783, 18
        %v1799 = vpop.permute.xlu0 %1798
        %v1800 = vsel %vm276, %v1797, %v1799
        %v1801 = vsel %vm276, %v1795, %v1797
        %v1802 = vsel %vm276, %v1799, %v1795
        %s1803 = scalar_lea.vmem %s3, 4
        %v1804 = vld [vmem:[%s1803] sm:$0xf]
        %v1806 = vsel %vm282, %v1804, 0
        %v1809 = vsel %vm286, %v1802, 0
        %v1812 = vsel %vm286, %v1801, 0
        %v1815 = vsel %vm286, %v1800, 0
        %1817 = vmatprep.subr.mxu0 %v1812
        %1818 = vmatpush1.msra.mxu0 %v1809
        %1819 = vmatprep.subr.mxu0 0.0
        %1820 = vmatpush1.msra.mxu0 0.0
        %1821 = vmatprep.subr.mxu0 0.0
        %1822 = vmatpush1.msra.mxu0 0.0
        %1823 = vmatprep.subr.mxu0 0.0
        %1824 = vmatpush1.msra.mxu0 0.0
        %1825 = vmatprep.subr.mxu0 0.0
        %1826 = vmatpush1.msra.mxu0 0.0
        %1827 = vmatprep.subr.mxu0 0.0
        %1828 = vmatpush1.msra.mxu0 0.0
        %1829 = vmatprep.subr.mxu0 0.0
        %1830 = vmatpush1.msra.mxu0 0.0
        %1831 = vmatprep.subr.mxu0 0.0
        %1832 = vmatpush1.msra.mxu0 0.0
        %1833 = vmatprep.subr.mxu0 0.0
        %1834 = vmatpush1.msra.mxu0 0.0
        %1835 = vmatprep.subr.mxu0 0.0
        %1836 = vmatpush1.msra.mxu0 0.0
        %1837 = vmatprep.subr.mxu0 0.0
        %1838 = vmatpush1.msra.mxu0 0.0
        %1839 = vmatprep.subr.mxu0 0.0
        %1840 = vmatpush1.msra.mxu0 0.0
        %1841 = vmatprep.subr.mxu0 0.0
        %1842 = vmatpush1.msra.mxu0 0.0
        %1843 = vmatprep.subr.mxu0 0.0
        %1844 = vmatpush1.msra.mxu0 0.0
        %1845 = vmatprep.subr.mxu0 0.0
        %1846 = vmatpush1.msra.mxu0 0.0
        %1847 = vmatprep.subr.mxu0 0.0
        %1848 = vmatpush1.msra.mxu0 0.0
        %1849 = vmatprep.subr.mxu0 0.0
        %1850 = vmatpush1.msra.mxu0 0.0
        %1851 = vmatprep.subr.mxu0 0.0
        %1852 = vmatpush1.msra.mxu0 0.0
        %1853 = vmatprep.subr.mxu0 0.0
        %1854 = vmatpush1.msra.mxu0 0.0
        %1855 = vmatprep.subr.mxu0 0.0
        %1856 = vmatpush1.msra.mxu0 0.0
        %1857 = vmatprep.subr.mxu0 0.0
        %1858 = vmatpush1.msra.mxu0 0.0
        %1859 = vmatprep.subr.mxu0 0.0
        %1860 = vmatpush1.msra.mxu0 0.0
        %1861 = vmatprep.subr.mxu0 0.0
        %1862 = vmatpush1.msra.mxu0 0.0
        %1863 = vmatprep.subr.mxu0 0.0
        %1864 = vmatpush1.msra.mxu0 0.0
        %1865 = vmatprep.subr.mxu0 0.0
        %1866 = vmatpush1.msra.mxu0 0.0
        %1867 = vmatprep.subr.mxu0 0.0
        %1868 = vmatpush1.msra.mxu0 0.0
        %1869 = vmatprep.subr.mxu0 0.0
        %1870 = vmatpush1.msra.mxu0 0.0
        %1871 = vmatprep.subr.mxu0 0.0
        %1872 = vmatpush1.msra.mxu0 0.0
        %1873 = vmatprep.subr.mxu0 0.0
        %1874 = vmatpush1.msra.mxu0 0.0
        %1875 = vmatprep.subr.mxu0 0.0
        %1876 = vmatpush1.msra.mxu0 0.0
        %1877 = vmatprep.subr.mxu0 0.0
        %1878 = vmatpush1.msra.mxu0 0.0
        %1879 = vmatprep.subr.mxu0 0.0
        %1880 = vmatpush1.msra.mxu0 0.0
        %1881 = vmatprep.mubr.f32.mxu0 0.0
        %1882 = vmatmul.mubr.f32.gmra.mrb[0].mxu0 %v1806
        %v1883 = vpop.f32.mrb[0].mxu0
        %v1884 = vadd.f32 0.0, %v1883
        %v1885 = vpop.f32.mrb[0].mxu0
        %v1886 = vadd.f32 0.0, %v1885
        %1887 = vdwg.mxu0
        %1888 = vmatprep.subr.mxu0 0.0
        %1889 = vmatpush1.msra.mxu0 %v1815
        %1890 = vmatprep.subr.mxu0 0.0
        %1891 = vmatpush1.msra.mxu0 0.0
        %1892 = vmatprep.subr.mxu0 0.0
        %1893 = vmatpush1.msra.mxu0 0.0
        %1894 = vmatprep.subr.mxu0 0.0
        %1895 = vmatpush1.msra.mxu0 0.0
        %1896 = vmatprep.subr.mxu0 0.0
        %1897 = vmatpush1.msra.mxu0 0.0
        %1898 = vmatprep.subr.mxu0 0.0
        %1899 = vmatpush1.msra.mxu0 0.0
        %1900 = vmatprep.subr.mxu0 0.0
        %1901 = vmatpush1.msra.mxu0 0.0
        %1902 = vmatprep.subr.mxu0 0.0
        %1903 = vmatpush1.msra.mxu0 0.0
        %1904 = vmatprep.subr.mxu0 0.0
        %1905 = vmatpush1.msra.mxu0 0.0
        %1906 = vmatprep.subr.mxu0 0.0
        %1907 = vmatpush1.msra.mxu0 0.0
        %1908 = vmatprep.subr.mxu0 0.0
        %1909 = vmatpush1.msra.mxu0 0.0
        %1910 = vmatprep.subr.mxu0 0.0
        %1911 = vmatpush1.msra.mxu0 0.0
        %1912 = vmatprep.subr.mxu0 0.0
        %1913 = vmatpush1.msra.mxu0 0.0
        %1914 = vmatprep.subr.mxu0 0.0
        %1915 = vmatpush1.msra.mxu0 0.0
        %1916 = vmatprep.subr.mxu0 0.0
        %1917 = vmatpush1.msra.mxu0 0.0
        %1918 = vmatprep.subr.mxu0 0.0
        %1919 = vmatpush1.msra.mxu0 0.0
        %1920 = vmatprep.subr.mxu0 0.0
        %1921 = vmatpush1.msra.mxu0 0.0
        %1922 = vmatprep.subr.mxu0 0.0
        %1923 = vmatpush1.msra.mxu0 0.0
        %1924 = vmatprep.subr.mxu0 0.0
        %1925 = vmatpush1.msra.mxu0 0.0
        %1926 = vmatprep.subr.mxu0 0.0
        %1927 = vmatpush1.msra.mxu0 0.0
        %1928 = vmatprep.subr.mxu0 0.0
        %1929 = vmatpush1.msra.mxu0 0.0
        %1930 = vmatprep.subr.mxu0 0.0
        %1931 = vmatpush1.msra.mxu0 0.0
        %1932 = vmatprep.subr.mxu0 0.0
        %1933 = vmatpush1.msra.mxu0 0.0
        %1934 = vmatprep.subr.mxu0 0.0
        %1935 = vmatpush1.msra.mxu0 0.0
        %1936 = vmatprep.subr.mxu0 0.0
        %1937 = vmatpush1.msra.mxu0 0.0
        %1938 = vmatprep.subr.mxu0 0.0
        %1939 = vmatpush1.msra.mxu0 0.0
        %1940 = vmatprep.subr.mxu0 0.0
        %1941 = vmatpush1.msra.mxu0 0.0
        %1942 = vmatprep.subr.mxu0 0.0
        %1943 = vmatpush1.msra.mxu0 0.0
        %1944 = vmatprep.subr.mxu0 0.0
        %1945 = vmatpush1.msra.mxu0 0.0
        %1946 = vmatprep.subr.mxu0 0.0
        %1947 = vmatpush1.msra.mxu0 0.0
        %1948 = vmatprep.subr.mxu0 0.0
        %1949 = vmatpush1.msra.mxu0 0.0
        %1950 = vmatprep.subr.mxu0 0.0
        %1951 = vmatpush1.msra.mxu0 0.0
        %1952 = vmatprep.mubr.f32.mxu0 0.0
        %1953 = vmatmul.mubr.f32.gmra.mrb[0].mxu0 %v1806
        %v1954 = vpop.f32.mrb[0].mxu0
        %v1955 = vadd.f32 0.0, %v1954
        %v1956 = vpop.f32.mrb[0].mxu0
        %1957 = vdwg.mxu0
        %v1959 = vsel %vm282, %v1793, 0
        %v1962 = vsel %vm286, %v1792, 0
        %v1965 = vsel %vm286, %v1791, 0
        %v1968 = vsel %vm286, %v1790, 0
        %1970 = vmatprep.subr.mxu0 %v1965
        %1971 = vmatpush1.msra.mxu0 %v1962
        %1972 = vmatprep.subr.mxu0 0.0
        %1973 = vmatpush1.msra.mxu0 0.0
        %1974 = vmatprep.subr.mxu0 0.0
        %1975 = vmatpush1.msra.mxu0 0.0
        %1976 = vmatprep.subr.mxu0 0.0
        %1977 = vmatpush1.msra.mxu0 0.0
        %1978 = vmatprep.subr.mxu0 0.0
        %1979 = vmatpush1.msra.mxu0 0.0
        %1980 = vmatprep.subr.mxu0 0.0
        %1981 = vmatpush1.msra.mxu0 0.0
        %1982 = vmatprep.subr.mxu0 0.0
        %1983 = vmatpush1.msra.mxu0 0.0
        %1984 = vmatprep.subr.mxu0 0.0
        %1985 = vmatpush1.msra.mxu0 0.0
        %1986 = vmatprep.subr.mxu0 0.0
        %1987 = vmatpush1.msra.mxu0 0.0
        %1988 = vmatprep.subr.mxu0 0.0
        %1989 = vmatpush1.msra.mxu0 0.0
        %1990 = vmatprep.subr.mxu0 0.0
        %1991 = vmatpush1.msra.mxu0 0.0
        %1992 = vmatprep.subr.mxu0 0.0
        %1993 = vmatpush1.msra.mxu0 0.0
        %1994 = vmatprep.subr.mxu0 0.0
        %1995 = vmatpush1.msra.mxu0 0.0
        %1996 = vmatprep.subr.mxu0 0.0
        %1997 = vmatpush1.msra.mxu0 0.0
        %1998 = vmatprep.subr.mxu0 0.0
        %1999 = vmatpush1.msra.mxu0 0.0
        %2000 = vmatprep.subr.mxu0 0.0
        %2001 = vmatpush1.msra.mxu0 0.0
        %2002 = vmatprep.subr.mxu0 0.0
        %2003 = vmatpush1.msra.mxu0 0.0
        %2004 = vmatprep.subr.mxu0 0.0
        %2005 = vmatpush1.msra.mxu0 0.0
        %2006 = vmatprep.subr.mxu0 0.0
        %2007 = vmatpush1.msra.mxu0 0.0
        %2008 = vmatprep.subr.mxu0 0.0
        %2009 = vmatpush1.msra.mxu0 0.0
        %2010 = vmatprep.subr.mxu0 0.0
        %2011 = vmatpush1.msra.mxu0 0.0
        %2012 = vmatprep.subr.mxu0 0.0
        %2013 = vmatpush1.msra.mxu0 0.0
        %2014 = vmatprep.subr.mxu0 0.0
        %2015 = vmatpush1.msra.mxu0 0.0
        %2016 = vmatprep.subr.mxu0 0.0
        %2017 = vmatpush1.msra.mxu0 0.0
        %2018 = vmatprep.subr.mxu0 0.0
        %2019 = vmatpush1.msra.mxu0 0.0
        %2020 = vmatprep.subr.mxu0 0.0
        %2021 = vmatpush1.msra.mxu0 0.0
        %2022 = vmatprep.subr.mxu0 0.0
        %2023 = vmatpush1.msra.mxu0 0.0
        %2024 = vmatprep.subr.mxu0 0.0
        %2025 = vmatpush1.msra.mxu0 0.0
        %2026 = vmatprep.subr.mxu0 0.0
        %2027 = vmatpush1.msra.mxu0 0.0
        %2028 = vmatprep.subr.mxu0 0.0
        %2029 = vmatpush1.msra.mxu0 0.0
        %2030 = vmatprep.subr.mxu0 0.0
        %2031 = vmatpush1.msra.mxu0 0.0
        %2032 = vmatprep.subr.mxu0 0.0
        %2033 = vmatpush1.msra.mxu0 0.0
        %2034 = vmatprep.mubr.f32.mxu0 0.0
        %2035 = vmatmul.mubr.f32.gmra.mrb[0].mxu0 %v1959
        %v2036 = vpop.f32.mrb[0].mxu0
        %v2037 = vadd.f32 %v1884, %v2036
        %v2038 = vpop.f32.mrb[0].mxu0
        %v2039 = vadd.f32 %v1886, %v2038
        %2040 = vdwg.mxu0
        %2041 = vmatprep.subr.mxu0 0.0
        %2042 = vmatpush1.msra.mxu0 %v1968
        %2043 = vmatprep.subr.mxu0 0.0
        %2044 = vmatpush1.msra.mxu0 0.0
        %2045 = vmatprep.subr.mxu0 0.0
        %2046 = vmatpush1.msra.mxu0 0.0
        %2047 = vmatprep.subr.mxu0 0.0
        %2048 = vmatpush1.msra.mxu0 0.0
        %2049 = vmatprep.subr.mxu0 0.0
        %2050 = vmatpush1.msra.mxu0 0.0
        %2051 = vmatprep.subr.mxu0 0.0
        %2052 = vmatpush1.msra.mxu0 0.0
        %2053 = vmatprep.subr.mxu0 0.0
        %2054 = vmatpush1.msra.mxu0 0.0
        %2055 = vmatprep.subr.mxu0 0.0
        %2056 = vmatpush1.msra.mxu0 0.0
        %2057 = vmatprep.subr.mxu0 0.0
        %2058 = vmatpush1.msra.mxu0 0.0
        %2059 = vmatprep.subr.mxu0 0.0
        %2060 = vmatpush1.msra.mxu0 0.0
        %2061 = vmatprep.subr.mxu0 0.0
        %2062 = vmatpush1.msra.mxu0 0.0
        %2063 = vmatprep.subr.mxu0 0.0
        %2064 = vmatpush1.msra.mxu0 0.0
        %2065 = vmatprep.subr.mxu0 0.0
        %2066 = vmatpush1.msra.mxu0 0.0
        %2067 = vmatprep.subr.mxu0 0.0
        %2068 = vmatpush1.msra.mxu0 0.0
        %2069 = vmatprep.subr.mxu0 0.0
        %2070 = vmatpush1.msra.mxu0 0.0
        %2071 = vmatprep.subr.mxu0 0.0
        %2072 = vmatpush1.msra.mxu0 0.0
        %2073 = vmatprep.subr.mxu0 0.0
        %2074 = vmatpush1.msra.mxu0 0.0
        %2075 = vmatprep.subr.mxu0 0.0
        %2076 = vmatpush1.msra.mxu0 0.0
        %2077 = vmatprep.subr.mxu0 0.0
        %2078 = vmatpush1.msra.mxu0 0.0
        %2079 = vmatprep.subr.mxu0 0.0
        %2080 = vmatpush1.msra.mxu0 0.0
        %2081 = vmatprep.subr.mxu0 0.0
        %2082 = vmatpush1.msra.mxu0 0.0
        %2083 = vmatprep.subr.mxu0 0.0
        %2084 = vmatpush1.msra.mxu0 0.0
        %2085 = vmatprep.subr.mxu0 0.0
        %2086 = vmatpush1.msra.mxu0 0.0
        %2087 = vmatprep.subr.mxu0 0.0
        %2088 = vmatpush1.msra.mxu0 0.0
        %2089 = vmatprep.subr.mxu0 0.0
        %2090 = vmatpush1.msra.mxu0 0.0
        %2091 = vmatprep.subr.mxu0 0.0
        %2092 = vmatpush1.msra.mxu0 0.0
        %2093 = vmatprep.subr.mxu0 0.0
        %2094 = vmatpush1.msra.mxu0 0.0
        %2095 = vmatprep.subr.mxu0 0.0
        %2096 = vmatpush1.msra.mxu0 0.0
        %2097 = vmatprep.subr.mxu0 0.0
        %2098 = vmatpush1.msra.mxu0 0.0
        %2099 = vmatprep.subr.mxu0 0.0
        %2100 = vmatpush1.msra.mxu0 0.0
        %2101 = vmatprep.subr.mxu0 0.0
        %2102 = vmatpush1.msra.mxu0 0.0
        %2103 = vmatprep.subr.mxu0 0.0
        %2104 = vmatpush1.msra.mxu0 0.0
        %2105 = vmatprep.mubr.f32.mxu0 0.0
        %2106 = vmatmul.mubr.f32.gmra.mrb[0].mxu0 %v1959
        %v2107 = vpop.f32.mrb[0].mxu0
        %v2108 = vadd.f32 %v1955, %v2107
        %v2109 = vpop.f32.mrb[0].mxu0
        %2110 = vdwg.mxu0
        %2111 = vrot.lane.b32.xlu0 %v1781, 17
        %v2112 = vpop.permute.xlu0 %2111
        %2113 = vrot.lane.b32.xlu0 %v1782, 17
        %v2114 = vpop.permute.xlu0 %2113
        %2115 = vrot.lane.b32.xlu0 %v1783, 17
        %v2116 = vpop.permute.xlu0 %2115
        %v2117 = vsel %vm596, %v2114, %v2116
        %v2118 = vsel %vm596, %v2112, %v2114
        %v2119 = vsel %vm596, %v2116, %v2112
        %s2120 = scalar_lea.vmem %s3, 8
        %v2121 = vld [vmem:[%s2120] sm:$0xf]
        %v2123 = vsel %vm282, %v2121, 0
        %v2126 = vsel %vm286, %v2119, 0
        %v2129 = vsel %vm286, %v2118, 0
        %v2132 = vsel %vm286, %v2117, 0
        %2134 = vmatprep.subr.mxu0 %v2129
        %2135 = vmatpush1.msra.mxu0 %v2126
        %2136 = vmatprep.subr.mxu0 0.0
        %2137 = vmatpush1.msra.mxu0 0.0
        %2138 = vmatprep.subr.mxu0 0.0
        %2139 = vmatpush1.msra.mxu0 0.0
        %2140 = vmatprep.subr.mxu0 0.0
        %2141 = vmatpush1.msra.mxu0 0.0
        %2142 = vmatprep.subr.mxu0 0.0
        %2143 = vmatpush1.msra.mxu0 0.0
        %2144 = vmatprep.subr.mxu0 0.0
        %2145 = vmatpush1.msra.mxu0 0.0
        %2146 = vmatprep.subr.mxu0 0.0
        %2147 = vmatpush1.msra.mxu0 0.0
        %2148 = vmatprep.subr.mxu0 0.0
        %2149 = vmatpush1.msra.mxu0 0.0
        %2150 = vmatprep.subr.mxu0 0.0
        %2151 = vmatpush1.msra.mxu0 0.0
        %2152 = vmatprep.subr.mxu0 0.0
        %2153 = vmatpush1.msra.mxu0 0.0
        %2154 = vmatprep.subr.mxu0 0.0
        %2155 = vmatpush1.msra.mxu0 0.0
        %2156 = vmatprep.subr.mxu0 0.0
        %2157 = vmatpush1.msra.mxu0 0.0
        %2158 = vmatprep.subr.mxu0 0.0
        %2159 = vmatpush1.msra.mxu0 0.0
        %2160 = vmatprep.subr.mxu0 0.0
        %2161 = vmatpush1.msra.mxu0 0.0
        %2162 = vmatprep.subr.mxu0 0.0
        %2163 = vmatpush1.msra.mxu0 0.0
        %2164 = vmatprep.subr.mxu0 0.0
        %2165 = vmatpush1.msra.mxu0 0.0
        %2166 = vmatprep.subr.mxu0 0.0
        %2167 = vmatpush1.msra.mxu0 0.0
        %2168 = vmatprep.subr.mxu0 0.0
        %2169 = vmatpush1.msra.mxu0 0.0
        %2170 = vmatprep.subr.mxu0 0.0
        %2171 = vmatpush1.msra.mxu0 0.0
        %2172 = vmatprep.subr.mxu0 0.0
        %2173 = vmatpush1.msra.mxu0 0.0
        %2174 = vmatprep.subr.mxu0 0.0
        %2175 = vmatpush1.msra.mxu0 0.0
        %2176 = vmatprep.subr.mxu0 0.0
        %2177 = vmatpush1.msra.mxu0 0.0
        %2178 = vmatprep.subr.mxu0 0.0
        %2179 = vmatpush1.msra.mxu0 0.0
        %2180 = vmatprep.subr.mxu0 0.0
        %2181 = vmatpush1.msra.mxu0 0.0
        %2182 = vmatprep.subr.mxu0 0.0
        %2183 = vmatpush1.msra.mxu0 0.0
        %2184 = vmatprep.subr.mxu0 0.0
        %2185 = vmatpush1.msra.mxu0 0.0
        %2186 = vmatprep.subr.mxu0 0.0
        %2187 = vmatpush1.msra.mxu0 0.0
        %2188 = vmatprep.subr.mxu0 0.0
        %2189 = vmatpush1.msra.mxu0 0.0
        %2190 = vmatprep.subr.mxu0 0.0
        %2191 = vmatpush1.msra.mxu0 0.0
        %2192 = vmatprep.subr.mxu0 0.0
        %2193 = vmatpush1.msra.mxu0 0.0
        %2194 = vmatprep.subr.mxu0 0.0
        %2195 = vmatpush1.msra.mxu0 0.0
        %2196 = vmatprep.subr.mxu0 0.0
        %2197 = vmatpush1.msra.mxu0 0.0
        %2198 = vmatprep.mubr.f32.mxu0 0.0
        %2199 = vmatmul.mubr.f32.gmra.mrb[0].mxu0 %v2123
        %v2200 = vpop.f32.mrb[0].mxu0
        %v2201 = vadd.f32 0.0, %v2200
        %v2202 = vpop.f32.mrb[0].mxu0
        %v2203 = vadd.f32 0.0, %v2202
        %2204 = vdwg.mxu0
        %2205 = vmatprep.subr.mxu0 0.0
        %2206 = vmatpush1.msra.mxu0 %v2132
        %2207 = vmatprep.subr.mxu0 0.0
        %2208 = vmatpush1.msra.mxu0 0.0
        %2209 = vmatprep.subr.mxu0 0.0
        %2210 = vmatpush1.msra.mxu0 0.0
        %2211 = vmatprep.subr.mxu0 0.0
        %2212 = vmatpush1.msra.mxu0 0.0
        %2213 = vmatprep.subr.mxu0 0.0
        %2214 = vmatpush1.msra.mxu0 0.0
        %2215 = vmatprep.subr.mxu0 0.0
        %2216 = vmatpush1.msra.mxu0 0.0
        %2217 = vmatprep.subr.mxu0 0.0
        %2218 = vmatpush1.msra.mxu0 0.0
        %2219 = vmatprep.subr.mxu0 0.0
        %2220 = vmatpush1.msra.mxu0 0.0
        %2221 = vmatprep.subr.mxu0 0.0
        %2222 = vmatpush1.msra.mxu0 0.0
        %2223 = vmatprep.subr.mxu0 0.0
        %2224 = vmatpush1.msra.mxu0 0.0
        %2225 = vmatprep.subr.mxu0 0.0
        %2226 = vmatpush1.msra.mxu0 0.0
        %2227 = vmatprep.subr.mxu0 0.0
        %2228 = vmatpush1.msra.mxu0 0.0
        %2229 = vmatprep.subr.mxu0 0.0
        %2230 = vmatpush1.msra.mxu0 0.0
        %2231 = vmatprep.subr.mxu0 0.0
        %2232 = vmatpush1.msra.mxu0 0.0
        %2233 = vmatprep.subr.mxu0 0.0
        %2234 = vmatpush1.msra.mxu0 0.0
        %2235 = vmatprep.subr.mxu0 0.0
        %2236 = vmatpush1.msra.mxu0 0.0
        %2237 = vmatprep.subr.mxu0 0.0
        %2238 = vmatpush1.msra.mxu0 0.0
        %2239 = vmatprep.subr.mxu0 0.0
        %2240 = vmatpush1.msra.mxu0 0.0
        %2241 = vmatprep.subr.mxu0 0.0
        %2242 = vmatpush1.msra.mxu0 0.0
        %2243 = vmatprep.subr.mxu0 0.0
        %2244 = vmatpush1.msra.mxu0 0.0
        %2245 = vmatprep.subr.mxu0 0.0
        %2246 = vmatpush1.msra.mxu0 0.0
        %2247 = vmatprep.subr.mxu0 0.0
        %2248 = vmatpush1.msra.mxu0 0.0
        %2249 = vmatprep.subr.mxu0 0.0
        %2250 = vmatpush1.msra.mxu0 0.0
        %2251 = vmatprep.subr.mxu0 0.0
        %2252 = vmatpush1.msra.mxu0 0.0
        %2253 = vmatprep.subr.mxu0 0.0
        %2254 = vmatpush1.msra.mxu0 0.0
        %2255 = vmatprep.subr.mxu0 0.0
        %2256 = vmatpush1.msra.mxu0 0.0
        %2257 = vmatprep.subr.mxu0 0.0
        %2258 = vmatpush1.msra.mxu0 0.0
        %2259 = vmatprep.subr.mxu0 0.0
        %2260 = vmatpush1.msra.mxu0 0.0
        %2261 = vmatprep.subr.mxu0 0.0
        %2262 = vmatpush1.msra.mxu0 0.0
        %2263 = vmatprep.subr.mxu0 0.0
        %2264 = vmatpush1.msra.mxu0 0.0
        %2265 = vmatprep.subr.mxu0 0.0
        %2266 = vmatpush1.msra.mxu0 0.0
        %2267 = vmatprep.subr.mxu0 0.0
        %2268 = vmatpush1.msra.mxu0 0.0
        %2269 = vmatprep.mubr.f32.mxu0 0.0
        %2270 = vmatmul.mubr.f32.gmra.mrb[0].mxu0 %v2123
        %v2271 = vpop.f32.mrb[0].mxu0
        %v2272 = vadd.f32 0.0, %v2271
        %v2273 = vpop.f32.mrb[0].mxu0
        %2274 = vdwg.mxu0
        %v2275 = vadd.f32 %v2037, %v2201
        %v2276 = vadd.f32 %v2039, %v2203
        %v2277 = vadd.f32 %v2108, %v2272
        %2278 = vrot.lane.b32.xlu0 %v1781, 1
        %v2279 = vpop.permute.xlu0 %2278
        %2280 = vrot.lane.b32.xlu0 %v1782, 1
        %v2281 = vpop.permute.xlu0 %2280
        %2282 = vrot.lane.b32.xlu0 %v1783, 1
        %v2283 = vpop.permute.xlu0 %2282
        %v2284 = vsel %vm764, %v2281, %v2283
        %v2285 = vsel %vm764, %v2279, %v2281
        %v2286 = vsel %vm764, %v2283, %v2279
        %s2287 = scalar_lea.vmem %s3, 12
        %v2288 = vld [vmem:[%s2287] sm:$0xf]
        %v2290 = vsel %vm282, %v2288, 0
        %v2293 = vsel %vm286, %v2286, 0
        %v2296 = vsel %vm286, %v2285, 0
        %v2299 = vsel %vm286, %v2284, 0
        %2301 = vmatprep.subr.mxu0 %v2296
        %2302 = vmatpush1.msra.mxu0 %v2293
        %2303 = vmatprep.subr.mxu0 0.0
        %2304 = vmatpush1.msra.mxu0 0.0
        %2305 = vmatprep.subr.mxu0 0.0
        %2306 = vmatpush1.msra.mxu0 0.0
        %2307 = vmatprep.subr.mxu0 0.0
        %2308 = vmatpush1.msra.mxu0 0.0
        %2309 = vmatprep.subr.mxu0 0.0
        %2310 = vmatpush1.msra.mxu0 0.0
        %2311 = vmatprep.subr.mxu0 0.0
        %2312 = vmatpush1.msra.mxu0 0.0
        %2313 = vmatprep.subr.mxu0 0.0
        %2314 = vmatpush1.msra.mxu0 0.0
        %2315 = vmatprep.subr.mxu0 0.0
        %2316 = vmatpush1.msra.mxu0 0.0
        %2317 = vmatprep.subr.mxu0 0.0
        %2318 = vmatpush1.msra.mxu0 0.0
        %2319 = vmatprep.subr.mxu0 0.0
        %2320 = vmatpush1.msra.mxu0 0.0
        %2321 = vmatprep.subr.mxu0 0.0
        %2322 = vmatpush1.msra.mxu0 0.0
        %2323 = vmatprep.subr.mxu0 0.0
        %2324 = vmatpush1.msra.mxu0 0.0
        %2325 = vmatprep.subr.mxu0 0.0
        %2326 = vmatpush1.msra.mxu0 0.0
        %2327 = vmatprep.subr.mxu0 0.0
        %2328 = vmatpush1.msra.mxu0 0.0
        %2329 = vmatprep.subr.mxu0 0.0
        %2330 = vmatpush1.msra.mxu0 0.0
        %2331 = vmatprep.subr.mxu0 0.0
        %2332 = vmatpush1.msra.mxu0 0.0
        %2333 = vmatprep.subr.mxu0 0.0
        %2334 = vmatpush1.msra.mxu0 0.0
        %2335 = vmatprep.subr.mxu0 0.0
        %2336 = vmatpush1.msra.mxu0 0.0
        %2337 = vmatprep.subr.mxu0 0.0
        %2338 = vmatpush1.msra.mxu0 0.0
        %2339 = vmatprep.subr.mxu0 0.0
        %2340 = vmatpush1.msra.mxu0 0.0
        %2341 = vmatprep.subr.mxu0 0.0
        %2342 = vmatpush1.msra.mxu0 0.0
        %2343 = vmatprep.subr.mxu0 0.0
        %2344 = vmatpush1.msra.mxu0 0.0
        %2345 = vmatprep.subr.mxu0 0.0
        %2346 = vmatpush1.msra.mxu0 0.0
        %2347 = vmatprep.subr.mxu0 0.0
        %2348 = vmatpush1.msra.mxu0 0.0
        %2349 = vmatprep.subr.mxu0 0.0
        %2350 = vmatpush1.msra.mxu0 0.0
        %2351 = vmatprep.subr.mxu0 0.0
        %2352 = vmatpush1.msra.mxu0 0.0
        %2353 = vmatprep.subr.mxu0 0.0
        %2354 = vmatpush1.msra.mxu0 0.0
        %2355 = vmatprep.subr.mxu0 0.0
        %2356 = vmatpush1.msra.mxu0 0.0
        %2357 = vmatprep.subr.mxu0 0.0
        %2358 = vmatpush1.msra.mxu0 0.0
        %2359 = vmatprep.subr.mxu0 0.0
        %2360 = vmatpush1.msra.mxu0 0.0
        %2361 = vmatprep.subr.mxu0 0.0
        %2362 = vmatpush1.msra.mxu0 0.0
        %2363 = vmatprep.subr.mxu0 0.0
        %2364 = vmatpush1.msra.mxu0 0.0
        %2365 = vmatprep.mubr.f32.mxu0 0.0
        %2366 = vmatmul.mubr.f32.gmra.mrb[0].mxu0 %v2290
        %v2367 = vpop.f32.mrb[0].mxu0
        %v2368 = vadd.f32 0.0, %v2367
        %v2369 = vpop.f32.mrb[0].mxu0
        %v2370 = vadd.f32 0.0, %v2369
        %2371 = vdwg.mxu0
        %2372 = vmatprep.subr.mxu0 0.0
        %2373 = vmatpush1.msra.mxu0 %v2299
        %2374 = vmatprep.subr.mxu0 0.0
        %2375 = vmatpush1.msra.mxu0 0.0
        %2376 = vmatprep.subr.mxu0 0.0
        %2377 = vmatpush1.msra.mxu0 0.0
        %2378 = vmatprep.subr.mxu0 0.0
        %2379 = vmatpush1.msra.mxu0 0.0
        %2380 = vmatprep.subr.mxu0 0.0
        %2381 = vmatpush1.msra.mxu0 0.0
        %2382 = vmatprep.subr.mxu0 0.0
        %2383 = vmatpush1.msra.mxu0 0.0
        %2384 = vmatprep.subr.mxu0 0.0
        %2385 = vmatpush1.msra.mxu0 0.0
        %2386 = vmatprep.subr.mxu0 0.0
        %2387 = vmatpush1.msra.mxu0 0.0
        %2388 = vmatprep.subr.mxu0 0.0
        %2389 = vmatpush1.msra.mxu0 0.0
        %2390 = vmatprep.subr.mxu0 0.0
        %2391 = vmatpush1.msra.mxu0 0.0
        %2392 = vmatprep.subr.mxu0 0.0
        %2393 = vmatpush1.msra.mxu0 0.0
        %2394 = vmatprep.subr.mxu0 0.0
        %2395 = vmatpush1.msra.mxu0 0.0
        %2396 = vmatprep.subr.mxu0 0.0
        %2397 = vmatpush1.msra.mxu0 0.0
        %2398 = vmatprep.subr.mxu0 0.0
        %2399 = vmatpush1.msra.mxu0 0.0
        %2400 = vmatprep.subr.mxu0 0.0
        %2401 = vmatpush1.msra.mxu0 0.0
        %2402 = vmatprep.subr.mxu0 0.0
        %2403 = vmatpush1.msra.mxu0 0.0
        %2404 = vmatprep.subr.mxu0 0.0
        %2405 = vmatpush1.msra.mxu0 0.0
        %2406 = vmatprep.subr.mxu0 0.0
        %2407 = vmatpush1.msra.mxu0 0.0
        %2408 = vmatprep.subr.mxu0 0.0
        %2409 = vmatpush1.msra.mxu0 0.0
        %2410 = vmatprep.subr.mxu0 0.0
        %2411 = vmatpush1.msra.mxu0 0.0
        %2412 = vmatprep.subr.mxu0 0.0
        %2413 = vmatpush1.msra.mxu0 0.0
        %2414 = vmatprep.subr.mxu0 0.0
        %2415 = vmatpush1.msra.mxu0 0.0
        %2416 = vmatprep.subr.mxu0 0.0
        %2417 = vmatpush1.msra.mxu0 0.0
        %2418 = vmatprep.subr.mxu0 0.0
        %2419 = vmatpush1.msra.mxu0 0.0
        %2420 = vmatprep.subr.mxu0 0.0
        %2421 = vmatpush1.msra.mxu0 0.0
        %2422 = vmatprep.subr.mxu0 0.0
        %2423 = vmatpush1.msra.mxu0 0.0
        %2424 = vmatprep.subr.mxu0 0.0
        %2425 = vmatpush1.msra.mxu0 0.0
        %2426 = vmatprep.subr.mxu0 0.0
        %2427 = vmatpush1.msra.mxu0 0.0
        %2428 = vmatprep.subr.mxu0 0.0
        %2429 = vmatpush1.msra.mxu0 0.0
        %2430 = vmatprep.subr.mxu0 0.0
        %2431 = vmatpush1.msra.mxu0 0.0
        %2432 = vmatprep.subr.mxu0 0.0
        %2433 = vmatpush1.msra.mxu0 0.0
        %2434 = vmatprep.subr.mxu0 0.0
        %2435 = vmatpush1.msra.mxu0 0.0
        %2436 = vmatprep.mubr.f32.mxu0 0.0
        %2437 = vmatmul.mubr.f32.gmra.mrb[0].mxu0 %v2290
        %v2438 = vpop.f32.mrb[0].mxu0
        %v2439 = vadd.f32 0.0, %v2438
        %v2440 = vpop.f32.mrb[0].mxu0
        %2441 = vdwg.mxu0
        %v2442 = vadd.f32 %v2275, %v2368
        %v2443 = vadd.f32 %v2276, %v2370
        %v2444 = vadd.f32 %v2277, %v2439
        %s2445 = scalar_lea.vmem %s3, 16
        %v2446 = vld [vmem:[%s2445] sm:$0xf]
        %v2448 = vsel %vm282, %v2446, 0
        %v2451 = vsel %vm286, %v1781, 0
        %v2454 = vsel %vm286, %v1782, 0
        %v2457 = vsel %vm286, %v1783, 0
        %2459 = vmatprep.subr.mxu0 %v2454
        %2460 = vmatpush1.msra.mxu0 %v2451
        %2461 = vmatprep.subr.mxu0 0.0
        %2462 = vmatpush1.msra.mxu0 0.0
        %2463 = vmatprep.subr.mxu0 0.0
        %2464 = vmatpush1.msra.mxu0 0.0
        %2465 = vmatprep.subr.mxu0 0.0
        %2466 = vmatpush1.msra.mxu0 0.0
        %2467 = vmatprep.subr.mxu0 0.0
        %2468 = vmatpush1.msra.mxu0 0.0
        %2469 = vmatprep.subr.mxu0 0.0
        %2470 = vmatpush1.msra.mxu0 0.0
        %2471 = vmatprep.subr.mxu0 0.0
        %2472 = vmatpush1.msra.mxu0 0.0
        %2473 = vmatprep.subr.mxu0 0.0
        %2474 = vmatpush1.msra.mxu0 0.0
        %2475 = vmatprep.subr.mxu0 0.0
        %2476 = vmatpush1.msra.mxu0 0.0
        %2477 = vmatprep.subr.mxu0 0.0
        %2478 = vmatpush1.msra.mxu0 0.0
        %2479 = vmatprep.subr.mxu0 0.0
        %2480 = vmatpush1.msra.mxu0 0.0
        %2481 = vmatprep.subr.mxu0 0.0
        %2482 = vmatpush1.msra.mxu0 0.0
        %2483 = vmatprep.subr.mxu0 0.0
        %2484 = vmatpush1.msra.mxu0 0.0
        %2485 = vmatprep.subr.mxu0 0.0
        %2486 = vmatpush1.msra.mxu0 0.0
        %2487 = vmatprep.subr.mxu0 0.0
        %2488 = vmatpush1.msra.mxu0 0.0
        %2489 = vmatprep.subr.mxu0 0.0
        %2490 = vmatpush1.msra.mxu0 0.0
        %2491 = vmatprep.subr.mxu0 0.0
        %2492 = vmatpush1.msra.mxu0 0.0
        %2493 = vmatprep.subr.mxu0 0.0
        %2494 = vmatpush1.msra.mxu0 0.0
        %2495 = vmatprep.subr.mxu0 0.0
        %2496 = vmatpush1.msra.mxu0 0.0
        %2497 = vmatprep.subr.mxu0 0.0
        %2498 = vmatpush1.msra.mxu0 0.0
        %2499 = vmatprep.subr.mxu0 0.0
        %2500 = vmatpush1.msra.mxu0 0.0
        %2501 = vmatprep.subr.mxu0 0.0
        %2502 = vmatpush1.msra.mxu0 0.0
        %2503 = vmatprep.subr.mxu0 0.0
        %2504 = vmatpush1.msra.mxu0 0.0
        %2505 = vmatprep.subr.mxu0 0.0
        %2506 = vmatpush1.msra.mxu0 0.0
        %2507 = vmatprep.subr.mxu0 0.0
        %2508 = vmatpush1.msra.mxu0 0.0
        %2509 = vmatprep.subr.mxu0 0.0
        %2510 = vmatpush1.msra.mxu0 0.0
        %2511 = vmatprep.subr.mxu0 0.0
        %2512 = vmatpush1.msra.mxu0 0.0
        %2513 = vmatprep.subr.mxu0 0.0
        %2514 = vmatpush1.msra.mxu0 0.0
        %2515 = vmatprep.subr.mxu0 0.0
        %2516 = vmatpush1.msra.mxu0 0.0
        %2517 = vmatprep.subr.mxu0 0.0
        %2518 = vmatpush1.msra.mxu0 0.0
        %2519 = vmatprep.subr.mxu0 0.0
        %2520 = vmatpush1.msra.mxu0 0.0
        %2521 = vmatprep.subr.mxu0 0.0
        %2522 = vmatpush1.msra.mxu0 0.0
        %2523 = vmatprep.mubr.f32.mxu0 0.0
        %2524 = vmatmul.mubr.f32.gmra.mrb[0].mxu0 %v2448
        %v2525 = vpop.f32.mrb[0].mxu0
        %v2526 = vadd.f32 0.0, %v2525
        %v2527 = vpop.f32.mrb[0].mxu0
        %v2528 = vadd.f32 0.0, %v2527
        %2529 = vdwg.mxu0
        %2530 = vmatprep.subr.mxu0 0.0
        %2531 = vmatpush1.msra.mxu0 %v2457
        %2532 = vmatprep.subr.mxu0 0.0
        %2533 = vmatpush1.msra.mxu0 0.0
        %2534 = vmatprep.subr.mxu0 0.0
        %2535 = vmatpush1.msra.mxu0 0.0
        %2536 = vmatprep.subr.mxu0 0.0
        %2537 = vmatpush1.msra.mxu0 0.0
        %2538 = vmatprep.subr.mxu0 0.0
        %2539 = vmatpush1.msra.mxu0 0.0
        %2540 = vmatprep.subr.mxu0 0.0
        %2541 = vmatpush1.msra.mxu0 0.0
        %2542 = vmatprep.subr.mxu0 0.0
        %2543 = vmatpush1.msra.mxu0 0.0
        %2544 = vmatprep.subr.mxu0 0.0
        %2545 = vmatpush1.msra.mxu0 0.0
        %2546 = vmatprep.subr.mxu0 0.0
        %2547 = vmatpush1.msra.mxu0 0.0
        %2548 = vmatprep.subr.mxu0 0.0
        %2549 = vmatpush1.msra.mxu0 0.0
        %2550 = vmatprep.subr.mxu0 0.0
        %2551 = vmatpush1.msra.mxu0 0.0
        %2552 = vmatprep.subr.mxu0 0.0
        %2553 = vmatpush1.msra.mxu0 0.0
        %2554 = vmatprep.subr.mxu0 0.0
        %2555 = vmatpush1.msra.mxu0 0.0
        %2556 = vmatprep.subr.mxu0 0.0
        %2557 = vmatpush1.msra.mxu0 0.0
        %2558 = vmatprep.subr.mxu0 0.0
        %2559 = vmatpush1.msra.mxu0 0.0
        %2560 = vmatprep.subr.mxu0 0.0
        %2561 = vmatpush1.msra.mxu0 0.0
        %2562 = vmatprep.subr.mxu0 0.0
        %2563 = vmatpush1.msra.mxu0 0.0
        %2564 = vmatprep.subr.mxu0 0.0
        %2565 = vmatpush1.msra.mxu0 0.0
        %2566 = vmatprep.subr.mxu0 0.0
        %2567 = vmatpush1.msra.mxu0 0.0
        %2568 = vmatprep.subr.mxu0 0.0
        %2569 = vmatpush1.msra.mxu0 0.0
        %2570 = vmatprep.subr.mxu0 0.0
        %2571 = vmatpush1.msra.mxu0 0.0
        %2572 = vmatprep.subr.mxu0 0.0
        %2573 = vmatpush1.msra.mxu0 0.0
        %2574 = vmatprep.subr.mxu0 0.0
        %2575 = vmatpush1.msra.mxu0 0.0
        %2576 = vmatprep.subr.mxu0 0.0
        %2577 = vmatpush1.msra.mxu0 0.0
        %2578 = vmatprep.subr.mxu0 0.0
        %2579 = vmatpush1.msra.mxu0 0.0
        %2580 = vmatprep.subr.mxu0 0.0
        %2581 = vmatpush1.msra.mxu0 0.0
        %2582 = vmatprep.subr.mxu0 0.0
        %2583 = vmatpush1.msra.mxu0 0.0
        %2584 = vmatprep.subr.mxu0 0.0
        %2585 = vmatpush1.msra.mxu0 0.0
        %2586 = vmatprep.subr.mxu0 0.0
        %2587 = vmatpush1.msra.mxu0 0.0
        %2588 = vmatprep.subr.mxu0 0.0
        %2589 = vmatpush1.msra.mxu0 0.0
        %2590 = vmatprep.subr.mxu0 0.0
        %2591 = vmatpush1.msra.mxu0 0.0
        %2592 = vmatprep.subr.mxu0 0.0
        %2593 = vmatpush1.msra.mxu0 0.0
        %2594 = vmatprep.mubr.f32.mxu0 0.0
        %2595 = vmatmul.mubr.f32.gmra.mrb[0].mxu0 %v2448
        %v2596 = vpop.f32.mrb[0].mxu0
        %v2597 = vadd.f32 0.0, %v2596
        %v2598 = vpop.f32.mrb[0].mxu0
        %2599 = vdwg.mxu0
        %v2600 = vadd.f32 %v2442, %v2526
        %v2601 = vadd.f32 %v2443, %v2528
        %v2602 = vadd.f32 %v2444, %v2597
        %2603 = vrot.lane.b32.xlu0 %v1781, 127
        %v2604 = vpop.permute.xlu0 %2603
        %2605 = vrot.lane.b32.xlu0 %v1782, 127
        %v2606 = vpop.permute.xlu0 %2605
        %2607 = vrot.lane.b32.xlu0 %v1783, 127
        %v2608 = vpop.permute.xlu0 %2607
        %v2609 = vsel %vm1087, %v2606, %v2608
        %v2610 = vsel %vm1087, %v2604, %v2606
        %v2611 = vsel %vm1087, %v2608, %v2604
        %s2612 = scalar_lea.vmem %s3, 20
        %v2613 = vld [vmem:[%s2612] sm:$0xf]
        %v2615 = vsel %vm282, %v2613, 0
        %v2618 = vsel %vm286, %v2610, 0
        %v2621 = vsel %vm286, %v2609, 0
        %v2624 = vsel %vm286, %v2611, 0
        %2626 = vmatprep.subr.mxu0 %v2621
        %2627 = vmatpush1.msra.mxu0 %v2618
        %2628 = vmatprep.subr.mxu0 0.0
        %2629 = vmatpush1.msra.mxu0 0.0
        %2630 = vmatprep.subr.mxu0 0.0
        %2631 = vmatpush1.msra.mxu0 0.0
        %2632 = vmatprep.subr.mxu0 0.0
        %2633 = vmatpush1.msra.mxu0 0.0
        %2634 = vmatprep.subr.mxu0 0.0
        %2635 = vmatpush1.msra.mxu0 0.0
        %2636 = vmatprep.subr.mxu0 0.0
        %2637 = vmatpush1.msra.mxu0 0.0
        %2638 = vmatprep.subr.mxu0 0.0
        %2639 = vmatpush1.msra.mxu0 0.0
        %2640 = vmatprep.subr.mxu0 0.0
        %2641 = vmatpush1.msra.mxu0 0.0
        %2642 = vmatprep.subr.mxu0 0.0
        %2643 = vmatpush1.msra.mxu0 0.0
        %2644 = vmatprep.subr.mxu0 0.0
        %2645 = vmatpush1.msra.mxu0 0.0
        %2646 = vmatprep.subr.mxu0 0.0
        %2647 = vmatpush1.msra.mxu0 0.0
        %2648 = vmatprep.subr.mxu0 0.0
        %2649 = vmatpush1.msra.mxu0 0.0
        %2650 = vmatprep.subr.mxu0 0.0
        %2651 = vmatpush1.msra.mxu0 0.0
        %2652 = vmatprep.subr.mxu0 0.0
        %2653 = vmatpush1.msra.mxu0 0.0
        %2654 = vmatprep.subr.mxu0 0.0
        %2655 = vmatpush1.msra.mxu0 0.0
        %2656 = vmatprep.subr.mxu0 0.0
        %2657 = vmatpush1.msra.mxu0 0.0
        %2658 = vmatprep.subr.mxu0 0.0
        %2659 = vmatpush1.msra.mxu0 0.0
        %2660 = vmatprep.subr.mxu0 0.0
        %2661 = vmatpush1.msra.mxu0 0.0
        %2662 = vmatprep.subr.mxu0 0.0
        %2663 = vmatpush1.msra.mxu0 0.0
        %2664 = vmatprep.subr.mxu0 0.0
        %2665 = vmatpush1.msra.mxu0 0.0
        %2666 = vmatprep.subr.mxu0 0.0
        %2667 = vmatpush1.msra.mxu0 0.0
        %2668 = vmatprep.subr.mxu0 0.0
        %2669 = vmatpush1.msra.mxu0 0.0
        %2670 = vmatprep.subr.mxu0 0.0
        %2671 = vmatpush1.msra.mxu0 0.0
        %2672 = vmatprep.subr.mxu0 0.0
        %2673 = vmatpush1.msra.mxu0 0.0
        %2674 = vmatprep.subr.mxu0 0.0
        %2675 = vmatpush1.msra.mxu0 0.0
        %2676 = vmatprep.subr.mxu0 0.0
        %2677 = vmatpush1.msra.mxu0 0.0
        %2678 = vmatprep.subr.mxu0 0.0
        %2679 = vmatpush1.msra.mxu0 0.0
        %2680 = vmatprep.subr.mxu0 0.0
        %2681 = vmatpush1.msra.mxu0 0.0
        %2682 = vmatprep.subr.mxu0 0.0
        %2683 = vmatpush1.msra.mxu0 0.0
        %2684 = vmatprep.subr.mxu0 0.0
        %2685 = vmatpush1.msra.mxu0 0.0
        %2686 = vmatprep.subr.mxu0 0.0
        %2687 = vmatpush1.msra.mxu0 0.0
        %2688 = vmatprep.subr.mxu0 0.0
        %2689 = vmatpush1.msra.mxu0 0.0
        %2690 = vmatprep.mubr.f32.mxu0 0.0
        %2691 = vmatmul.mubr.f32.gmra.mrb[0].mxu0 %v2615
        %v2692 = vpop.f32.mrb[0].mxu0
        %v2693 = vadd.f32 0.0, %v2692
        %v2694 = vpop.f32.mrb[0].mxu0
        %v2695 = vadd.f32 0.0, %v2694
        %2696 = vdwg.mxu0
        %2697 = vmatprep.subr.mxu0 0.0
        %2698 = vmatpush1.msra.mxu0 %v2624
        %2699 = vmatprep.subr.mxu0 0.0
        %2700 = vmatpush1.msra.mxu0 0.0
        %2701 = vmatprep.subr.mxu0 0.0
        %2702 = vmatpush1.msra.mxu0 0.0
        %2703 = vmatprep.subr.mxu0 0.0
        %2704 = vmatpush1.msra.mxu0 0.0
        %2705 = vmatprep.subr.mxu0 0.0
        %2706 = vmatpush1.msra.mxu0 0.0
        %2707 = vmatprep.subr.mxu0 0.0
        %2708 = vmatpush1.msra.mxu0 0.0
        %2709 = vmatprep.subr.mxu0 0.0
        %2710 = vmatpush1.msra.mxu0 0.0
        %2711 = vmatprep.subr.mxu0 0.0
        %2712 = vmatpush1.msra.mxu0 0.0
        %2713 = vmatprep.subr.mxu0 0.0
        %2714 = vmatpush1.msra.mxu0 0.0
        %2715 = vmatprep.subr.mxu0 0.0
        %2716 = vmatpush1.msra.mxu0 0.0
        %2717 = vmatprep.subr.mxu0 0.0
        %2718 = vmatpush1.msra.mxu0 0.0
        %2719 = vmatprep.subr.mxu0 0.0
        %2720 = vmatpush1.msra.mxu0 0.0
        %2721 = vmatprep.subr.mxu0 0.0
        %2722 = vmatpush1.msra.mxu0 0.0
        %2723 = vmatprep.subr.mxu0 0.0
        %2724 = vmatpush1.msra.mxu0 0.0
        %2725 = vmatprep.subr.mxu0 0.0
        %2726 = vmatpush1.msra.mxu0 0.0
        %2727 = vmatprep.subr.mxu0 0.0
        %2728 = vmatpush1.msra.mxu0 0.0
        %2729 = vmatprep.subr.mxu0 0.0
        %2730 = vmatpush1.msra.mxu0 0.0
        %2731 = vmatprep.subr.mxu0 0.0
        %2732 = vmatpush1.msra.mxu0 0.0
        %2733 = vmatprep.subr.mxu0 0.0
        %2734 = vmatpush1.msra.mxu0 0.0
        %2735 = vmatprep.subr.mxu0 0.0
        %2736 = vmatpush1.msra.mxu0 0.0
        %2737 = vmatprep.subr.mxu0 0.0
        %2738 = vmatpush1.msra.mxu0 0.0
        %2739 = vmatprep.subr.mxu0 0.0
        %2740 = vmatpush1.msra.mxu0 0.0
        %2741 = vmatprep.subr.mxu0 0.0
        %2742 = vmatpush1.msra.mxu0 0.0
        %2743 = vmatprep.subr.mxu0 0.0
        %2744 = vmatpush1.msra.mxu0 0.0
        %2745 = vmatprep.subr.mxu0 0.0
        %2746 = vmatpush1.msra.mxu0 0.0
        %2747 = vmatprep.subr.mxu0 0.0
        %2748 = vmatpush1.msra.mxu0 0.0
        %2749 = vmatprep.subr.mxu0 0.0
        %2750 = vmatpush1.msra.mxu0 0.0
        %2751 = vmatprep.subr.mxu0 0.0
        %2752 = vmatpush1.msra.mxu0 0.0
        %2753 = vmatprep.subr.mxu0 0.0
        %2754 = vmatpush1.msra.mxu0 0.0
        %2755 = vmatprep.subr.mxu0 0.0
        %2756 = vmatpush1.msra.mxu0 0.0
        %2757 = vmatprep.subr.mxu0 0.0
        %2758 = vmatpush1.msra.mxu0 0.0
        %2759 = vmatprep.subr.mxu0 0.0
        %2760 = vmatpush1.msra.mxu0 0.0
        %2761 = vmatprep.mubr.f32.mxu0 0.0
        %2762 = vmatmul.mubr.f32.gmra.mrb[0].mxu0 %v2615
        %v2763 = vpop.f32.mrb[0].mxu0
        %v2764 = vadd.f32 0.0, %v2763
        %v2765 = vpop.f32.mrb[0].mxu0
        %2766 = vdwg.mxu0
        %v2767 = vadd.f32 %v2600, %v2693
        %v2768 = vadd.f32 %v2601, %v2695
        %v2769 = vadd.f32 %v2602, %v2764
        %2770 = vrot.lane.b32.xlu0 %v1781, 111
        %v2771 = vpop.permute.xlu0 %2770
        %2772 = vrot.lane.b32.xlu0 %v1782, 111
        %v2773 = vpop.permute.xlu0 %2772
        %2774 = vrot.lane.b32.xlu0 %v1783, 111
        %v2775 = vpop.permute.xlu0 %2774
        %v2776 = vsel %vm1255, %v2773, %v2775
        %v2777 = vsel %vm1255, %v2771, %v2773
        %v2778 = vsel %vm1255, %v2775, %v2771
        %s2779 = scalar_lea.vmem %s3, 24
        %v2780 = vld [vmem:[%s2779] sm:$0xf]
        %v2782 = vsel %vm282, %v2780, 0
        %v2785 = vsel %vm286, %v2777, 0
        %v2788 = vsel %vm286, %v2776, 0
        %v2791 = vsel %vm286, %v2778, 0
        %2793 = vmatprep.subr.mxu0 %v2788
        %2794 = vmatpush1.msra.mxu0 %v2785
        %2795 = vmatprep.subr.mxu0 0.0
        %2796 = vmatpush1.msra.mxu0 0.0
        %2797 = vmatprep.subr.mxu0 0.0
        %2798 = vmatpush1.msra.mxu0 0.0
        %2799 = vmatprep.subr.mxu0 0.0
        %2800 = vmatpush1.msra.mxu0 0.0
        %2801 = vmatprep.subr.mxu0 0.0
        %2802 = vmatpush1.msra.mxu0 0.0
        %2803 = vmatprep.subr.mxu0 0.0
        %2804 = vmatpush1.msra.mxu0 0.0
        %2805 = vmatprep.subr.mxu0 0.0
        %2806 = vmatpush1.msra.mxu0 0.0
        %2807 = vmatprep.subr.mxu0 0.0
        %2808 = vmatpush1.msra.mxu0 0.0
        %2809 = vmatprep.subr.mxu0 0.0
        %2810 = vmatpush1.msra.mxu0 0.0
        %2811 = vmatprep.subr.mxu0 0.0
        %2812 = vmatpush1.msra.mxu0 0.0
        %2813 = vmatprep.subr.mxu0 0.0
        %2814 = vmatpush1.msra.mxu0 0.0
        %2815 = vmatprep.subr.mxu0 0.0
        %2816 = vmatpush1.msra.mxu0 0.0
        %2817 = vmatprep.subr.mxu0 0.0
        %2818 = vmatpush1.msra.mxu0 0.0
        %2819 = vmatprep.subr.mxu0 0.0
        %2820 = vmatpush1.msra.mxu0 0.0
        %2821 = vmatprep.subr.mxu0 0.0
        %2822 = vmatpush1.msra.mxu0 0.0
        %2823 = vmatprep.subr.mxu0 0.0
        %2824 = vmatpush1.msra.mxu0 0.0
        %2825 = vmatprep.subr.mxu0 0.0
        %2826 = vmatpush1.msra.mxu0 0.0
        %2827 = vmatprep.subr.mxu0 0.0
        %2828 = vmatpush1.msra.mxu0 0.0
        %2829 = vmatprep.subr.mxu0 0.0
        %2830 = vmatpush1.msra.mxu0 0.0
        %2831 = vmatprep.subr.mxu0 0.0
        %2832 = vmatpush1.msra.mxu0 0.0
        %2833 = vmatprep.subr.mxu0 0.0
        %2834 = vmatpush1.msra.mxu0 0.0
        %2835 = vmatprep.subr.mxu0 0.0
        %2836 = vmatpush1.msra.mxu0 0.0
        %2837 = vmatprep.subr.mxu0 0.0
        %2838 = vmatpush1.msra.mxu0 0.0
        %2839 = vmatprep.subr.mxu0 0.0
        %2840 = vmatpush1.msra.mxu0 0.0
        %2841 = vmatprep.subr.mxu0 0.0
        %2842 = vmatpush1.msra.mxu0 0.0
        %2843 = vmatprep.subr.mxu0 0.0
        %2844 = vmatpush1.msra.mxu0 0.0
        %2845 = vmatprep.subr.mxu0 0.0
        %2846 = vmatpush1.msra.mxu0 0.0
        %2847 = vmatprep.subr.mxu0 0.0
        %2848 = vmatpush1.msra.mxu0 0.0
        %2849 = vmatprep.subr.mxu0 0.0
        %2850 = vmatpush1.msra.mxu0 0.0
        %2851 = vmatprep.subr.mxu0 0.0
        %2852 = vmatpush1.msra.mxu0 0.0
        %2853 = vmatprep.subr.mxu0 0.0
        %2854 = vmatpush1.msra.mxu0 0.0
        %2855 = vmatprep.subr.mxu0 0.0
        %2856 = vmatpush1.msra.mxu0 0.0
        %2857 = vmatprep.mubr.f32.mxu0 0.0
        %2858 = vmatmul.mubr.f32.gmra.mrb[0].mxu0 %v2782
        %v2859 = vpop.f32.mrb[0].mxu0
        %v2860 = vadd.f32 0.0, %v2859
        %v2861 = vpop.f32.mrb[0].mxu0
        %v2862 = vadd.f32 0.0, %v2861
        %2863 = vdwg.mxu0
        %2864 = vmatprep.subr.mxu0 0.0
        %2865 = vmatpush1.msra.mxu0 %v2791
        %2866 = vmatprep.subr.mxu0 0.0
        %2867 = vmatpush1.msra.mxu0 0.0
        %2868 = vmatprep.subr.mxu0 0.0
        %2869 = vmatpush1.msra.mxu0 0.0
        %2870 = vmatprep.subr.mxu0 0.0
        %2871 = vmatpush1.msra.mxu0 0.0
        %2872 = vmatprep.subr.mxu0 0.0
        %2873 = vmatpush1.msra.mxu0 0.0
        %2874 = vmatprep.subr.mxu0 0.0
        %2875 = vmatpush1.msra.mxu0 0.0
        %2876 = vmatprep.subr.mxu0 0.0
        %2877 = vmatpush1.msra.mxu0 0.0
        %2878 = vmatprep.subr.mxu0 0.0
        %2879 = vmatpush1.msra.mxu0 0.0
        %2880 = vmatprep.subr.mxu0 0.0
        %2881 = vmatpush1.msra.mxu0 0.0
        %2882 = vmatprep.subr.mxu0 0.0
        %2883 = vmatpush1.msra.mxu0 0.0
        %2884 = vmatprep.subr.mxu0 0.0
        %2885 = vmatpush1.msra.mxu0 0.0
        %2886 = vmatprep.subr.mxu0 0.0
        %2887 = vmatpush1.msra.mxu0 0.0
        %2888 = vmatprep.subr.mxu0 0.0
        %2889 = vmatpush1.msra.mxu0 0.0
        %2890 = vmatprep.subr.mxu0 0.0
        %2891 = vmatpush1.msra.mxu0 0.0
        %2892 = vmatprep.subr.mxu0 0.0
        %2893 = vmatpush1.msra.mxu0 0.0
        %2894 = vmatprep.subr.mxu0 0.0
        %2895 = vmatpush1.msra.mxu0 0.0
        %2896 = vmatprep.subr.mxu0 0.0
        %2897 = vmatpush1.msra.mxu0 0.0
        %2898 = vmatprep.subr.mxu0 0.0
        %2899 = vmatpush1.msra.mxu0 0.0
        %2900 = vmatprep.subr.mxu0 0.0
        %2901 = vmatpush1.msra.mxu0 0.0
        %2902 = vmatprep.subr.mxu0 0.0
        %2903 = vmatpush1.msra.mxu0 0.0
        %2904 = vmatprep.subr.mxu0 0.0
        %2905 = vmatpush1.msra.mxu0 0.0
        %2906 = vmatprep.subr.mxu0 0.0
        %2907 = vmatpush1.msra.mxu0 0.0
        %2908 = vmatprep.subr.mxu0 0.0
        %2909 = vmatpush1.msra.mxu0 0.0
        %2910 = vmatprep.subr.mxu0 0.0
        %2911 = vmatpush1.msra.mxu0 0.0
        %2912 = vmatprep.subr.mxu0 0.0
        %2913 = vmatpush1.msra.mxu0 0.0
        %2914 = vmatprep.subr.mxu0 0.0
        %2915 = vmatpush1.msra.mxu0 0.0
        %2916 = vmatprep.subr.mxu0 0.0
        %2917 = vmatpush1.msra.mxu0 0.0
        %2918 = vmatprep.subr.mxu0 0.0
        %2919 = vmatpush1.msra.mxu0 0.0
        %2920 = vmatprep.subr.mxu0 0.0
        %2921 = vmatpush1.msra.mxu0 0.0
        %2922 = vmatprep.subr.mxu0 0.0
        %2923 = vmatpush1.msra.mxu0 0.0
        %2924 = vmatprep.subr.mxu0 0.0
        %2925 = vmatpush1.msra.mxu0 0.0
        %2926 = vmatprep.subr.mxu0 0.0
        %2927 = vmatpush1.msra.mxu0 0.0
        %2928 = vmatprep.mubr.f32.mxu0 0.0
        %2929 = vmatmul.mubr.f32.gmra.mrb[0].mxu0 %v2782
        %v2930 = vpop.f32.mrb[0].mxu0
        %v2931 = vadd.f32 0.0, %v2930
        %v2932 = vpop.f32.mrb[0].mxu0
        %2933 = vdwg.mxu0
        %v2934 = vadd.f32 %v2767, %v2860
        %v2935 = vadd.f32 %v2768, %v2862
        %v2936 = vadd.f32 %v2769, %v2931
        %2937 = vrot.lane.b32.xlu0 %v1781, 110
        %v2938 = vpop.permute.xlu0 %2937
        %2939 = vrot.lane.b32.xlu0 %v1782, 110
        %v2940 = vpop.permute.xlu0 %2939
        %2941 = vrot.lane.b32.xlu0 %v1783, 110
        %v2942 = vpop.permute.xlu0 %2941
        %v2943 = vsel %vm1423, %v2940, %v2942
        %v2944 = vsel %vm1423, %v2938, %v2940
        %v2945 = vsel %vm1423, %v2942, %v2938
        %s2946 = scalar_lea.vmem %s3, 28
        %v2947 = vld [vmem:[%s2946] sm:$0xf]
        %v2949 = vsel %vm282, %v2947, 0
        %v2952 = vsel %vm286, %v2944, 0
        %v2955 = vsel %vm286, %v2943, 0
        %v2958 = vsel %vm286, %v2945, 0
        %2960 = vmatprep.subr.mxu0 %v2955
        %2961 = vmatpush1.msra.mxu0 %v2952
        %2962 = vmatprep.subr.mxu0 0.0
        %2963 = vmatpush1.msra.mxu0 0.0
        %2964 = vmatprep.subr.mxu0 0.0
        %2965 = vmatpush1.msra.mxu0 0.0
        %2966 = vmatprep.subr.mxu0 0.0
        %2967 = vmatpush1.msra.mxu0 0.0
        %2968 = vmatprep.subr.mxu0 0.0
        %2969 = vmatpush1.msra.mxu0 0.0
        %2970 = vmatprep.subr.mxu0 0.0
        %2971 = vmatpush1.msra.mxu0 0.0
        %2972 = vmatprep.subr.mxu0 0.0
        %2973 = vmatpush1.msra.mxu0 0.0
        %2974 = vmatprep.subr.mxu0 0.0
        %2975 = vmatpush1.msra.mxu0 0.0
        %2976 = vmatprep.subr.mxu0 0.0
        %2977 = vmatpush1.msra.mxu0 0.0
        %2978 = vmatprep.subr.mxu0 0.0
        %2979 = vmatpush1.msra.mxu0 0.0
        %2980 = vmatprep.subr.mxu0 0.0
        %2981 = vmatpush1.msra.mxu0 0.0
        %2982 = vmatprep.subr.mxu0 0.0
        %2983 = vmatpush1.msra.mxu0 0.0
        %2984 = vmatprep.subr.mxu0 0.0
        %2985 = vmatpush1.msra.mxu0 0.0
        %2986 = vmatprep.subr.mxu0 0.0
        %2987 = vmatpush1.msra.mxu0 0.0
        %2988 = vmatprep.subr.mxu0 0.0
        %2989 = vmatpush1.msra.mxu0 0.0
        %2990 = vmatprep.subr.mxu0 0.0
        %2991 = vmatpush1.msra.mxu0 0.0
        %2992 = vmatprep.subr.mxu0 0.0
        %2993 = vmatpush1.msra.mxu0 0.0
        %2994 = vmatprep.subr.mxu0 0.0
        %2995 = vmatpush1.msra.mxu0 0.0
        %2996 = vmatprep.subr.mxu0 0.0
        %2997 = vmatpush1.msra.mxu0 0.0
        %2998 = vmatprep.subr.mxu0 0.0
        %2999 = vmatpush1.msra.mxu0 0.0
        %3000 = vmatprep.subr.mxu0 0.0
        %3001 = vmatpush1.msra.mxu0 0.0
        %3002 = vmatprep.subr.mxu0 0.0
        %3003 = vmatpush1.msra.mxu0 0.0
        %3004 = vmatprep.subr.mxu0 0.0
        %3005 = vmatpush1.msra.mxu0 0.0
        %3006 = vmatprep.subr.mxu0 0.0
        %3007 = vmatpush1.msra.mxu0 0.0
        %3008 = vmatprep.subr.mxu0 0.0
        %3009 = vmatpush1.msra.mxu0 0.0
        %3010 = vmatprep.subr.mxu0 0.0
        %3011 = vmatpush1.msra.mxu0 0.0
        %3012 = vmatprep.subr.mxu0 0.0
        %3013 = vmatpush1.msra.mxu0 0.0
        %3014 = vmatprep.subr.mxu0 0.0
        %3015 = vmatpush1.msra.mxu0 0.0
        %3016 = vmatprep.subr.mxu0 0.0
        %3017 = vmatpush1.msra.mxu0 0.0
        %3018 = vmatprep.subr.mxu0 0.0
        %3019 = vmatpush1.msra.mxu0 0.0
        %3020 = vmatprep.subr.mxu0 0.0
        %3021 = vmatpush1.msra.mxu0 0.0
        %3022 = vmatprep.subr.mxu0 0.0
        %3023 = vmatpush1.msra.mxu0 0.0
        %3024 = vmatprep.mubr.f32.mxu0 0.0
        %3025 = vmatmul.mubr.f32.gmra.mrb[0].mxu0 %v2949
        %v3026 = vpop.f32.mrb[0].mxu0
        %v3027 = vadd.f32 0.0, %v3026
        %v3028 = vpop.f32.mrb[0].mxu0
        %v3029 = vadd.f32 0.0, %v3028
        %3030 = vdwg.mxu0
        %3031 = vmatprep.subr.mxu0 0.0
        %3032 = vmatpush1.msra.mxu0 %v2958
        %3033 = vmatprep.subr.mxu0 0.0
        %3034 = vmatpush1.msra.mxu0 0.0
        %3035 = vmatprep.subr.mxu0 0.0
        %3036 = vmatpush1.msra.mxu0 0.0
        %3037 = vmatprep.subr.mxu0 0.0
        %3038 = vmatpush1.msra.mxu0 0.0
        %3039 = vmatprep.subr.mxu0 0.0
        %3040 = vmatpush1.msra.mxu0 0.0
        %3041 = vmatprep.subr.mxu0 0.0
        %3042 = vmatpush1.msra.mxu0 0.0
        %3043 = vmatprep.subr.mxu0 0.0
        %3044 = vmatpush1.msra.mxu0 0.0
        %3045 = vmatprep.subr.mxu0 0.0
        %3046 = vmatpush1.msra.mxu0 0.0
        %3047 = vmatprep.subr.mxu0 0.0
        %3048 = vmatpush1.msra.mxu0 0.0
        %3049 = vmatprep.subr.mxu0 0.0
        %3050 = vmatpush1.msra.mxu0 0.0
        %3051 = vmatprep.subr.mxu0 0.0
        %3052 = vmatpush1.msra.mxu0 0.0
        %3053 = vmatprep.subr.mxu0 0.0
        %3054 = vmatpush1.msra.mxu0 0.0
        %3055 = vmatprep.subr.mxu0 0.0
        %3056 = vmatpush1.msra.mxu0 0.0
        %3057 = vmatprep.subr.mxu0 0.0
        %3058 = vmatpush1.msra.mxu0 0.0
        %3059 = vmatprep.subr.mxu0 0.0
        %3060 = vmatpush1.msra.mxu0 0.0
        %3061 = vmatprep.subr.mxu0 0.0
        %3062 = vmatpush1.msra.mxu0 0.0
        %3063 = vmatprep.subr.mxu0 0.0
        %3064 = vmatpush1.msra.mxu0 0.0
        %3065 = vmatprep.subr.mxu0 0.0
        %3066 = vmatpush1.msra.mxu0 0.0
        %3067 = vmatprep.subr.mxu0 0.0
        %3068 = vmatpush1.msra.mxu0 0.0
        %3069 = vmatprep.subr.mxu0 0.0
        %3070 = vmatpush1.msra.mxu0 0.0
        %3071 = vmatprep.subr.mxu0 0.0
        %3072 = vmatpush1.msra.mxu0 0.0
        %3073 = vmatprep.subr.mxu0 0.0
        %3074 = vmatpush1.msra.mxu0 0.0
        %3075 = vmatprep.subr.mxu0 0.0
        %3076 = vmatpush1.msra.mxu0 0.0
        %3077 = vmatprep.subr.mxu0 0.0
        %3078 = vmatpush1.msra.mxu0 0.0
        %3079 = vmatprep.subr.mxu0 0.0
        %3080 = vmatpush1.msra.mxu0 0.0
        %3081 = vmatprep.subr.mxu0 0.0
        %3082 = vmatpush1.msra.mxu0 0.0
        %3083 = vmatprep.subr.mxu0 0.0
        %3084 = vmatpush1.msra.mxu0 0.0
        %3085 = vmatprep.subr.mxu0 0.0
        %3086 = vmatpush1.msra.mxu0 0.0
        %3087 = vmatprep.subr.mxu0 0.0
        %3088 = vmatpush1.msra.mxu0 0.0
        %3089 = vmatprep.subr.mxu0 0.0
        %3090 = vmatpush1.msra.mxu0 0.0
        %3091 = vmatprep.subr.mxu0 0.0
        %3092 = vmatpush1.msra.mxu0 0.0
        %3093 = vmatprep.subr.mxu0 0.0
        %3094 = vmatpush1.msra.mxu0 0.0
        %3095 = vmatprep.mubr.f32.mxu0 0.0
        %3096 = vmatmul.mubr.f32.gmra.mrb[0].mxu0 %v2949
        %v3097 = vpop.f32.mrb[0].mxu0
        %v3098 = vadd.f32 0.0, %v3097
        %v3099 = vpop.f32.mrb[0].mxu0
        %3100 = vdwg.mxu0
        %v3101 = vadd.f32 %v2934, %v3027
        %v3102 = vadd.f32 %v2935, %v3029
        %v3103 = vadd.f32 %v2936, %v3098
        %3104 = vrot.lane.b32.xlu0 %v1781, 109
        %v3105 = vpop.permute.xlu0 %3104
        %3106 = vrot.lane.b32.xlu0 %v1782, 109
        %v3107 = vpop.permute.xlu0 %3106
        %3108 = vrot.lane.b32.xlu0 %v1783, 109
        %v3109 = vpop.permute.xlu0 %3108
        %v3110 = vsel %vm1591, %v3107, %v3109
        %v3111 = vsel %vm1591, %v3105, %v3107
        %v3112 = vsel %vm1591, %v3109, %v3105
        %s3113 = scalar_lea.vmem %s3, 32
        %v3114 = vld [vmem:[%s3113] sm:$0xf]
        %v3116 = vsel %vm282, %v3114, 0
        %v3119 = vsel %vm286, %v3111, 0
        %v3122 = vsel %vm286, %v3110, 0
        %v3125 = vsel %vm286, %v3112, 0
        %3127 = vmatprep.subr.mxu0 %v3122
        %3128 = vmatpush1.msra.mxu0 %v3119
        %3129 = vmatprep.subr.mxu0 0.0
        %3130 = vmatpush1.msra.mxu0 0.0
        %3131 = vmatprep.subr.mxu0 0.0
        %3132 = vmatpush1.msra.mxu0 0.0
        %3133 = vmatprep.subr.mxu0 0.0
        %3134 = vmatpush1.msra.mxu0 0.0
        %3135 = vmatprep.subr.mxu0 0.0
        %3136 = vmatpush1.msra.mxu0 0.0
        %3137 = vmatprep.subr.mxu0 0.0
        %3138 = vmatpush1.msra.mxu0 0.0
        %3139 = vmatprep.subr.mxu0 0.0
        %3140 = vmatpush1.msra.mxu0 0.0
        %3141 = vmatprep.subr.mxu0 0.0
        %3142 = vmatpush1.msra.mxu0 0.0
        %3143 = vmatprep.subr.mxu0 0.0
        %3144 = vmatpush1.msra.mxu0 0.0
        %3145 = vmatprep.subr.mxu0 0.0
        %3146 = vmatpush1.msra.mxu0 0.0
        %3147 = vmatprep.subr.mxu0 0.0
        %3148 = vmatpush1.msra.mxu0 0.0
        %3149 = vmatprep.subr.mxu0 0.0
        %3150 = vmatpush1.msra.mxu0 0.0
        %3151 = vmatprep.subr.mxu0 0.0
        %3152 = vmatpush1.msra.mxu0 0.0
        %3153 = vmatprep.subr.mxu0 0.0
        %3154 = vmatpush1.msra.mxu0 0.0
        %3155 = vmatprep.subr.mxu0 0.0
        %3156 = vmatpush1.msra.mxu0 0.0
        %3157 = vmatprep.subr.mxu0 0.0
        %3158 = vmatpush1.msra.mxu0 0.0
        %3159 = vmatprep.subr.mxu0 0.0
        %3160 = vmatpush1.msra.mxu0 0.0
        %3161 = vmatprep.subr.mxu0 0.0
        %3162 = vmatpush1.msra.mxu0 0.0
        %3163 = vmatprep.subr.mxu0 0.0
        %3164 = vmatpush1.msra.mxu0 0.0
        %3165 = vmatprep.subr.mxu0 0.0
        %3166 = vmatpush1.msra.mxu0 0.0
        %3167 = vmatprep.subr.mxu0 0.0
        %3168 = vmatpush1.msra.mxu0 0.0
        %3169 = vmatprep.subr.mxu0 0.0
        %3170 = vmatpush1.msra.mxu0 0.0
        %3171 = vmatprep.subr.mxu0 0.0
        %3172 = vmatpush1.msra.mxu0 0.0
        %3173 = vmatprep.subr.mxu0 0.0
        %3174 = vmatpush1.msra.mxu0 0.0
        %3175 = vmatprep.subr.mxu0 0.0
        %3176 = vmatpush1.msra.mxu0 0.0
        %3177 = vmatprep.subr.mxu0 0.0
        %3178 = vmatpush1.msra.mxu0 0.0
        %3179 = vmatprep.subr.mxu0 0.0
        %3180 = vmatpush1.msra.mxu0 0.0
        %3181 = vmatprep.subr.mxu0 0.0
        %3182 = vmatpush1.msra.mxu0 0.0
        %3183 = vmatprep.subr.mxu0 0.0
        %3184 = vmatpush1.msra.mxu0 0.0
        %3185 = vmatprep.subr.mxu0 0.0
        %3186 = vmatpush1.msra.mxu0 0.0
        %3187 = vmatprep.subr.mxu0 0.0
        %3188 = vmatpush1.msra.mxu0 0.0
        %3189 = vmatprep.subr.mxu0 0.0
        %3190 = vmatpush1.msra.mxu0 0.0
        %3191 = vmatprep.mubr.f32.mxu0 0.0
        %3192 = vmatmul.mubr.f32.gmra.mrb[0].mxu0 %v3116
        %v3193 = vpop.f32.mrb[0].mxu0
        %v3194 = vadd.f32 0.0, %v3193
        %v3195 = vpop.f32.mrb[0].mxu0
        %v3196 = vadd.f32 0.0, %v3195
        %3197 = vdwg.mxu0
        %3198 = vmatprep.subr.mxu0 0.0
        %3199 = vmatpush1.msra.mxu0 %v3125
        %3200 = vmatprep.subr.mxu0 0.0
        %3201 = vmatpush1.msra.mxu0 0.0
        %3202 = vmatprep.subr.mxu0 0.0
        %3203 = vmatpush1.msra.mxu0 0.0
        %3204 = vmatprep.subr.mxu0 0.0
        %3205 = vmatpush1.msra.mxu0 0.0
        %3206 = vmatprep.subr.mxu0 0.0
        %3207 = vmatpush1.msra.mxu0 0.0
        %3208 = vmatprep.subr.mxu0 0.0
        %3209 = vmatpush1.msra.mxu0 0.0
        %3210 = vmatprep.subr.mxu0 0.0
        %3211 = vmatpush1.msra.mxu0 0.0
        %3212 = vmatprep.subr.mxu0 0.0
        %3213 = vmatpush1.msra.mxu0 0.0
        %3214 = vmatprep.subr.mxu0 0.0
        %3215 = vmatpush1.msra.mxu0 0.0
        %3216 = vmatprep.subr.mxu0 0.0
        %3217 = vmatpush1.msra.mxu0 0.0
        %3218 = vmatprep.subr.mxu0 0.0
        %3219 = vmatpush1.msra.mxu0 0.0
        %3220 = vmatprep.subr.mxu0 0.0
        %3221 = vmatpush1.msra.mxu0 0.0
        %3222 = vmatprep.subr.mxu0 0.0
        %3223 = vmatpush1.msra.mxu0 0.0
        %3224 = vmatprep.subr.mxu0 0.0
        %3225 = vmatpush1.msra.mxu0 0.0
        %3226 = vmatprep.subr.mxu0 0.0
        %3227 = vmatpush1.msra.mxu0 0.0
        %3228 = vmatprep.subr.mxu0 0.0
        %3229 = vmatpush1.msra.mxu0 0.0
        %3230 = vmatprep.subr.mxu0 0.0
        %3231 = vmatpush1.msra.mxu0 0.0
        %3232 = vmatprep.subr.mxu0 0.0
        %3233 = vmatpush1.msra.mxu0 0.0
        %3234 = vmatprep.subr.mxu0 0.0
        %3235 = vmatpush1.msra.mxu0 0.0
        %3236 = vmatprep.subr.mxu0 0.0
        %3237 = vmatpush1.msra.mxu0 0.0
        %3238 = vmatprep.subr.mxu0 0.0
        %3239 = vmatpush1.msra.mxu0 0.0
        %3240 = vmatprep.subr.mxu0 0.0
        %3241 = vmatpush1.msra.mxu0 0.0
        %3242 = vmatprep.subr.mxu0 0.0
        %3243 = vmatpush1.msra.mxu0 0.0
        %3244 = vmatprep.subr.mxu0 0.0
        %3245 = vmatpush1.msra.mxu0 0.0
        %3246 = vmatprep.subr.mxu0 0.0
        %3247 = vmatpush1.msra.mxu0 0.0
        %3248 = vmatprep.subr.mxu0 0.0
        %3249 = vmatpush1.msra.mxu0 0.0
        %3250 = vmatprep.subr.mxu0 0.0
        %3251 = vmatpush1.msra.mxu0 0.0
        %3252 = vmatprep.subr.mxu0 0.0
        %3253 = vmatpush1.msra.mxu0 0.0
        %3254 = vmatprep.subr.mxu0 0.0
        %3255 = vmatpush1.msra.mxu0 0.0
        %3256 = vmatprep.subr.mxu0 0.0
        %3257 = vmatpush1.msra.mxu0 0.0
        %3258 = vmatprep.subr.mxu0 0.0
        %3259 = vmatpush1.msra.mxu0 0.0
        %3260 = vmatprep.subr.mxu0 0.0
        %3261 = vmatpush1.msra.mxu0 0.0
        %3262 = vmatprep.mubr.f32.mxu0 0.0
        %3263 = vmatmul.mubr.f32.gmra.mrb[0].mxu0 %v3116
        %v3264 = vpop.f32.mrb[0].mxu0
        %v3265 = vadd.f32 0.0, %v3264
        %v3266 = vpop.f32.mrb[0].mxu0
        %3267 = vdwg.mxu0
        %v3268 = vadd.f32 %v3101, %v3194
        %v3269 = vadd.f32 %v3102, %v3196
        %v3270 = vadd.f32 %v3103, %v3265
        %v3271 = vld [vmem:[%s4] sm:$0xf]
        %3273 = vset.pattern.permute.xlu0 0
        %3274 = vperm.xlu0 %3273, %v3271
        %v3275 = vpop.permute.xlu0 %3274
        %v3277 = vadd.f32 %v3268, %v3275
        %v3278 = vadd.f32 %v3269, %v3275
        %v3279 = vadd.f32 %v3270, %v3275
        %v3280 = vadd.f32 %v3277, %v250
        %v3281 = vadd.f32 %v3278, %v255
        %v3282 = vadd.f32 %v3279, %v251
        %v3283 = vmax.f32 %v3280, 0.0
        %v3284 = vmax.f32 %v3281, 0.0
        %v3285 = vmax.f32 %v3282, 0.0
        %v3288 = vcombine.low %v3283, %v3284
        %3290 = vst [vmem:[%s244] sm:$0xff] %v3288
        %3291 = vst [vmem:[%s244 + $0x8] sm:$0xf] %v3285
        %s3292 = sand.u32 %s159, 1
        %s3293 = scalar_lea.sflag [#allocation3], %s3292
        %s3294 = sand.u32 %s159, 1
        %s3295 = smul.addr %s3294, 12
        %s3296 = scalar_lea.vmem [#allocation2], %s3295
        // Predicated region
        $region45: #{tpu_custom_call.1} parent=43 // pred_check
          %p3297 = pneg %p169
        $region46: #{tpu_custom_call.1} parent=43 // pred_check_branch
          %3299 = sbr.rel (%p3297) target = $region48
        $region47: #{tpu_custom_call.1} parent=43 // pred_region
          %s3301 = ssub.s32 192, 192
          %3302 = vsyncadd %s3293, %s3301
          %s3303 = smul.addr %s20, 3
          %s3304 = smul.addr %s3303, 64
          %s3305 = scalar_lea.hbm %s6, %s3304
          %s3307 = sshll.u32 %s3296, 4
          %s3308 = int_to_ptr.vmem [resolvable:$true] %s3307
          %3310 = dma.vmem_to_hbm [thread:$0]  %s3308, 192, %s3305, %s3293
        $region48: #{tpu_custom_call.1} parent=43 // pred_fallthru
          _
      $region44: #{tpu_custom_call.1} parent=5 // pred_fallthru
        _
      %p3311 = scmp.le.s32.totalorder 2, %s15
      // Predicated region
      $region49: #{tpu_custom_call.1} parent=5 // pred_check
        %p3312 = pneg %p3311
      $region50: #{tpu_custom_call.1} parent=5 // pred_check_branch
        %3314 = sbr.rel (%p3312) target = $region52
      $region51: #{tpu_custom_call.1} parent=5 // pred_region
        %s3315 = ssub.s32 %s15, 2
        // Predicated region
        $region53: #{tpu_custom_call.1} parent=51 // pred_check
          %p3316 = pneg %p175
        $region54: #{tpu_custom_call.1} parent=51 // pred_check_branch
          %3318 = sbr.rel (%p3316) target = $region56
        $region55: #{tpu_custom_call.1} parent=51 // pred_region
          %s3319 = sand.u32 %s160, 1
          %s3320 = scalar_lea.sflag [#allocation3], %s3319
          %s3321 = sand.u32 %s160, 1
          %s3322 = smul.addr %s3321, 12
          %s3323 = scalar_lea.vmem [#allocation2], %s3322
          %3324 = dma.done %s3320, 192
        $region56: #{tpu_custom_call.1} parent=51 // pred_fallthru
          _
      $region52: #{tpu_custom_call.1} parent=5 // pred_fallthru
        _
    $region6: #{tpu_custom_call.1} parent=1 // loop_footer
      %s19 = sadd.s32 1, %s15
    $region7: #{tpu_custom_call.1} parent=1 // loop_footer_branch
      %14 = sbr.rel target = $region3
    $region8: #{tpu_custom_call.1} parent=1 // loop_exit
      _
    %3325 = vsyncpa [#allocation3], 1
    %s3326 = scalar_lea.sflag [#allocation3], 1
    %3327 = vsyncpa %s3326, 1

</llo_original>
